<compile_context>
chip_gen: v5e
topology: v5e:2x2
jax: 0.10.0
libtpu: 0.0.40
codegen_flags: <defaults>
</compile_context>

<pallas_src>
import jax
import jax.numpy as jnp
from jax.experimental import pallas as pl
from jax.experimental.pallas import tpu as pltpu


# ---------------------------------------------------------------------------
# Fused kernel: conv tower (as dense matmuls) + state MLP + head + softmax.
# ---------------------------------------------------------------------------
def _fused_policy_kernel(ximg_ref, xst_ref,
                         t0_ref, c0b_ref, t1_ref, c1b_ref, t2_ref, c2b_ref,
                         wl0_ref, bl0_ref, wl1_ref, bl1_ref, wl2_ref, bl2_ref,
                         whi_ref, whs_ref, bh_ref,
                         o_ref):
    f32 = jnp.float32

    def dense_relu(x, w_ref, b_ref):
        y = jnp.dot(x, w_ref[...], preferred_element_type=f32) + b_ref[...]
        return jnp.maximum(y, 0.0)

    # Conv tower: each stride-2/k5/pad2 conv (+folded BN +ReLU) is one matmul
    # over NCHW-flattened features.
    h = dense_relu(ximg_ref[...], t0_ref, c0b_ref)     # (bt, f0*8*8)
    h = dense_relu(h, t1_ref, c1b_ref)                 # (bt, f1*4*4)
    h = dense_relu(h, t2_ref, c2b_ref)                 # (bt, f2*2*2) conv feats

    # State MLP.
    s = dense_relu(xst_ref[...], wl0_ref, bl0_ref)
    s = dense_relu(s, wl1_ref, bl1_ref)
    s = dense_relu(s, wl2_ref, bl2_ref)                # (bt, n2)

    # Head: the concat is avoided by pre-splitting the 1320-wide weight.
    logits = (jnp.dot(h, whi_ref[...], preferred_element_type=f32)
              + jnp.dot(s, whs_ref[...], preferred_element_type=f32)
              + bh_ref[...])                           # (bt, nout)

    # Numerically-stable softmax over dim=1 (exact reciprocal).
    logits = logits - jnp.max(logits, axis=-1, keepdims=True)
    e = jnp.exp(logits)
    o_ref[...] = e * pl.reciprocal(jnp.sum(e, axis=-1, keepdims=True))


# ---------------------------------------------------------------------------
# pallas_call wrapper.
# ---------------------------------------------------------------------------
def _full_spec(a):
    nd = a.ndim
    return pl.BlockSpec(a.shape, lambda i, _nd=nd: (0,) * _nd)


def conv_policy_forward(kp, x_st, x_img, batch_tile=128):
    """x_st: (N, d_st), x_img: (N, C, H, W) NCHW. Returns (N, nout) probs."""
    n = x_img.shape[0]
    x_flat = x_img.reshape(n, -1).astype(jnp.float32)   # NCHW flatten (free)
    x_st = x_st.astype(jnp.float32)

    if n <= batch_tile:
        bt, n_pad = n, n
    else:
        bt = max(8, (batch_tile // 8) * 8)               # sublane-legal tile
        n_pad = ((n + bt - 1) // bt) * bt
        x_flat = jnp.pad(x_flat, ((0, n_pad - n), (0, 0)))
        x_st = jnp.pad(x_st, ((0, n_pad - n), (0, 0)))

    d_img = x_flat.shape[1]
    d_st = x_st.shape[1]
    nout = kp["head_b"].shape[1]

    weights = (kp["conv0_T"], kp["conv0_b"], kp["conv1_T"], kp["conv1_b"],
               kp["conv2_T"], kp["conv2_b"],
               kp["lin0_w"], kp["lin0_b"], kp["lin1_w"], kp["lin1_b"],
               kp["lin2_w"], kp["lin2_b"],
               kp["head_w_img"], kp["head_w_st"], kp["head_b"])

    out = pl.pallas_call(
        _fused_policy_kernel,
        out_shape=jax.ShapeDtypeStruct((n_pad, nout), jnp.float32),
        grid=(n_pad // bt,),
        in_specs=[pl.BlockSpec((bt, d_img), lambda i: (i, 0)),
                  pl.BlockSpec((bt, d_st), lambda i: (i, 0))]
                 + [_full_spec(w) for w in weights],
        out_specs=pl.BlockSpec((bt, nout), lambda i: (i, 0)),
        compiler_params=pltpu.CompilerParams(
            dimension_semantics=("parallel",)),
    )(x_flat, x_st, *weights)
    return out[:n]


# ---------------------------------------------------------------------------
# Parameters: PyTorch-convention params + one-time folding into kernel layout.
# ---------------------------------------------------------------------------
def make_params(key, input_shp_st, inp_img_shp, f0, f1, f2, ksize,
                n0, n1, n2, output_shp):
    ks = jax.random.split(key, 40)
    ki = iter(range(40))

    def nrm(k, shape, s=0.05):
        return jax.random.normal(k, shape, dtype=jnp.float32) * s

    p = {}
    for name, cin, cout in (("conv0", inp_img_shp[0], f0),
                            ("conv1", f0, f1),
                            ("conv2", f1, f2)):
        p[name + "_w"] = nrm(ks[next(ki)], (cout, cin, ksize, ksize))
        p[name + "_b"] = nrm(ks[next(ki)], (cout,))
        p[name + "_gamma"] = 1.0 + nrm(ks[next(ki)], (cout,), 0.1)
        p[name + "_beta"] = nrm(ks[next(ki)], (cout,), 0.1)
        p[name + "_mean"] = nrm(ks[next(ki)], (cout,), 0.1)
        p[name + "_var"] = 1.0 + jnp.abs(nrm(ks[next(ki)], (cout,), 0.1))
    for name, din, dout in (("lin0", input_shp_st, n0),
                            ("lin1", n0, n1),
                            ("lin2", n1, n2),
                            ("out", 1320, output_shp)):
        p[name + "_w"] = nrm(ks[next(ki)], (din, dout))   # stored (in, out)
        p[name + "_b"] = nrm(ks[next(ki)], (dout,))
    return p


def fold_params(p, inp_img_shp, eps=1e-5):
    """One-time prep: fold inference-mode BN into the convs and materialize
    each stride-2/k5/pad2 conv as a dense (in_feat, out_feat) matrix (NCHW
    flatten order on both sides), so every layer is a single matmul in the
    fused kernel."""
    kp = {}
    cin, h, w = inp_img_shp
    for name in ("conv0", "conv1", "conv2"):
        wconv = p[name + "_w"]                            # (cout, cin, k, k)
        cout = wconv.shape[0]
        scale = p[name + "_gamma"] / jnp.sqrt(p[name + "_var"] + eps)
        shift = p[name + "_beta"] - p[name + "_mean"] * scale
        w_scaled = wconv * scale[:, None, None, None]
        # Dense matrix of the (BN-scaled) conv: run it on a one-hot basis.
        eye = jnp.eye(cin * h * w, dtype=jnp.float32).reshape(
            cin * h * w, cin, h, w)
        t = jax.lax.conv_general_dilated(
            eye, w_scaled, window_strides=(2, 2), padding=((2, 2), (2, 2)),
            dimension_numbers=("NCHW", "OIHW", "NCHW"))
        ho, wo = h // 2, w // 2
        kp[name + "_T"] = t.reshape(cin * h * w, cout * ho * wo)
        b_ch = p[name + "_b"] * scale + shift             # (cout,)
        kp[name + "_b"] = jnp.broadcast_to(
            b_ch[:, None], (cout, ho * wo)).reshape(1, cout * ho * wo)
        cin, h, w = cout, ho, wo
    for name in ("lin0", "lin1", "lin2"):
        kp[name + "_w"] = p[name + "_w"]
        kp[name + "_b"] = p[name + "_b"].reshape(1, -1)
    # Head weight (1320, nout): rows are [conv features (NCHW order), state].
    n_img = cin * h * w                                   # conv2 flat size
    kp["head_w_img"] = p["out_w"][:n_img]
    kp["head_w_st"] = p["out_w"][n_img:]
    kp["head_b"] = p["out_b"].reshape(1, -1)
    return kp


# ---------------------------------------------------------------------------
# Pure-JAX reference (same math, XLA ops) for validation.
# ---------------------------------------------------------------------------
def reference_forward(p, x_st, x_img, eps=1e-5):
    h = x_img
    for name in ("conv0", "conv1", "conv2"):
        h = jax.lax.conv_general_dilated(
            h, p[name + "_w"], window_strides=(2, 2),
            padding=((2, 2), (2, 2)),
            dimension_numbers=("NCHW", "OIHW", "NCHW"))
        h = h + p[name + "_b"][None, :, None, None]
        scale = p[name + "_gamma"] / jnp.sqrt(p[name + "_var"] + eps)
        shift = p[name + "_beta"] - p[name + "_mean"] * scale
        h = jnp.maximum(
            h * scale[None, :, None, None] + shift[None, :, None, None], 0.0)
    flat_img = h.reshape(h.shape[0], -1)
    s = x_st
    for name in ("lin0", "lin1", "lin2"):
        s = jnp.maximum(s @ p[name + "_w"] + p[name + "_b"], 0.0)
    flat = jnp.concatenate([flat_img, s], axis=1)
    return jax.nn.softmax(flat @ p["out_w"] + p["out_b"], axis=1)


# ---------------------------------------------------------------------------
if __name__ == "__main__":
    # Hyper-parameters consistent with the hard-coded nn.Linear(1320, out):
    # conv flat size 32*2*2 = 128, num_neurons_2 = 1192, 128 + 1192 = 1320.
    batch = 2
    input_shp_st = 8
    inp_img_shp = (4, 16, 16)
    filter_0, filter_1, filter_2 = 8, 16, 32
    filter_size = 5
    num_neurons_0, num_neurons_1, num_neurons_2 = 32, 64, 1192
    output_shp = 6

    key = jax.random.PRNGKey(0)
    k_params, k_st, k_img = jax.random.split(key, 3)

    params = make_params(k_params, input_shp_st, inp_img_shp,
                         filter_0, filter_1, filter_2, filter_size,
                         num_neurons_0, num_neurons_1, num_neurons_2,
                         output_shp)
    kparams = fold_params(params, inp_img_shp)   # one-time BN fold / layout

    x_st = jax.random.normal(k_st, (batch, input_shp_st), dtype=jnp.float32)
    x_img = jax.random.normal(k_img, (batch,) + inp_img_shp, dtype=jnp.float32)

    fwd = jax.jit(conv_policy_forward)
    y = fwd(kparams, x_st, x_img)
    jax.block_until_ready(y)

    y_ref = jax.jit(reference_forward)(params, x_st, x_img)
    jax.block_until_ready(y_ref)

    assert y.shape == (batch, output_shp)
    assert bool(jnp.all(jnp.isfinite(y)))
    assert bool(jnp.allclose(jnp.sum(y, axis=1), 1.0, atol=5e-3))
    assert bool(jnp.allclose(y, y_ref, atol=5e-3, rtol=5e-3))
    print("KERNEL_OK")
</pallas_src>

<mosaic_0001>
module attributes {stable_mosaic.version = 11 : i64} {
  func.func @_fused_policy_kernel(%arg0: i32, %arg1: memref<2x1024xf32, #tpu.memory_space<vmem>>, %arg2: memref<2x8xf32, #tpu.memory_space<vmem>>, %arg3: memref<1024x512xf32, #tpu.memory_space<vmem>>, %arg4: memref<1x512xf32, #tpu.memory_space<vmem>>, %arg5: memref<512x256xf32, #tpu.memory_space<vmem>>, %arg6: memref<1x256xf32, #tpu.memory_space<vmem>>, %arg7: memref<256x128xf32, #tpu.memory_space<vmem>>, %arg8: memref<1x128xf32, #tpu.memory_space<vmem>>, %arg9: memref<8x32xf32, #tpu.memory_space<vmem>>, %arg10: memref<1x32xf32, #tpu.memory_space<vmem>>, %arg11: memref<32x64xf32, #tpu.memory_space<vmem>>, %arg12: memref<1x64xf32, #tpu.memory_space<vmem>>, %arg13: memref<64x1192xf32, #tpu.memory_space<vmem>>, %arg14: memref<1x1192xf32, #tpu.memory_space<vmem>>, %arg15: memref<128x6xf32, #tpu.memory_space<vmem>>, %arg16: memref<1192x6xf32, #tpu.memory_space<vmem>>, %arg17: memref<1x6xf32, #tpu.memory_space<vmem>>, %arg18: memref<2x6xf32, #tpu.memory_space<vmem>>) attributes {dimension_semantics = [#tpu.dimension_semantics<parallel>], iteration_bounds = array<i64: 1>, scalar_prefetch = 0 : i64, scratch_operands = 0 : i64, tpu.core_type = #tpu.core_type<tc>, window_params = [{transform_indices = @transform_0, window_bounds = array<i64: 2, 1024>}, {transform_indices = @transform_1, window_bounds = array<i64: 2, 8>}, {pipeline_mode = #tpu.pipeline_mode<synchronous>, transform_indices = @transform_2, window_bounds = array<i64: 1024, 512>}, {pipeline_mode = #tpu.pipeline_mode<synchronous>, transform_indices = @transform_3, window_bounds = array<i64: 1, 512>}, {pipeline_mode = #tpu.pipeline_mode<synchronous>, transform_indices = @transform_4, window_bounds = array<i64: 512, 256>}, {pipeline_mode = #tpu.pipeline_mode<synchronous>, transform_indices = @transform_5, window_bounds = array<i64: 1, 256>}, {pipeline_mode = #tpu.pipeline_mode<synchronous>, transform_indices = @transform_6, window_bounds = array<i64: 256, 128>}, {pipeline_mode = #tpu.pipeline_mode<synchronous>, transform_indices = @transform_7, window_bounds = array<i64: 1, 128>}, {pipeline_mode = #tpu.pipeline_mode<synchronous>, transform_indices = @transform_8, window_bounds = array<i64: 8, 32>}, {pipeline_mode = #tpu.pipeline_mode<synchronous>, transform_indices = @transform_9, window_bounds = array<i64: 1, 32>}, {pipeline_mode = #tpu.pipeline_mode<synchronous>, transform_indices = @transform_10, window_bounds = array<i64: 32, 64>}, {pipeline_mode = #tpu.pipeline_mode<synchronous>, transform_indices = @transform_11, window_bounds = array<i64: 1, 64>}, {pipeline_mode = #tpu.pipeline_mode<synchronous>, transform_indices = @transform_12, window_bounds = array<i64: 64, 1192>}, {pipeline_mode = #tpu.pipeline_mode<synchronous>, transform_indices = @transform_13, window_bounds = array<i64: 1, 1192>}, {pipeline_mode = #tpu.pipeline_mode<synchronous>, transform_indices = @transform_14, window_bounds = array<i64: 128, 6>}, {pipeline_mode = #tpu.pipeline_mode<synchronous>, transform_indices = @transform_15, window_bounds = array<i64: 1192, 6>}, {pipeline_mode = #tpu.pipeline_mode<synchronous>, transform_indices = @transform_16, window_bounds = array<i64: 1, 6>}, {transform_indices = @transform_17, window_bounds = array<i64: 2, 6>}]} {
    %c0 = arith.constant 0 : index
    %c0_0 = arith.constant 0 : index
    %0 = vector.load %arg1[%c0, %c0_0] : memref<2x1024xf32, #tpu.memory_space<vmem>>, vector<2x1024xf32>
    %c0_1 = arith.constant 0 : index
    %c0_2 = arith.constant 0 : index
    %1 = vector.load %arg3[%c0_1, %c0_2] : memref<1024x512xf32, #tpu.memory_space<vmem>>, vector<1024x512xf32>
    %cst = arith.constant dense<0.000000e+00> : vector<2x512xf32>
    %2 = tpu.matmul %0, %1, %cst {dimension_numbers = #tpu.dot_dimension_numbers<[1], [0], [0], [1], [0, 0, 1, 1], [], []>} : vector<2x1024xf32>, vector<1024x512xf32>, vector<2x512xf32> -> vector<2x512xf32>
    %c0_3 = arith.constant 0 : index
    %c0_4 = arith.constant 0 : index
    %3 = vector.load %arg4[%c0_3, %c0_4] : memref<1x512xf32, #tpu.memory_space<vmem>>, vector<1x512xf32>
    %4 = vector.broadcast %3 : vector<1x512xf32> to vector<2x512xf32>
    %5 = arith.addf %2, %4 : vector<2x512xf32>
    %cst_5 = arith.constant 0.000000e+00 : f32
    %6 = vector.broadcast %cst_5 : f32 to vector<2x512xf32>
    %7 = arith.maximumf %5, %6 : vector<2x512xf32>
    %c0_6 = arith.constant 0 : index
    %c0_7 = arith.constant 0 : index
    %8 = vector.load %arg5[%c0_6, %c0_7] : memref<512x256xf32, #tpu.memory_space<vmem>>, vector<512x256xf32>
    %cst_8 = arith.constant dense<0.000000e+00> : vector<2x256xf32>
    %9 = tpu.matmul %7, %8, %cst_8 {dimension_numbers = #tpu.dot_dimension_numbers<[1], [0], [0], [1], [0, 0, 1, 1], [], []>} : vector<2x512xf32>, vector<512x256xf32>, vector<2x256xf32> -> vector<2x256xf32>
    %c0_9 = arith.constant 0 : index
    %c0_10 = arith.constant 0 : index
    %10 = vector.load %arg6[%c0_9, %c0_10] : memref<1x256xf32, #tpu.memory_space<vmem>>, vector<1x256xf32>
    %11 = vector.broadcast %10 : vector<1x256xf32> to vector<2x256xf32>
    %12 = arith.addf %9, %11 : vector<2x256xf32>
    %cst_11 = arith.constant 0.000000e+00 : f32
    %13 = vector.broadcast %cst_11 : f32 to vector<2x256xf32>
    %14 = arith.maximumf %12, %13 : vector<2x256xf32>
    %c0_12 = arith.constant 0 : index
    %c0_13 = arith.constant 0 : index
    %15 = vector.load %arg7[%c0_12, %c0_13] : memref<256x128xf32, #tpu.memory_space<vmem>>, vector<256x128xf32>
    %cst_14 = arith.constant dense<0.000000e+00> : vector<2x128xf32>
    %16 = tpu.matmul %14, %15, %cst_14 {dimension_numbers = #tpu.dot_dimension_numbers<[1], [0], [0], [1], [0, 0, 1, 1], [], []>} : vector<2x256xf32>, vector<256x128xf32>, vector<2x128xf32> -> vector<2x128xf32>
    %c0_15 = arith.constant 0 : index
    %c0_16 = arith.constant 0 : index
    %17 = vector.load %arg8[%c0_15, %c0_16] : memref<1x128xf32, #tpu.memory_space<vmem>>, vector<1x128xf32>
    %18 = vector.broadcast %17 : vector<1x128xf32> to vector<2x128xf32>
    %19 = arith.addf %16, %18 : vector<2x128xf32>
    %cst_17 = arith.constant 0.000000e+00 : f32
    %20 = vector.broadcast %cst_17 : f32 to vector<2x128xf32>
    %21 = arith.maximumf %19, %20 : vector<2x128xf32>
    %c0_18 = arith.constant 0 : index
    %c0_19 = arith.constant 0 : index
    %22 = vector.load %arg2[%c0_18, %c0_19] : memref<2x8xf32, #tpu.memory_space<vmem>>, vector<2x8xf32>
    %c0_20 = arith.constant 0 : index
    %c0_21 = arith.constant 0 : index
    %23 = vector.load %arg9[%c0_20, %c0_21] : memref<8x32xf32, #tpu.memory_space<vmem>>, vector<8x32xf32>
    %cst_22 = arith.constant dense<0.000000e+00> : vector<2x32xf32>
    %24 = tpu.matmul %22, %23, %cst_22 {dimension_numbers = #tpu.dot_dimension_numbers<[1], [0], [0], [1], [0, 0, 1, 1], [], []>} : vector<2x8xf32>, vector<8x32xf32>, vector<2x32xf32> -> vector<2x32xf32>
    %c0_23 = arith.constant 0 : index
    %c0_24 = arith.constant 0 : index
    %25 = vector.load %arg10[%c0_23, %c0_24] : memref<1x32xf32, #tpu.memory_space<vmem>>, vector<1x32xf32>
    %26 = vector.broadcast %25 : vector<1x32xf32> to vector<2x32xf32>
    %27 = arith.addf %24, %26 : vector<2x32xf32>
    %cst_25 = arith.constant 0.000000e+00 : f32
    %28 = vector.broadcast %cst_25 : f32 to vector<2x32xf32>
    %29 = arith.maximumf %27, %28 : vector<2x32xf32>
    %c0_26 = arith.constant 0 : index
    %c0_27 = arith.constant 0 : index
    %30 = vector.load %arg11[%c0_26, %c0_27] : memref<32x64xf32, #tpu.memory_space<vmem>>, vector<32x64xf32>
    %cst_28 = arith.constant dense<0.000000e+00> : vector<2x64xf32>
    %31 = tpu.matmul %29, %30, %cst_28 {dimension_numbers = #tpu.dot_dimension_numbers<[1], [0], [0], [1], [0, 0, 1, 1], [], []>} : vector<2x32xf32>, vector<32x64xf32>, vector<2x64xf32> -> vector<2x64xf32>
    %c0_29 = arith.constant 0 : index
    %c0_30 = arith.constant 0 : index
    %32 = vector.load %arg12[%c0_29, %c0_30] : memref<1x64xf32, #tpu.memory_space<vmem>>, vector<1x64xf32>
    %33 = vector.broadcast %32 : vector<1x64xf32> to vector<2x64xf32>
    %34 = arith.addf %31, %33 : vector<2x64xf32>
    %cst_31 = arith.constant 0.000000e+00 : f32
    %35 = vector.broadcast %cst_31 : f32 to vector<2x64xf32>
    %36 = arith.maximumf %34, %35 : vector<2x64xf32>
    %c0_32 = arith.constant 0 : index
    %c0_33 = arith.constant 0 : index
    %37 = vector.load %arg13[%c0_32, %c0_33] : memref<64x1192xf32, #tpu.memory_space<vmem>>, vector<64x1192xf32>
    %cst_34 = arith.constant dense<0.000000e+00> : vector<2x1192xf32>
    %38 = tpu.matmul %36, %37, %cst_34 {dimension_numbers = #tpu.dot_dimension_numbers<[1], [0], [0], [1], [0, 0, 1, 1], [], []>} : vector<2x64xf32>, vector<64x1192xf32>, vector<2x1192xf32> -> vector<2x1192xf32>
    %c0_35 = arith.constant 0 : index
    %c0_36 = arith.constant 0 : index
    %39 = vector.load %arg14[%c0_35, %c0_36] : memref<1x1192xf32, #tpu.memory_space<vmem>>, vector<1x1192xf32>
    %40 = vector.broadcast %39 : vector<1x1192xf32> to vector<2x1192xf32>
    %41 = arith.addf %38, %40 : vector<2x1192xf32>
    %cst_37 = arith.constant 0.000000e+00 : f32
    %42 = vector.broadcast %cst_37 : f32 to vector<2x1192xf32>
    %43 = arith.maximumf %41, %42 : vector<2x1192xf32>
    %c0_38 = arith.constant 0 : index
    %c0_39 = arith.constant 0 : index
    %44 = vector.load %arg15[%c0_38, %c0_39] : memref<128x6xf32, #tpu.memory_space<vmem>>, vector<128x6xf32>
    %cst_40 = arith.constant dense<0.000000e+00> : vector<2x6xf32>
    %45 = tpu.matmul %21, %44, %cst_40 {dimension_numbers = #tpu.dot_dimension_numbers<[1], [0], [0], [1], [0, 0, 1, 1], [], []>} : vector<2x128xf32>, vector<128x6xf32>, vector<2x6xf32> -> vector<2x6xf32>
    %c0_41 = arith.constant 0 : index
    %c0_42 = arith.constant 0 : index
    %46 = vector.load %arg16[%c0_41, %c0_42] : memref<1192x6xf32, #tpu.memory_space<vmem>>, vector<1192x6xf32>
    %cst_43 = arith.constant dense<0.000000e+00> : vector<2x6xf32>
    %47 = tpu.matmul %43, %46, %cst_43 {dimension_numbers = #tpu.dot_dimension_numbers<[1], [0], [0], [1], [0, 0, 1, 1], [], []>} : vector<2x1192xf32>, vector<1192x6xf32>, vector<2x6xf32> -> vector<2x6xf32>
    %48 = arith.addf %45, %47 : vector<2x6xf32>
    %c0_44 = arith.constant 0 : index
    %c0_45 = arith.constant 0 : index
    %49 = vector.load %arg17[%c0_44, %c0_45] : memref<1x6xf32, #tpu.memory_space<vmem>>, vector<1x6xf32>
    %50 = vector.broadcast %49 : vector<1x6xf32> to vector<2x6xf32>
    %51 = arith.addf %48, %50 : vector<2x6xf32>
    %cst_46 = arith.constant dense<0xFF800000> : vector<2xf32>
    %52 = vector.multi_reduction <maximumf>, %51, %cst_46 [1] : vector<2x6xf32> to vector<2xf32>
    %53 = vector.shape_cast %52 : vector<2xf32> to vector<2x1xf32>
    %54 = vector.broadcast %53 : vector<2x1xf32> to vector<2x6xf32>
    %55 = arith.subf %51, %54 : vector<2x6xf32>
    %56 = math.exp %55 : vector<2x6xf32>
    %cst_47 = arith.constant dense<0.000000e+00> : vector<2xf32>
    %57 = vector.multi_reduction <add>, %56, %cst_47 [1] : vector<2x6xf32> to vector<2xf32>
    %58 = vector.shape_cast %57 : vector<2xf32> to vector<2x1xf32>
    %59 = tpu.reciprocal %58 : vector<2x1xf32> -> vector<2x1xf32>
    %60 = vector.broadcast %59 : vector<2x1xf32> to vector<2x6xf32>
    %61 = arith.mulf %56, %60 : vector<2x6xf32>
    %c0_48 = arith.constant 0 : index
    %c0_49 = arith.constant 0 : index
    %62 = vector.load %arg18[%c0_48, %c0_49] : memref<2x6xf32, #tpu.memory_space<vmem>>, vector<2x6xf32>
    tpu.vector_store %arg18[%c0_48, %c0_49], %61 {strides = array<i32>} : memref<2x6xf32, #tpu.memory_space<vmem>>, vector<2x6xf32>,
    return
  }
  func.func @transform_0(%arg0: i32) -> (i32, i32) {
    %c0_i32 = arith.constant 0 : i32
    %c0_i32_0 = arith.constant 0 : i32
    return %arg0, %c0_i32 : i32, i32
  }
  func.func @transform_1(%arg0: i32) -> (i32, i32) {
    %c0_i32 = arith.constant 0 : i32
    %c0_i32_0 = arith.constant 0 : i32
    return %arg0, %c0_i32 : i32, i32
  }
  func.func @transform_2(%arg0: i32) -> (i32, i32) {
    %c0_i32 = arith.constant 0 : i32
    %c0_i32_0 = arith.constant 0 : i32
    %c0_i32_1 = arith.constant 0 : i32
    return %c0_i32, %c0_i32_0 : i32, i32
  }
  func.func @transform_3(%arg0: i32) -> (i32, i32) {
    %c0_i32 = arith.constant 0 : i32
    %c0_i32_0 = arith.constant 0 : i32
    %c0_i32_1 = arith.constant 0 : i32
    return %c0_i32, %c0_i32_0 : i32, i32
  }
  func.func @transform_4(%arg0: i32) -> (i32, i32) {
    %c0_i32 = arith.constant 0 : i32
    %c0_i32_0 = arith.constant 0 : i32
    %c0_i32_1 = arith.constant 0 : i32
    return %c0_i32, %c0_i32_0 : i32, i32
  }
  func.func @transform_5(%arg0: i32) -> (i32, i32) {
    %c0_i32 = arith.constant 0 : i32
    %c0_i32_0 = arith.constant 0 : i32
    %c0_i32_1 = arith.constant 0 : i32
    return %c0_i32, %c0_i32_0 : i32, i32
  }
  func.func @transform_6(%arg0: i32) -> (i32, i32) {
    %c0_i32 = arith.constant 0 : i32
    %c0_i32_0 = arith.constant 0 : i32
    %c0_i32_1 = arith.constant 0 : i32
    return %c0_i32, %c0_i32_0 : i32, i32
  }
  func.func @transform_7(%arg0: i32) -> (i32, i32) {
    %c0_i32 = arith.constant 0 : i32
    %c0_i32_0 = arith.constant 0 : i32
    %c0_i32_1 = arith.constant 0 : i32
    return %c0_i32, %c0_i32_0 : i32, i32
  }
  func.func @transform_8(%arg0: i32) -> (i32, i32) {
    %c0_i32 = arith.constant 0 : i32
    %c0_i32_0 = arith.constant 0 : i32
    %c0_i32_1 = arith.constant 0 : i32
    return %c0_i32, %c0_i32_0 : i32, i32
  }
  func.func @transform_9(%arg0: i32) -> (i32, i32) {
    %c0_i32 = arith.constant 0 : i32
    %c0_i32_0 = arith.constant 0 : i32
    %c0_i32_1 = arith.constant 0 : i32
    return %c0_i32, %c0_i32_0 : i32, i32
  }
  func.func @transform_10(%arg0: i32) -> (i32, i32) {
    %c0_i32 = arith.constant 0 : i32
    %c0_i32_0 = arith.constant 0 : i32
    %c0_i32_1 = arith.constant 0 : i32
    return %c0_i32, %c0_i32_0 : i32, i32
  }
  func.func @transform_11(%arg0: i32) -> (i32, i32) {
    %c0_i32 = arith.constant 0 : i32
    %c0_i32_0 = arith.constant 0 : i32
    %c0_i32_1 = arith.constant 0 : i32
    return %c0_i32, %c0_i32_0 : i32, i32
  }
  func.func @transform_12(%arg0: i32) -> (i32, i32) {
    %c0_i32 = arith.constant 0 : i32
    %c0_i32_0 = arith.constant 0 : i32
    %c0_i32_1 = arith.constant 0 : i32
    return %c0_i32, %c0_i32_0 : i32, i32
  }
  func.func @transform_13(%arg0: i32) -> (i32, i32) {
    %c0_i32 = arith.constant 0 : i32
    %c0_i32_0 = arith.constant 0 : i32
    %c0_i32_1 = arith.constant 0 : i32
    return %c0_i32, %c0_i32_0 : i32, i32
  }
  func.func @transform_14(%arg0: i32) -> (i32, i32) {
    %c0_i32 = arith.constant 0 : i32
    %c0_i32_0 = arith.constant 0 : i32
    %c0_i32_1 = arith.constant 0 : i32
    return %c0_i32, %c0_i32_0 : i32, i32
  }
  func.func @transform_15(%arg0: i32) -> (i32, i32) {
    %c0_i32 = arith.constant 0 : i32
    %c0_i32_0 = arith.constant 0 : i32
    %c0_i32_1 = arith.constant 0 : i32
    return %c0_i32, %c0_i32_0 : i32, i32
  }
  func.func @transform_16(%arg0: i32) -> (i32, i32) {
    %c0_i32 = arith.constant 0 : i32
    %c0_i32_0 = arith.constant 0 : i32
    %c0_i32_1 = arith.constant 0 : i32
    return %c0_i32, %c0_i32_0 : i32, i32
  }
  func.func @transform_17(%arg0: i32) -> (i32, i32) {
    %c0_i32 = arith.constant 0 : i32
    %c0_i32_0 = arith.constant 0 : i32
    return %arg0, %c0_i32 : i32, i32
  }
}

</mosaic_0001>

<llo_original>
// kernel: conv_policy_forward.1
$region0: #{conv_policy_forward.1}
  #allocation0 [shape = 'u32[]', space=smem, size = 0x4, offset = 0x4, fixed_abs, tag = 'smem constant byte address 0x4 - core index']
  #allocation1 [shape = 'u32[72,128]{1,0:T(1,128)}', space=vmem, size = 0x9000, scoped, tag = 'internal scratch']
  %s0 = inlined_call_operand.vmem [shape: f32[2,1024], index: 0, kind: input, shape index: {}]
  %s1 = inlined_call_operand.hbm [shape: f32[2,8], index: 1, kind: input, shape index: {}]
  %s2 = inlined_call_operand.hbm [shape: f32[1024,512], index: 2, kind: input, shape index: {}]
  %s3 = inlined_call_operand.hbm [shape: f32[1,512], index: 3, kind: input, shape index: {}]
  %s4 = inlined_call_operand.hbm [shape: f32[512,256], index: 4, kind: input, shape index: {}]
  %s5 = inlined_call_operand.hbm [shape: f32[1,256], index: 5, kind: input, shape index: {}]
  %s6 = inlined_call_operand.hbm [shape: f32[256,128], index: 6, kind: input, shape index: {}]
  %s7 = inlined_call_operand.hbm [shape: f32[1,128], index: 7, kind: input, shape index: {}]
  %s8 = inlined_call_operand.hbm [shape: f32[8,32], index: 8, kind: input, shape index: {}]
  %s9 = inlined_call_operand.hbm [shape: f32[1,32], index: 9, kind: input, shape index: {}]
  %s10 = inlined_call_operand.hbm [shape: f32[32,64], index: 10, kind: input, shape index: {}]
  %s11 = inlined_call_operand.hbm [shape: f32[1,64], index: 11, kind: input, shape index: {}]
  %s12 = inlined_call_operand.hbm [shape: f32[64,1192], index: 12, kind: input, shape index: {}]
  %s13 = inlined_call_operand.hbm [shape: f32[1,1192], index: 13, kind: input, shape index: {}]
  %s14 = inlined_call_operand.vmem [shape: f32[128,6], index: 14, kind: input, shape index: {}]
  %s15 = inlined_call_operand.vmem [shape: f32[1192,6], index: 15, kind: input, shape index: {}]
  %s16 = inlined_call_operand.hbm [shape: f32[1,6], index: 16, kind: input, shape index: {}]
  %s17 = inlined_call_operand.hbm [shape: f32[2,6], index: 17, kind: output, shape index: {}]
  %s18 = sld [smem:[#allocation0]]
  $region134: #{conv_policy_forward.1} parent=0
    _
  %s20 = ssub.s32 1, %s18
  %s21 = scalar_select 0, %s20, %s18
  $region1: #{conv_policy_forward.1} parent=0
    #allocation2 [shape = 'u8[1024]{0}', space=vmem, size = 0x400, scoped, tag = 'input window, operand 1, single buffered']
    #allocation3 [shape = 's32[1]{0}', space=sflag, size = 0x4, scoped, tag = 'scoped memory for conv_policy_forward.1']
    #allocation4 [shape = 's32[1]{0}', space=sflag, size = 0x4, scoped, tag = 'scoped memory for conv_policy_forward.1']
    #allocation5 [shape = 'u8[2097152]{0}', space=vmem, size = 0x200000, scoped, tag = 'input window, operand 2, single buffered']
    #allocation6 [shape = 's32[1]{0}', space=sflag, size = 0x4, scoped, tag = 'scoped memory for conv_policy_forward.1']
    #allocation7 [shape = 'u8[2048]{0}', space=vmem, size = 0x800, scoped, tag = 'input window, operand 3, single buffered']
    #allocation8 [shape = 'u8[524288]{0}', space=vmem, size = 0x80000, scoped, tag = 'input window, operand 4, single buffered']
    #allocation9 [shape = 's32[1]{0}', space=sflag, size = 0x4, scoped, tag = 'scoped memory for conv_policy_forward.1']
    #allocation10 [shape = 'u8[1024]{0}', space=vmem, size = 0x400, scoped, tag = 'input window, operand 5, single buffered']
    #allocation11 [shape = 'u8[131072]{0}', space=vmem, size = 0x20000, scoped, tag = 'input window, operand 6, single buffered']
    #allocation12 [shape = 's32[1]{0}', space=sflag, size = 0x4, scoped, tag = 'scoped memory for conv_policy_forward.1']
    #allocation13 [shape = 'u8[512]{0}', space=vmem, size = 0x400, scoped, tag = 'input window, operand 7, single buffered']
    #allocation14 [shape = 'u8[4096]{0}', space=vmem, size = 0x1000, scoped, tag = 'input window, operand 8, single buffered']
    #allocation15 [shape = 's32[1]{0}', space=sflag, size = 0x4, scoped, tag = 'scoped memory for conv_policy_forward.1']
    #allocation16 [shape = 'u8[512]{0}', space=vmem, size = 0x400, scoped, tag = 'input window, operand 9, single buffered']
    #allocation17 [shape = 'u8[16384]{0}', space=vmem, size = 0x4000, scoped, tag = 'input window, operand 10, single buffered']
    #allocation18 [shape = 's32[1]{0}', space=sflag, size = 0x4, scoped, tag = 'scoped memory for conv_policy_forward.1']
    #allocation19 [shape = 'u8[512]{0}', space=vmem, size = 0x400, scoped, tag = 'input window, operand 11, single buffered']
    #allocation20 [shape = 'u8[327680]{0}', space=vmem, size = 0x50000, scoped, tag = 'input window, operand 12, single buffered']
    #allocation21 [shape = 's32[1]{0}', space=sflag, size = 0x4, scoped, tag = 'scoped memory for conv_policy_forward.1']
    #allocation22 [shape = 'u8[5120]{0}', space=vmem, size = 0x1400, scoped, tag = 'input window, operand 13, single buffered']
    #allocation23 [shape = 'u8[512]{0}', space=vmem, size = 0x400, scoped, tag = 'input window, operand 16, single buffered']
    #allocation24 [shape = 's32[1]{0}', space=sflag, size = 0x4, scoped, tag = 'scoped memory for conv_policy_forward.1']
    #allocation25 [shape = 'u8[1024]{0}', space=vmem, size = 0x400, scoped, tag = 'output window, operand 0, single buffered']
    %22 = vsyncpa [#allocation3], 0
    %23 = vsyncpa [#allocation6], 0
    %24 = vsyncpa [#allocation9], 0
    %25 = vsyncpa [#allocation12], 0
    %26 = vsyncpa [#allocation15], 0
    %27 = vsyncpa [#allocation18], 0
    %28 = vsyncpa [#allocation21], 0
    %29 = vsyncpa [#allocation24], 0
    %30 = vsyncpa [#allocation4], 0
    // Predicated region
    $region2: #{conv_policy_forward.1} parent=1 // pred_check
      _
    $region3: #{conv_policy_forward.1} parent=1 // pred_check_branch
      %32 = sbr.rel (0) target = $region5
    $region4: #{conv_policy_forward.1} parent=1 // pred_region
      _
    $region5: #{conv_policy_forward.1} parent=1 // pred_fallthru
      _
    // Predicated region
    $region6: #{conv_policy_forward.1} parent=1 // pred_check
      _
    $region7: #{conv_policy_forward.1} parent=1 // pred_check_branch
      %34 = sbr.rel (0) target = $region9
    $region8: #{conv_policy_forward.1} parent=1 // pred_region
      %36 = vsyncadd [#allocation3], 0
      %s38 = sshll.u32 %s1, 4
      %s39 = int_to_ptr.hbm [resolvable:$true] %s38
      %s40 = sshll.u32 [#allocation2], 4
      %s41 = int_to_ptr.vmem [resolvable:$true] %s40
      %43 = dma.hbm_to_vmem [thread:$0]  %s39, 32, %s41, [#allocation3]
    $region9: #{conv_policy_forward.1} parent=1 // pred_fallthru
      _
    // Predicated region
    $region10: #{conv_policy_forward.1} parent=1 // pred_check
      _
    $region11: #{conv_policy_forward.1} parent=1 // pred_check_branch
      %45 = sbr.rel (0) target = $region13
    $region12: #{conv_policy_forward.1} parent=1 // pred_region
      %47 = vsyncadd [#allocation6], 0
      %s48 = sshll.u32 %s2, 4
      %s49 = int_to_ptr.hbm [resolvable:$true] %s48
      %s50 = sshll.u32 [#allocation5], 4
      %s51 = int_to_ptr.vmem [resolvable:$true] %s50
      %56 = dma.hbm_to_vmem [thread:$0]  %s49, 65536, %s51, [#allocation6], 512, 512, 32
    $region13: #{conv_policy_forward.1} parent=1 // pred_fallthru
      _
    // Predicated region
    $region14: #{conv_policy_forward.1} parent=1 // pred_check
      _
    $region15: #{conv_policy_forward.1} parent=1 // pred_check_branch
      %58 = sbr.rel (0) target = $region17
    $region16: #{conv_policy_forward.1} parent=1 // pred_region
      %60 = vsyncadd [#allocation6], 0
      %s62 = sshll.u32 %s3, 4
      %s63 = int_to_ptr.hbm [resolvable:$true] %s62
      %s64 = sshll.u32 [#allocation7], 4
      %s65 = int_to_ptr.vmem [resolvable:$true] %s64
      %67 = dma.hbm_to_vmem [thread:$0]  %s63, 64, %s65, [#allocation6]
    $region17: #{conv_policy_forward.1} parent=1 // pred_fallthru
      _
    // Predicated region
    $region18: #{conv_policy_forward.1} parent=1 // pred_check
      _
    $region19: #{conv_policy_forward.1} parent=1 // pred_check_branch
      %69 = sbr.rel (0) target = $region21
    $region20: #{conv_policy_forward.1} parent=1 // pred_region
      %71 = vsyncadd [#allocation9], 0
      %s72 = sshll.u32 %s4, 4
      %s73 = int_to_ptr.hbm [resolvable:$true] %s72
      %s74 = sshll.u32 [#allocation8], 4
      %s75 = int_to_ptr.vmem [resolvable:$true] %s74
      %80 = dma.hbm_to_vmem [thread:$0]  %s73, 16384, %s75, [#allocation9], 256, 256, 16
    $region21: #{conv_policy_forward.1} parent=1 // pred_fallthru
      _
    // Predicated region
    $region22: #{conv_policy_forward.1} parent=1 // pred_check
      _
    $region23: #{conv_policy_forward.1} parent=1 // pred_check_branch
      %82 = sbr.rel (0) target = $region25
    $region24: #{conv_policy_forward.1} parent=1 // pred_region
      %84 = vsyncadd [#allocation9], 0
      %s86 = sshll.u32 %s5, 4
      %s87 = int_to_ptr.hbm [resolvable:$true] %s86
      %s88 = sshll.u32 [#allocation10], 4
      %s89 = int_to_ptr.vmem [resolvable:$true] %s88
      %91 = dma.hbm_to_vmem [thread:$0]  %s87, 32, %s89, [#allocation9]
    $region25: #{conv_policy_forward.1} parent=1 // pred_fallthru
      _
    // Predicated region
    $region26: #{conv_policy_forward.1} parent=1 // pred_check
      _
    $region27: #{conv_policy_forward.1} parent=1 // pred_check_branch
      %93 = sbr.rel (0) target = $region29
    $region28: #{conv_policy_forward.1} parent=1 // pred_region
      %95 = vsyncadd [#allocation12], 0
      %s96 = sshll.u32 %s6, 4
      %s97 = int_to_ptr.hbm [resolvable:$true] %s96
      %s98 = sshll.u32 [#allocation11], 4
      %s99 = int_to_ptr.vmem [resolvable:$true] %s98
      %104 = dma.hbm_to_vmem [thread:$0]  %s97, 4096, %s99, [#allocation12], 128, 128, 8
    $region29: #{conv_policy_forward.1} parent=1 // pred_fallthru
      _
    // Predicated region
    $region30: #{conv_policy_forward.1} parent=1 // pred_check
      _
    $region31: #{conv_policy_forward.1} parent=1 // pred_check_branch
      %106 = sbr.rel (0) target = $region33
    $region32: #{conv_policy_forward.1} parent=1 // pred_region
      %108 = vsyncadd [#allocation12], 0
      %s110 = sshll.u32 %s7, 4
      %s111 = int_to_ptr.hbm [resolvable:$true] %s110
      %s112 = sshll.u32 [#allocation13], 4
      %s113 = int_to_ptr.vmem [resolvable:$true] %s112
      %115 = dma.hbm_to_vmem [thread:$0]  %s111, 16, %s113, [#allocation12]
    $region33: #{conv_policy_forward.1} parent=1 // pred_fallthru
      _
    // Predicated region
    $region34: #{conv_policy_forward.1} parent=1 // pred_check
      _
    $region35: #{conv_policy_forward.1} parent=1 // pred_check_branch
      %117 = sbr.rel (0) target = $region37
    $region36: #{conv_policy_forward.1} parent=1 // pred_region
      %119 = vsyncadd [#allocation15], 0
      %s121 = sshll.u32 %s8, 4
      %s122 = int_to_ptr.hbm [resolvable:$true] %s121
      %s123 = sshll.u32 [#allocation14], 4
      %s124 = int_to_ptr.vmem [resolvable:$true] %s123
      %126 = dma.hbm_to_vmem [thread:$0]  %s122, 128, %s124, [#allocation15]
    $region37: #{conv_policy_forward.1} parent=1 // pred_fallthru
      _
    // Predicated region
    $region38: #{conv_policy_forward.1} parent=1 // pred_check
      _
    $region39: #{conv_policy_forward.1} parent=1 // pred_check_branch
      %128 = sbr.rel (0) target = $region41
    $region40: #{conv_policy_forward.1} parent=1 // pred_region
      %130 = vsyncadd [#allocation15], 0
      %s132 = sshll.u32 %s9, 4
      %s133 = int_to_ptr.hbm [resolvable:$true] %s132
      %s134 = sshll.u32 [#allocation16], 4
      %s135 = int_to_ptr.vmem [resolvable:$true] %s134
      %137 = dma.hbm_to_vmem [thread:$0]  %s133, 16, %s135, [#allocation15]
    $region41: #{conv_policy_forward.1} parent=1 // pred_fallthru
      _
    // Predicated region
    $region42: #{conv_policy_forward.1} parent=1 // pred_check
      _
    $region43: #{conv_policy_forward.1} parent=1 // pred_check_branch
      %139 = sbr.rel (0) target = $region45
    $region44: #{conv_policy_forward.1} parent=1 // pred_region
      %141 = vsyncadd [#allocation18], 0
      %s142 = sshll.u32 %s10, 4
      %s143 = int_to_ptr.hbm [resolvable:$true] %s142
      %s144 = sshll.u32 [#allocation17], 4
      %s145 = int_to_ptr.vmem [resolvable:$true] %s144
      %150 = dma.hbm_to_vmem [thread:$0]  %s143, 512, %s145, [#allocation18], 128, 128, 8
    $region45: #{conv_policy_forward.1} parent=1 // pred_fallthru
      _
    // Predicated region
    $region46: #{conv_policy_forward.1} parent=1 // pred_check
      _
    $region47: #{conv_policy_forward.1} parent=1 // pred_check_branch
      %152 = sbr.rel (0) target = $region49
    $region48: #{conv_policy_forward.1} parent=1 // pred_region
      %154 = vsyncadd [#allocation18], 0
      %s156 = sshll.u32 %s11, 4
      %s157 = int_to_ptr.hbm [resolvable:$true] %s156
      %s158 = sshll.u32 [#allocation19], 4
      %s159 = int_to_ptr.vmem [resolvable:$true] %s158
      %161 = dma.hbm_to_vmem [thread:$0]  %s157, 16, %s159, [#allocation18]
    $region49: #{conv_policy_forward.1} parent=1 // pred_fallthru
      _
    // Predicated region
    $region50: #{conv_policy_forward.1} parent=1 // pred_check
      _
    $region51: #{conv_policy_forward.1} parent=1 // pred_check_branch
      %163 = sbr.rel (0) target = $region53
    $region52: #{conv_policy_forward.1} parent=1 // pred_region
      %165 = vsyncadd [#allocation21], 0
      %s166 = sshll.u32 %s12, 4
      %s167 = int_to_ptr.hbm [resolvable:$true] %s166
      %s168 = sshll.u32 [#allocation20], 4
      %s169 = int_to_ptr.vmem [resolvable:$true] %s168
      %174 = dma.hbm_to_vmem [thread:$0]  %s167, 10240, %s169, [#allocation21], 1280, 1280, 80
    $region53: #{conv_policy_forward.1} parent=1 // pred_fallthru
      _
    // Predicated region
    $region54: #{conv_policy_forward.1} parent=1 // pred_check
      _
    $region55: #{conv_policy_forward.1} parent=1 // pred_check_branch
      %176 = sbr.rel (0) target = $region57
    $region56: #{conv_policy_forward.1} parent=1 // pred_region
      %178 = vsyncadd [#allocation21], 0
      %s180 = sshll.u32 %s13, 4
      %s181 = int_to_ptr.hbm [resolvable:$true] %s180
      %s182 = sshll.u32 [#allocation22], 4
      %s183 = int_to_ptr.vmem [resolvable:$true] %s182
      %185 = dma.hbm_to_vmem [thread:$0]  %s181, 160, %s183, [#allocation21]
    $region57: #{conv_policy_forward.1} parent=1 // pred_fallthru
      _
    // Predicated region
    $region58: #{conv_policy_forward.1} parent=1 // pred_check
      _
    $region59: #{conv_policy_forward.1} parent=1 // pred_check_branch
      %187 = sbr.rel (0) target = $region61
    $region60: #{conv_policy_forward.1} parent=1 // pred_region
      _
    $region61: #{conv_policy_forward.1} parent=1 // pred_fallthru
      _
    // Predicated region
    $region62: #{conv_policy_forward.1} parent=1 // pred_check
      _
    $region63: #{conv_policy_forward.1} parent=1 // pred_check_branch
      %189 = sbr.rel (0) target = $region65
    $region64: #{conv_policy_forward.1} parent=1 // pred_region
      _
    $region65: #{conv_policy_forward.1} parent=1 // pred_fallthru
      _
    // Predicated region
    $region66: #{conv_policy_forward.1} parent=1 // pred_check
      _
    $region67: #{conv_policy_forward.1} parent=1 // pred_check_branch
      %191 = sbr.rel (0) target = $region69
    $region68: #{conv_policy_forward.1} parent=1 // pred_region
      %193 = vsyncadd [#allocation24], 0
      %s195 = sshll.u32 %s16, 4
      %s196 = int_to_ptr.hbm [resolvable:$true] %s195
      %s197 = sshll.u32 [#allocation23], 4
      %s198 = int_to_ptr.vmem [resolvable:$true] %s197
      %200 = dma.hbm_to_vmem [thread:$0]  %s196, 16, %s198, [#allocation24]
    $region69: #{conv_policy_forward.1} parent=1 // pred_fallthru
      _
    // Predicated region
    $region70: #{conv_policy_forward.1} parent=1 // pred_check
      _
    $region71: #{conv_policy_forward.1} parent=1 // pred_check_branch
      %202 = sbr.rel (0) target = $region73
    $region72: #{conv_policy_forward.1} parent=1 // pred_region
      %204 = dma.done [#allocation3], 32
    $region73: #{conv_policy_forward.1} parent=1 // pred_fallthru
      _
    // Predicated region
    $region74: #{conv_policy_forward.1} parent=1 // pred_check
      _
    $region75: #{conv_policy_forward.1} parent=1 // pred_check_branch
      %206 = sbr.rel (0) target = $region77
    $region76: #{conv_policy_forward.1} parent=1 // pred_region
      %208 = dma.done [#allocation6], 65536
    $region77: #{conv_policy_forward.1} parent=1 // pred_fallthru
      _
    // Predicated region
    $region78: #{conv_policy_forward.1} parent=1 // pred_check
      _
    $region79: #{conv_policy_forward.1} parent=1 // pred_check_branch
      %210 = sbr.rel (0) target = $region81
    $region80: #{conv_policy_forward.1} parent=1 // pred_region
      %212 = dma.done [#allocation6], 64
    $region81: #{conv_policy_forward.1} parent=1 // pred_fallthru
      _
    // Predicated region
    $region82: #{conv_policy_forward.1} parent=1 // pred_check
      _
    $region83: #{conv_policy_forward.1} parent=1 // pred_check_branch
      %214 = sbr.rel (0) target = $region85
    $region84: #{conv_policy_forward.1} parent=1 // pred_region
      %216 = dma.done [#allocation9], 16384
    $region85: #{conv_policy_forward.1} parent=1 // pred_fallthru
      _
    // Predicated region
    $region86: #{conv_policy_forward.1} parent=1 // pred_check
      _
    $region87: #{conv_policy_forward.1} parent=1 // pred_check_branch
      %218 = sbr.rel (0) target = $region89
    $region88: #{conv_policy_forward.1} parent=1 // pred_region
      %220 = dma.done [#allocation9], 32
    $region89: #{conv_policy_forward.1} parent=1 // pred_fallthru
      _
    // Predicated region
    $region90: #{conv_policy_forward.1} parent=1 // pred_check
      _
    $region91: #{conv_policy_forward.1} parent=1 // pred_check_branch
      %222 = sbr.rel (0) target = $region93
    $region92: #{conv_policy_forward.1} parent=1 // pred_region
      %224 = dma.done [#allocation12], 4096
    $region93: #{conv_policy_forward.1} parent=1 // pred_fallthru
      _
    // Predicated region
    $region94: #{conv_policy_forward.1} parent=1 // pred_check
      _
    $region95: #{conv_policy_forward.1} parent=1 // pred_check_branch
      %226 = sbr.rel (0) target = $region97
    $region96: #{conv_policy_forward.1} parent=1 // pred_region
      %228 = dma.done [#allocation12], 16
    $region97: #{conv_policy_forward.1} parent=1 // pred_fallthru
      _
    // Predicated region
    $region98: #{conv_policy_forward.1} parent=1 // pred_check
      _
    $region99: #{conv_policy_forward.1} parent=1 // pred_check_branch
      %230 = sbr.rel (0) target = $region101
    $region100: #{conv_policy_forward.1} parent=1 // pred_region
      %232 = dma.done [#allocation15], 128
    $region101: #{conv_policy_forward.1} parent=1 // pred_fallthru
      _
    // Predicated region
    $region102: #{conv_policy_forward.1} parent=1 // pred_check
      _
    $region103: #{conv_policy_forward.1} parent=1 // pred_check_branch
      %234 = sbr.rel (0) target = $region105
    $region104: #{conv_policy_forward.1} parent=1 // pred_region
      %236 = dma.done [#allocation15], 16
    $region105: #{conv_policy_forward.1} parent=1 // pred_fallthru
      _
    // Predicated region
    $region106: #{conv_policy_forward.1} parent=1 // pred_check
      _
    $region107: #{conv_policy_forward.1} parent=1 // pred_check_branch
      %238 = sbr.rel (0) target = $region109
    $region108: #{conv_policy_forward.1} parent=1 // pred_region
      %240 = dma.done [#allocation18], 512
    $region109: #{conv_policy_forward.1} parent=1 // pred_fallthru
      _
    // Predicated region
    $region110: #{conv_policy_forward.1} parent=1 // pred_check
      _
    $region111: #{conv_policy_forward.1} parent=1 // pred_check_branch
      %242 = sbr.rel (0) target = $region113
    $region112: #{conv_policy_forward.1} parent=1 // pred_region
      %244 = dma.done [#allocation18], 16
    $region113: #{conv_policy_forward.1} parent=1 // pred_fallthru
      _
    // Predicated region
    $region114: #{conv_policy_forward.1} parent=1 // pred_check
      _
    $region115: #{conv_policy_forward.1} parent=1 // pred_check_branch
      %246 = sbr.rel (0) target = $region117
    $region116: #{conv_policy_forward.1} parent=1 // pred_region
      %248 = dma.done [#allocation21], 10240
    $region117: #{conv_policy_forward.1} parent=1 // pred_fallthru
      _
    // Predicated region
    $region118: #{conv_policy_forward.1} parent=1 // pred_check
      _
    $region119: #{conv_policy_forward.1} parent=1 // pred_check_branch
      %250 = sbr.rel (0) target = $region121
    $region120: #{conv_policy_forward.1} parent=1 // pred_region
      %252 = dma.done [#allocation21], 160
    $region121: #{conv_policy_forward.1} parent=1 // pred_fallthru
      _
    // Predicated region
    $region122: #{conv_policy_forward.1} parent=1 // pred_check
      _
    $region123: #{conv_policy_forward.1} parent=1 // pred_check_branch
      %254 = sbr.rel (0) target = $region125
    $region124: #{conv_policy_forward.1} parent=1 // pred_region
      %256 = dma.done [#allocation24], 16
    $region125: #{conv_policy_forward.1} parent=1 // pred_fallthru
      _
    %v257 = vld [vmem:[%s0] sm:$0xff]
    %v258 = vld [vmem:[%s0 + $0x8] sm:$0xff]
    %v259 = vld [vmem:[#allocation5] sm:$0xff]
    %v260 = vld [vmem:[#allocation5 + $0x8] sm:$0xff]
    %v261 = vld [vmem:[#allocation5 + $0x10] sm:$0xff]
    %v262 = vld [vmem:[#allocation5 + $0x18] sm:$0xff]
    %v263 = vld [vmem:[#allocation5 + $0x20] sm:$0xff]
    %v264 = vld [vmem:[#allocation5 + $0x28] sm:$0xff]
    %v265 = vld [vmem:[#allocation5 + $0x30] sm:$0xff]
    %v266 = vld [vmem:[#allocation5 + $0x38] sm:$0xff]
    %v267 = vld [vmem:[#allocation5 + $0x40] sm:$0xff]
    %v268 = vld [vmem:[#allocation5 + $0x48] sm:$0xff]
    %v269 = vld [vmem:[#allocation5 + $0x50] sm:$0xff]
    %v270 = vld [vmem:[#allocation5 + $0x58] sm:$0xff]
    %v271 = vld [vmem:[#allocation5 + $0x60] sm:$0xff]
    %v272 = vld [vmem:[#allocation5 + $0x68] sm:$0xff]
    %v273 = vld [vmem:[#allocation5 + $0x70] sm:$0xff]
    %v274 = vld [vmem:[#allocation5 + $0x78] sm:$0xff]
    %v275 = vld [vmem:[#allocation5 + $0x80] sm:$0xff]
    %v276 = vld [vmem:[#allocation5 + $0x88] sm:$0xff]
    %v277 = vld [vmem:[#allocation5 + $0x90] sm:$0xff]
    %v278 = vld [vmem:[#allocation5 + $0x98] sm:$0xff]
    %v279 = vld [vmem:[#allocation5 + $0xa0] sm:$0xff]
    %v280 = vld [vmem:[#allocation5 + $0xa8] sm:$0xff]
    %v281 = vld [vmem:[#allocation5 + $0xb0] sm:$0xff]
    %v282 = vld [vmem:[#allocation5 + $0xb8] sm:$0xff]
    %v283 = vld [vmem:[#allocation5 + $0xc0] sm:$0xff]
    %v284 = vld [vmem:[#allocation5 + $0xc8] sm:$0xff]
    %v285 = vld [vmem:[#allocation5 + $0xd0] sm:$0xff]
    %v286 = vld [vmem:[#allocation5 + $0xd8] sm:$0xff]
    %v287 = vld [vmem:[#allocation5 + $0xe0] sm:$0xff]
    %v288 = vld [vmem:[#allocation5 + $0xe8] sm:$0xff]
    %v289 = vld [vmem:[#allocation5 + $0xf0] sm:$0xff]
    %v290 = vld [vmem:[#allocation5 + $0xf8] sm:$0xff]
    %v291 = vld [vmem:[#allocation5 + $0x100] sm:$0xff]
    %v292 = vld [vmem:[#allocation5 + $0x108] sm:$0xff]
    %v293 = vld [vmem:[#allocation5 + $0x110] sm:$0xff]
    %v294 = vld [vmem:[#allocation5 + $0x118] sm:$0xff]
    %v295 = vld [vmem:[#allocation5 + $0x120] sm:$0xff]
    %v296 = vld [vmem:[#allocation5 + $0x128] sm:$0xff]
    %v297 = vld [vmem:[#allocation5 + $0x130] sm:$0xff]
    %v298 = vld [vmem:[#allocation5 + $0x138] sm:$0xff]
    %v299 = vld [vmem:[#allocation5 + $0x140] sm:$0xff]
    %v300 = vld [vmem:[#allocation5 + $0x148] sm:$0xff]
    %v301 = vld [vmem:[#allocation5 + $0x150] sm:$0xff]
    %v302 = vld [vmem:[#allocation5 + $0x158] sm:$0xff]
    %v303 = vld [vmem:[#allocation5 + $0x160] sm:$0xff]
    %v304 = vld [vmem:[#allocation5 + $0x168] sm:$0xff]
    %v305 = vld [vmem:[#allocation5 + $0x170] sm:$0xff]
    %v306 = vld [vmem:[#allocation5 + $0x178] sm:$0xff]
    %v307 = vld [vmem:[#allocation5 + $0x180] sm:$0xff]
    %v308 = vld [vmem:[#allocation5 + $0x188] sm:$0xff]
    %v309 = vld [vmem:[#allocation5 + $0x190] sm:$0xff]
    %v310 = vld [vmem:[#allocation5 + $0x198] sm:$0xff]
    %v311 = vld [vmem:[#allocation5 + $0x1a0] sm:$0xff]
    %v312 = vld [vmem:[#allocation5 + $0x1a8] sm:$0xff]
    %v313 = vld [vmem:[#allocation5 + $0x1b0] sm:$0xff]
    %v314 = vld [vmem:[#allocation5 + $0x1b8] sm:$0xff]
    %v315 = vld [vmem:[#allocation5 + $0x1c0] sm:$0xff]
    %v316 = vld [vmem:[#allocation5 + $0x1c8] sm:$0xff]
    %v317 = vld [vmem:[#allocation5 + $0x1d0] sm:$0xff]
    %v318 = vld [vmem:[#allocation5 + $0x1d8] sm:$0xff]
    %v319 = vld [vmem:[#allocation5 + $0x1e0] sm:$0xff]
    %v320 = vld [vmem:[#allocation5 + $0x1e8] sm:$0xff]
    %v321 = vld [vmem:[#allocation5 + $0x1f0] sm:$0xff]
    %v322 = vld [vmem:[#allocation5 + $0x1f8] sm:$0xff]
    %v323 = vld [vmem:[#allocation5 + $0x200] sm:$0xff]
    %v324 = vld [vmem:[#allocation5 + $0x208] sm:$0xff]
    %v325 = vld [vmem:[#allocation5 + $0x210] sm:$0xff]
    %v326 = vld [vmem:[#allocation5 + $0x218] sm:$0xff]
    %v327 = vld [vmem:[#allocation5 + $0x220] sm:$0xff]
    %v328 = vld [vmem:[#allocation5 + $0x228] sm:$0xff]
    %v329 = vld [vmem:[#allocation5 + $0x230] sm:$0xff]
    %v330 = vld [vmem:[#allocation5 + $0x238] sm:$0xff]
    %v331 = vld [vmem:[#allocation5 + $0x240] sm:$0xff]
    %v332 = vld [vmem:[#allocation5 + $0x248] sm:$0xff]
    %v333 = vld [vmem:[#allocation5 + $0x250] sm:$0xff]
    %v334 = vld [vmem:[#allocation5 + $0x258] sm:$0xff]
    %v335 = vld [vmem:[#allocation5 + $0x260] sm:$0xff]
    %v336 = vld [vmem:[#allocation5 + $0x268] sm:$0xff]
    %v337 = vld [vmem:[#allocation5 + $0x270] sm:$0xff]
    %v338 = vld [vmem:[#allocation5 + $0x278] sm:$0xff]
    %v339 = vld [vmem:[#allocation5 + $0x280] sm:$0xff]
    %v340 = vld [vmem:[#allocation5 + $0x288] sm:$0xff]
    %v341 = vld [vmem:[#allocation5 + $0x290] sm:$0xff]
    %v342 = vld [vmem:[#allocation5 + $0x298] sm:$0xff]
    %v343 = vld [vmem:[#allocation5 + $0x2a0] sm:$0xff]
    %v344 = vld [vmem:[#allocation5 + $0x2a8] sm:$0xff]
    %v345 = vld [vmem:[#allocation5 + $0x2b0] sm:$0xff]
    %v346 = vld [vmem:[#allocation5 + $0x2b8] sm:$0xff]
    %v347 = vld [vmem:[#allocation5 + $0x2c0] sm:$0xff]
    %v348 = vld [vmem:[#allocation5 + $0x2c8] sm:$0xff]
    %v349 = vld [vmem:[#allocation5 + $0x2d0] sm:$0xff]
    %v350 = vld [vmem:[#allocation5 + $0x2d8] sm:$0xff]
    %v351 = vld [vmem:[#allocation5 + $0x2e0] sm:$0xff]
    %v352 = vld [vmem:[#allocation5 + $0x2e8] sm:$0xff]
    %v353 = vld [vmem:[#allocation5 + $0x2f0] sm:$0xff]
    %v354 = vld [vmem:[#allocation5 + $0x2f8] sm:$0xff]
    %v355 = vld [vmem:[#allocation5 + $0x300] sm:$0xff]
    %v356 = vld [vmem:[#allocation5 + $0x308] sm:$0xff]
    %v357 = vld [vmem:[#allocation5 + $0x310] sm:$0xff]
    %v358 = vld [vmem:[#allocation5 + $0x318] sm:$0xff]
    %v359 = vld [vmem:[#allocation5 + $0x320] sm:$0xff]
    %v360 = vld [vmem:[#allocation5 + $0x328] sm:$0xff]
    %v361 = vld [vmem:[#allocation5 + $0x330] sm:$0xff]
    %v362 = vld [vmem:[#allocation5 + $0x338] sm:$0xff]
    %v363 = vld [vmem:[#allocation5 + $0x340] sm:$0xff]
    %v364 = vld [vmem:[#allocation5 + $0x348] sm:$0xff]
    %v365 = vld [vmem:[#allocation5 + $0x350] sm:$0xff]
    %v366 = vld [vmem:[#allocation5 + $0x358] sm:$0xff]
    %v367 = vld [vmem:[#allocation5 + $0x360] sm:$0xff]
    %v368 = vld [vmem:[#allocation5 + $0x368] sm:$0xff]
    %v369 = vld [vmem:[#allocation5 + $0x370] sm:$0xff]
    %v370 = vld [vmem:[#allocation5 + $0x378] sm:$0xff]
    %v371 = vld [vmem:[#allocation5 + $0x380] sm:$0xff]
    %v372 = vld [vmem:[#allocation5 + $0x388] sm:$0xff]
    %v373 = vld [vmem:[#allocation5 + $0x390] sm:$0xff]
    %v374 = vld [vmem:[#allocation5 + $0x398] sm:$0xff]
    %v375 = vld [vmem:[#allocation5 + $0x3a0] sm:$0xff]
    %v376 = vld [vmem:[#allocation5 + $0x3a8] sm:$0xff]
    %v377 = vld [vmem:[#allocation5 + $0x3b0] sm:$0xff]
    %v378 = vld [vmem:[#allocation5 + $0x3b8] sm:$0xff]
    %v379 = vld [vmem:[#allocation5 + $0x3c0] sm:$0xff]
    %v380 = vld [vmem:[#allocation5 + $0x3c8] sm:$0xff]
    %v381 = vld [vmem:[#allocation5 + $0x3d0] sm:$0xff]
    %v382 = vld [vmem:[#allocation5 + $0x3d8] sm:$0xff]
    %v383 = vld [vmem:[#allocation5 + $0x3e0] sm:$0xff]
    %v384 = vld [vmem:[#allocation5 + $0x3e8] sm:$0xff]
    %v385 = vld [vmem:[#allocation5 + $0x3f0] sm:$0xff]
    %v386 = vld [vmem:[#allocation5 + $0x3f8] sm:$0xff]
    %v387 = vld [vmem:[#allocation5 + $0x400] sm:$0xff]
    %v388 = vld [vmem:[#allocation5 + $0x408] sm:$0xff]
    %v389 = vld [vmem:[#allocation5 + $0x410] sm:$0xff]
    %v390 = vld [vmem:[#allocation5 + $0x418] sm:$0xff]
    %v391 = vld [vmem:[#allocation5 + $0x420] sm:$0xff]
    %v392 = vld [vmem:[#allocation5 + $0x428] sm:$0xff]
    %v393 = vld [vmem:[#allocation5 + $0x430] sm:$0xff]
    %v394 = vld [vmem:[#allocation5 + $0x438] sm:$0xff]
    %v395 = vld [vmem:[#allocation5 + $0x440] sm:$0xff]
    %v396 = vld [vmem:[#allocation5 + $0x448] sm:$0xff]
    %v397 = vld [vmem:[#allocation5 + $0x450] sm:$0xff]
    %v398 = vld [vmem:[#allocation5 + $0x458] sm:$0xff]
    %v399 = vld [vmem:[#allocation5 + $0x460] sm:$0xff]
    %v400 = vld [vmem:[#allocation5 + $0x468] sm:$0xff]
    %v401 = vld [vmem:[#allocation5 + $0x470] sm:$0xff]
    %v402 = vld [vmem:[#allocation5 + $0x478] sm:$0xff]
    %v403 = vld [vmem:[#allocation5 + $0x480] sm:$0xff]
    %v404 = vld [vmem:[#allocation5 + $0x488] sm:$0xff]
    %v405 = vld [vmem:[#allocation5 + $0x490] sm:$0xff]
    %v406 = vld [vmem:[#allocation5 + $0x498] sm:$0xff]
    %v407 = vld [vmem:[#allocation5 + $0x4a0] sm:$0xff]
    %v408 = vld [vmem:[#allocation5 + $0x4a8] sm:$0xff]
    %v409 = vld [vmem:[#allocation5 + $0x4b0] sm:$0xff]
    %v410 = vld [vmem:[#allocation5 + $0x4b8] sm:$0xff]
    %v411 = vld [vmem:[#allocation5 + $0x4c0] sm:$0xff]
    %v412 = vld [vmem:[#allocation5 + $0x4c8] sm:$0xff]
    %v413 = vld [vmem:[#allocation5 + $0x4d0] sm:$0xff]
    %v414 = vld [vmem:[#allocation5 + $0x4d8] sm:$0xff]
    %v415 = vld [vmem:[#allocation5 + $0x4e0] sm:$0xff]
    %v416 = vld [vmem:[#allocation5 + $0x4e8] sm:$0xff]
    %v417 = vld [vmem:[#allocation5 + $0x4f0] sm:$0xff]
    %v418 = vld [vmem:[#allocation5 + $0x4f8] sm:$0xff]
    %v419 = vld [vmem:[#allocation5 + $0x500] sm:$0xff]
    %v420 = vld [vmem:[#allocation5 + $0x508] sm:$0xff]
    %v421 = vld [vmem:[#allocation5 + $0x510] sm:$0xff]
    %v422 = vld [vmem:[#allocation5 + $0x518] sm:$0xff]
    %v423 = vld [vmem:[#allocation5 + $0x520] sm:$0xff]
    %v424 = vld [vmem:[#allocation5 + $0x528] sm:$0xff]
    %v425 = vld [vmem:[#allocation5 + $0x530] sm:$0xff]
    %v426 = vld [vmem:[#allocation5 + $0x538] sm:$0xff]
    %v427 = vld [vmem:[#allocation5 + $0x540] sm:$0xff]
    %v428 = vld [vmem:[#allocation5 + $0x548] sm:$0xff]
    %v429 = vld [vmem:[#allocation5 + $0x550] sm:$0xff]
    %v430 = vld [vmem:[#allocation5 + $0x558] sm:$0xff]
    %v431 = vld [vmem:[#allocation5 + $0x560] sm:$0xff]
    %v432 = vld [vmem:[#allocation5 + $0x568] sm:$0xff]
    %v433 = vld [vmem:[#allocation5 + $0x570] sm:$0xff]
    %v434 = vld [vmem:[#allocation5 + $0x578] sm:$0xff]
    %v435 = vld [vmem:[#allocation5 + $0x580] sm:$0xff]
    %v436 = vld [vmem:[#allocation5 + $0x588] sm:$0xff]
    %v437 = vld [vmem:[#allocation5 + $0x590] sm:$0xff]
    %v438 = vld [vmem:[#allocation5 + $0x598] sm:$0xff]
    %v439 = vld [vmem:[#allocation5 + $0x5a0] sm:$0xff]
    %v440 = vld [vmem:[#allocation5 + $0x5a8] sm:$0xff]
    %v441 = vld [vmem:[#allocation5 + $0x5b0] sm:$0xff]
    %v442 = vld [vmem:[#allocation5 + $0x5b8] sm:$0xff]
    %v443 = vld [vmem:[#allocation5 + $0x5c0] sm:$0xff]
    %v444 = vld [vmem:[#allocation5 + $0x5c8] sm:$0xff]
    %v445 = vld [vmem:[#allocation5 + $0x5d0] sm:$0xff]
    %v446 = vld [vmem:[#allocation5 + $0x5d8] sm:$0xff]
    %v447 = vld [vmem:[#allocation5 + $0x5e0] sm:$0xff]
    %v448 = vld [vmem:[#allocation5 + $0x5e8] sm:$0xff]
    %v449 = vld [vmem:[#allocation5 + $0x5f0] sm:$0xff]
    %v450 = vld [vmem:[#allocation5 + $0x5f8] sm:$0xff]
    %v451 = vld [vmem:[#allocation5 + $0x600] sm:$0xff]
    %v452 = vld [vmem:[#allocation5 + $0x608] sm:$0xff]
    %v453 = vld [vmem:[#allocation5 + $0x610] sm:$0xff]
    %v454 = vld [vmem:[#allocation5 + $0x618] sm:$0xff]
    %v455 = vld [vmem:[#allocation5 + $0x620] sm:$0xff]
    %v456 = vld [vmem:[#allocation5 + $0x628] sm:$0xff]
    %v457 = vld [vmem:[#allocation5 + $0x630] sm:$0xff]
    %v458 = vld [vmem:[#allocation5 + $0x638] sm:$0xff]
    %v459 = vld [vmem:[#allocation5 + $0x640] sm:$0xff]
    %v460 = vld [vmem:[#allocation5 + $0x648] sm:$0xff]
    %v461 = vld [vmem:[#allocation5 + $0x650] sm:$0xff]
    %v462 = vld [vmem:[#allocation5 + $0x658] sm:$0xff]
    %v463 = vld [vmem:[#allocation5 + $0x660] sm:$0xff]
    %v464 = vld [vmem:[#allocation5 + $0x668] sm:$0xff]
    %v465 = vld [vmem:[#allocation5 + $0x670] sm:$0xff]
    %v466 = vld [vmem:[#allocation5 + $0x678] sm:$0xff]
    %v467 = vld [vmem:[#allocation5 + $0x680] sm:$0xff]
    %v468 = vld [vmem:[#allocation5 + $0x688] sm:$0xff]
    %v469 = vld [vmem:[#allocation5 + $0x690] sm:$0xff]
    %v470 = vld [vmem:[#allocation5 + $0x698] sm:$0xff]
    %v471 = vld [vmem:[#allocation5 + $0x6a0] sm:$0xff]
    %v472 = vld [vmem:[#allocation5 + $0x6a8] sm:$0xff]
    %v473 = vld [vmem:[#allocation5 + $0x6b0] sm:$0xff]
    %v474 = vld [vmem:[#allocation5 + $0x6b8] sm:$0xff]
    %v475 = vld [vmem:[#allocation5 + $0x6c0] sm:$0xff]
    %v476 = vld [vmem:[#allocation5 + $0x6c8] sm:$0xff]
    %v477 = vld [vmem:[#allocation5 + $0x6d0] sm:$0xff]
    %v478 = vld [vmem:[#allocation5 + $0x6d8] sm:$0xff]
    %v479 = vld [vmem:[#allocation5 + $0x6e0] sm:$0xff]
    %v480 = vld [vmem:[#allocation5 + $0x6e8] sm:$0xff]
    %v481 = vld [vmem:[#allocation5 + $0x6f0] sm:$0xff]
    %v482 = vld [vmem:[#allocation5 + $0x6f8] sm:$0xff]
    %v483 = vld [vmem:[#allocation5 + $0x700] sm:$0xff]
    %v484 = vld [vmem:[#allocation5 + $0x708] sm:$0xff]
    %v485 = vld [vmem:[#allocation5 + $0x710] sm:$0xff]
    %v486 = vld [vmem:[#allocation5 + $0x718] sm:$0xff]
    %v487 = vld [vmem:[#allocation5 + $0x720] sm:$0xff]
    %v488 = vld [vmem:[#allocation5 + $0x728] sm:$0xff]
    %v489 = vld [vmem:[#allocation5 + $0x730] sm:$0xff]
    %v490 = vld [vmem:[#allocation5 + $0x738] sm:$0xff]
    %v491 = vld [vmem:[#allocation5 + $0x740] sm:$0xff]
    %v492 = vld [vmem:[#allocation5 + $0x748] sm:$0xff]
    %v493 = vld [vmem:[#allocation5 + $0x750] sm:$0xff]
    %v494 = vld [vmem:[#allocation5 + $0x758] sm:$0xff]
    %v495 = vld [vmem:[#allocation5 + $0x760] sm:$0xff]
    %v496 = vld [vmem:[#allocation5 + $0x768] sm:$0xff]
    %v497 = vld [vmem:[#allocation5 + $0x770] sm:$0xff]
    %v498 = vld [vmem:[#allocation5 + $0x778] sm:$0xff]
    %v499 = vld [vmem:[#allocation5 + $0x780] sm:$0xff]
    %v500 = vld [vmem:[#allocation5 + $0x788] sm:$0xff]
    %v501 = vld [vmem:[#allocation5 + $0x790] sm:$0xff]
    %v502 = vld [vmem:[#allocation5 + $0x798] sm:$0xff]
    %v503 = vld [vmem:[#allocation5 + $0x7a0] sm:$0xff]
    %v504 = vld [vmem:[#allocation5 + $0x7a8] sm:$0xff]
    %v505 = vld [vmem:[#allocation5 + $0x7b0] sm:$0xff]
    %v506 = vld [vmem:[#allocation5 + $0x7b8] sm:$0xff]
    %v507 = vld [vmem:[#allocation5 + $0x7c0] sm:$0xff]
    %v508 = vld [vmem:[#allocation5 + $0x7c8] sm:$0xff]
    %v509 = vld [vmem:[#allocation5 + $0x7d0] sm:$0xff]
    %v510 = vld [vmem:[#allocation5 + $0x7d8] sm:$0xff]
    %v511 = vld [vmem:[#allocation5 + $0x7e0] sm:$0xff]
    %v512 = vld [vmem:[#allocation5 + $0x7e8] sm:$0xff]
    %v513 = vld [vmem:[#allocation5 + $0x7f0] sm:$0xff]
    %v514 = vld [vmem:[#allocation5 + $0x7f8] sm:$0xff]
    %v515 = vld [vmem:[#allocation5 + $0x800] sm:$0xff]
    %v516 = vld [vmem:[#allocation5 + $0x808] sm:$0xff]
    %v517 = vld [vmem:[#allocation5 + $0x810] sm:$0xff]
    %v518 = vld [vmem:[#allocation5 + $0x818] sm:$0xff]
    %v519 = vld [vmem:[#allocation5 + $0x820] sm:$0xff]
    %v520 = vld [vmem:[#allocation5 + $0x828] sm:$0xff]
    %v521 = vld [vmem:[#allocation5 + $0x830] sm:$0xff]
    %v522 = vld [vmem:[#allocation5 + $0x838] sm:$0xff]
    %v523 = vld [vmem:[#allocation5 + $0x840] sm:$0xff]
    %v524 = vld [vmem:[#allocation5 + $0x848] sm:$0xff]
    %v525 = vld [vmem:[#allocation5 + $0x850] sm:$0xff]
    %v526 = vld [vmem:[#allocation5 + $0x858] sm:$0xff]
    %v527 = vld [vmem:[#allocation5 + $0x860] sm:$0xff]
    %v528 = vld [vmem:[#allocation5 + $0x868] sm:$0xff]
    %v529 = vld [vmem:[#allocation5 + $0x870] sm:$0xff]
    %v530 = vld [vmem:[#allocation5 + $0x878] sm:$0xff]
    %v531 = vld [vmem:[#allocation5 + $0x880] sm:$0xff]
    %v532 = vld [vmem:[#allocation5 + $0x888] sm:$0xff]
    %v533 = vld [vmem:[#allocation5 + $0x890] sm:$0xff]
    %v534 = vld [vmem:[#allocation5 + $0x898] sm:$0xff]
    %v535 = vld [vmem:[#allocation5 + $0x8a0] sm:$0xff]
    %v536 = vld [vmem:[#allocation5 + $0x8a8] sm:$0xff]
    %v537 = vld [vmem:[#allocation5 + $0x8b0] sm:$0xff]
    %v538 = vld [vmem:[#allocation5 + $0x8b8] sm:$0xff]
    %v539 = vld [vmem:[#allocation5 + $0x8c0] sm:$0xff]
    %v540 = vld [vmem:[#allocation5 + $0x8c8] sm:$0xff]
    %v541 = vld [vmem:[#allocation5 + $0x8d0] sm:$0xff]
    %v542 = vld [vmem:[#allocation5 + $0x8d8] sm:$0xff]
    %v543 = vld [vmem:[#allocation5 + $0x8e0] sm:$0xff]
    %v544 = vld [vmem:[#allocation5 + $0x8e8] sm:$0xff]
    %v545 = vld [vmem:[#allocation5 + $0x8f0] sm:$0xff]
    %v546 = vld [vmem:[#allocation5 + $0x8f8] sm:$0xff]
    %v547 = vld [vmem:[#allocation5 + $0x900] sm:$0xff]
    %v548 = vld [vmem:[#allocation5 + $0x908] sm:$0xff]
    %v549 = vld [vmem:[#allocation5 + $0x910] sm:$0xff]
    %v550 = vld [vmem:[#allocation5 + $0x918] sm:$0xff]
    %v551 = vld [vmem:[#allocation5 + $0x920] sm:$0xff]
    %v552 = vld [vmem:[#allocation5 + $0x928] sm:$0xff]
    %v553 = vld [vmem:[#allocation5 + $0x930] sm:$0xff]
    %v554 = vld [vmem:[#allocation5 + $0x938] sm:$0xff]
    %v555 = vld [vmem:[#allocation5 + $0x940] sm:$0xff]
    %v556 = vld [vmem:[#allocation5 + $0x948] sm:$0xff]
    %v557 = vld [vmem:[#allocation5 + $0x950] sm:$0xff]
    %v558 = vld [vmem:[#allocation5 + $0x958] sm:$0xff]
    %v559 = vld [vmem:[#allocation5 + $0x960] sm:$0xff]
    %v560 = vld [vmem:[#allocation5 + $0x968] sm:$0xff]
    %v561 = vld [vmem:[#allocation5 + $0x970] sm:$0xff]
    %v562 = vld [vmem:[#allocation5 + $0x978] sm:$0xff]
    %v563 = vld [vmem:[#allocation5 + $0x980] sm:$0xff]
    %v564 = vld [vmem:[#allocation5 + $0x988] sm:$0xff]
    %v565 = vld [vmem:[#allocation5 + $0x990] sm:$0xff]
    %v566 = vld [vmem:[#allocation5 + $0x998] sm:$0xff]
    %v567 = vld [vmem:[#allocation5 + $0x9a0] sm:$0xff]
    %v568 = vld [vmem:[#allocation5 + $0x9a8] sm:$0xff]
    %v569 = vld [vmem:[#allocation5 + $0x9b0] sm:$0xff]
    %v570 = vld [vmem:[#allocation5 + $0x9b8] sm:$0xff]
    %v571 = vld [vmem:[#allocation5 + $0x9c0] sm:$0xff]
    %v572 = vld [vmem:[#allocation5 + $0x9c8] sm:$0xff]
    %v573 = vld [vmem:[#allocation5 + $0x9d0] sm:$0xff]
    %v574 = vld [vmem:[#allocation5 + $0x9d8] sm:$0xff]
    %v575 = vld [vmem:[#allocation5 + $0x9e0] sm:$0xff]
    %v576 = vld [vmem:[#allocation5 + $0x9e8] sm:$0xff]
    %v577 = vld [vmem:[#allocation5 + $0x9f0] sm:$0xff]
    %v578 = vld [vmem:[#allocation5 + $0x9f8] sm:$0xff]
    %v579 = vld [vmem:[#allocation5 + $0xa00] sm:$0xff]
    %v580 = vld [vmem:[#allocation5 + $0xa08] sm:$0xff]
    %v581 = vld [vmem:[#allocation5 + $0xa10] sm:$0xff]
    %v582 = vld [vmem:[#allocation5 + $0xa18] sm:$0xff]
    %v583 = vld [vmem:[#allocation5 + $0xa20] sm:$0xff]
    %v584 = vld [vmem:[#allocation5 + $0xa28] sm:$0xff]
    %v585 = vld [vmem:[#allocation5 + $0xa30] sm:$0xff]
    %v586 = vld [vmem:[#allocation5 + $0xa38] sm:$0xff]
    %v587 = vld [vmem:[#allocation5 + $0xa40] sm:$0xff]
    %v588 = vld [vmem:[#allocation5 + $0xa48] sm:$0xff]
    %v589 = vld [vmem:[#allocation5 + $0xa50] sm:$0xff]
    %v590 = vld [vmem:[#allocation5 + $0xa58] sm:$0xff]
    %v591 = vld [vmem:[#allocation5 + $0xa60] sm:$0xff]
    %v592 = vld [vmem:[#allocation5 + $0xa68] sm:$0xff]
    %v593 = vld [vmem:[#allocation5 + $0xa70] sm:$0xff]
    %v594 = vld [vmem:[#allocation5 + $0xa78] sm:$0xff]
    %v595 = vld [vmem:[#allocation5 + $0xa80] sm:$0xff]
    %v596 = vld [vmem:[#allocation5 + $0xa88] sm:$0xff]
    %v597 = vld [vmem:[#allocation5 + $0xa90] sm:$0xff]
    %v598 = vld [vmem:[#allocation5 + $0xa98] sm:$0xff]
    %v599 = vld [vmem:[#allocation5 + $0xaa0] sm:$0xff]
    %v600 = vld [vmem:[#allocation5 + $0xaa8] sm:$0xff]
    %v601 = vld [vmem:[#allocation5 + $0xab0] sm:$0xff]
    %v602 = vld [vmem:[#allocation5 + $0xab8] sm:$0xff]
    %v603 = vld [vmem:[#allocation5 + $0xac0] sm:$0xff]
    %v604 = vld [vmem:[#allocation5 + $0xac8] sm:$0xff]
    %v605 = vld [vmem:[#allocation5 + $0xad0] sm:$0xff]
    %v606 = vld [vmem:[#allocation5 + $0xad8] sm:$0xff]
    %v607 = vld [vmem:[#allocation5 + $0xae0] sm:$0xff]
    %v608 = vld [vmem:[#allocation5 + $0xae8] sm:$0xff]
    %v609 = vld [vmem:[#allocation5 + $0xaf0] sm:$0xff]
    %v610 = vld [vmem:[#allocation5 + $0xaf8] sm:$0xff]
    %v611 = vld [vmem:[#allocation5 + $0xb00] sm:$0xff]
    %v612 = vld [vmem:[#allocation5 + $0xb08] sm:$0xff]
    %v613 = vld [vmem:[#allocation5 + $0xb10] sm:$0xff]
    %v614 = vld [vmem:[#allocation5 + $0xb18] sm:$0xff]
    %v615 = vld [vmem:[#allocation5 + $0xb20] sm:$0xff]
    %v616 = vld [vmem:[#allocation5 + $0xb28] sm:$0xff]
    %v617 = vld [vmem:[#allocation5 + $0xb30] sm:$0xff]
    %v618 = vld [vmem:[#allocation5 + $0xb38] sm:$0xff]
    %v619 = vld [vmem:[#allocation5 + $0xb40] sm:$0xff]
    %v620 = vld [vmem:[#allocation5 + $0xb48] sm:$0xff]
    %v621 = vld [vmem:[#allocation5 + $0xb50] sm:$0xff]
    %v622 = vld [vmem:[#allocation5 + $0xb58] sm:$0xff]
    %v623 = vld [vmem:[#allocation5 + $0xb60] sm:$0xff]
    %v624 = vld [vmem:[#allocation5 + $0xb68] sm:$0xff]
    %v625 = vld [vmem:[#allocation5 + $0xb70] sm:$0xff]
    %v626 = vld [vmem:[#allocation5 + $0xb78] sm:$0xff]
    %v627 = vld [vmem:[#allocation5 + $0xb80] sm:$0xff]
    %v628 = vld [vmem:[#allocation5 + $0xb88] sm:$0xff]
    %v629 = vld [vmem:[#allocation5 + $0xb90] sm:$0xff]
    %v630 = vld [vmem:[#allocation5 + $0xb98] sm:$0xff]
    %v631 = vld [vmem:[#allocation5 + $0xba0] sm:$0xff]
    %v632 = vld [vmem:[#allocation5 + $0xba8] sm:$0xff]
    %v633 = vld [vmem:[#allocation5 + $0xbb0] sm:$0xff]
    %v634 = vld [vmem:[#allocation5 + $0xbb8] sm:$0xff]
    %v635 = vld [vmem:[#allocation5 + $0xbc0] sm:$0xff]
    %v636 = vld [vmem:[#allocation5 + $0xbc8] sm:$0xff]
    %v637 = vld [vmem:[#allocation5 + $0xbd0] sm:$0xff]
    %v638 = vld [vmem:[#allocation5 + $0xbd8] sm:$0xff]
    %v639 = vld [vmem:[#allocation5 + $0xbe0] sm:$0xff]
    %v640 = vld [vmem:[#allocation5 + $0xbe8] sm:$0xff]
    %v641 = vld [vmem:[#allocation5 + $0xbf0] sm:$0xff]
    %v642 = vld [vmem:[#allocation5 + $0xbf8] sm:$0xff]
    %v643 = vld [vmem:[#allocation5 + $0xc00] sm:$0xff]
    %v644 = vld [vmem:[#allocation5 + $0xc08] sm:$0xff]
    %v645 = vld [vmem:[#allocation5 + $0xc10] sm:$0xff]
    %v646 = vld [vmem:[#allocation5 + $0xc18] sm:$0xff]
    %v647 = vld [vmem:[#allocation5 + $0xc20] sm:$0xff]
    %v648 = vld [vmem:[#allocation5 + $0xc28] sm:$0xff]
    %v649 = vld [vmem:[#allocation5 + $0xc30] sm:$0xff]
    %v650 = vld [vmem:[#allocation5 + $0xc38] sm:$0xff]
    %v651 = vld [vmem:[#allocation5 + $0xc40] sm:$0xff]
    %v652 = vld [vmem:[#allocation5 + $0xc48] sm:$0xff]
    %v653 = vld [vmem:[#allocation5 + $0xc50] sm:$0xff]
    %v654 = vld [vmem:[#allocation5 + $0xc58] sm:$0xff]
    %v655 = vld [vmem:[#allocation5 + $0xc60] sm:$0xff]
    %v656 = vld [vmem:[#allocation5 + $0xc68] sm:$0xff]
    %v657 = vld [vmem:[#allocation5 + $0xc70] sm:$0xff]
    %v658 = vld [vmem:[#allocation5 + $0xc78] sm:$0xff]
    %v659 = vld [vmem:[#allocation5 + $0xc80] sm:$0xff]
    %v660 = vld [vmem:[#allocation5 + $0xc88] sm:$0xff]
    %v661 = vld [vmem:[#allocation5 + $0xc90] sm:$0xff]
    %v662 = vld [vmem:[#allocation5 + $0xc98] sm:$0xff]
    %v663 = vld [vmem:[#allocation5 + $0xca0] sm:$0xff]
    %v664 = vld [vmem:[#allocation5 + $0xca8] sm:$0xff]
    %v665 = vld [vmem:[#allocation5 + $0xcb0] sm:$0xff]
    %v666 = vld [vmem:[#allocation5 + $0xcb8] sm:$0xff]
    %v667 = vld [vmem:[#allocation5 + $0xcc0] sm:$0xff]
    %v668 = vld [vmem:[#allocation5 + $0xcc8] sm:$0xff]
    %v669 = vld [vmem:[#allocation5 + $0xcd0] sm:$0xff]
    %v670 = vld [vmem:[#allocation5 + $0xcd8] sm:$0xff]
    %v671 = vld [vmem:[#allocation5 + $0xce0] sm:$0xff]
    %v672 = vld [vmem:[#allocation5 + $0xce8] sm:$0xff]
    %v673 = vld [vmem:[#allocation5 + $0xcf0] sm:$0xff]
    %v674 = vld [vmem:[#allocation5 + $0xcf8] sm:$0xff]
    %v675 = vld [vmem:[#allocation5 + $0xd00] sm:$0xff]
    %v676 = vld [vmem:[#allocation5 + $0xd08] sm:$0xff]
    %v677 = vld [vmem:[#allocation5 + $0xd10] sm:$0xff]
    %v678 = vld [vmem:[#allocation5 + $0xd18] sm:$0xff]
    %v679 = vld [vmem:[#allocation5 + $0xd20] sm:$0xff]
    %v680 = vld [vmem:[#allocation5 + $0xd28] sm:$0xff]
    %v681 = vld [vmem:[#allocation5 + $0xd30] sm:$0xff]
    %v682 = vld [vmem:[#allocation5 + $0xd38] sm:$0xff]
    %v683 = vld [vmem:[#allocation5 + $0xd40] sm:$0xff]
    %v684 = vld [vmem:[#allocation5 + $0xd48] sm:$0xff]
    %v685 = vld [vmem:[#allocation5 + $0xd50] sm:$0xff]
    %v686 = vld [vmem:[#allocation5 + $0xd58] sm:$0xff]
    %v687 = vld [vmem:[#allocation5 + $0xd60] sm:$0xff]
    %v688 = vld [vmem:[#allocation5 + $0xd68] sm:$0xff]
    %v689 = vld [vmem:[#allocation5 + $0xd70] sm:$0xff]
    %v690 = vld [vmem:[#allocation5 + $0xd78] sm:$0xff]
    %v691 = vld [vmem:[#allocation5 + $0xd80] sm:$0xff]
    %v692 = vld [vmem:[#allocation5 + $0xd88] sm:$0xff]
    %v693 = vld [vmem:[#allocation5 + $0xd90] sm:$0xff]
    %v694 = vld [vmem:[#allocation5 + $0xd98] sm:$0xff]
    %v695 = vld [vmem:[#allocation5 + $0xda0] sm:$0xff]
    %v696 = vld [vmem:[#allocation5 + $0xda8] sm:$0xff]
    %v697 = vld [vmem:[#allocation5 + $0xdb0] sm:$0xff]
    %v698 = vld [vmem:[#allocation5 + $0xdb8] sm:$0xff]
    %v699 = vld [vmem:[#allocation5 + $0xdc0] sm:$0xff]
    %v700 = vld [vmem:[#allocation5 + $0xdc8] sm:$0xff]
    %v701 = vld [vmem:[#allocation5 + $0xdd0] sm:$0xff]
    %v702 = vld [vmem:[#allocation5 + $0xdd8] sm:$0xff]
    %v703 = vld [vmem:[#allocation5 + $0xde0] sm:$0xff]
    %v704 = vld [vmem:[#allocation5 + $0xde8] sm:$0xff]
    %v705 = vld [vmem:[#allocation5 + $0xdf0] sm:$0xff]
    %v706 = vld [vmem:[#allocation5 + $0xdf8] sm:$0xff]
    %v707 = vld [vmem:[#allocation5 + $0xe00] sm:$0xff]
    %v708 = vld [vmem:[#allocation5 + $0xe08] sm:$0xff]
    %v709 = vld [vmem:[#allocation5 + $0xe10] sm:$0xff]
    %v710 = vld [vmem:[#allocation5 + $0xe18] sm:$0xff]
    %v711 = vld [vmem:[#allocation5 + $0xe20] sm:$0xff]
    %v712 = vld [vmem:[#allocation5 + $0xe28] sm:$0xff]
    %v713 = vld [vmem:[#allocation5 + $0xe30] sm:$0xff]
    %v714 = vld [vmem:[#allocation5 + $0xe38] sm:$0xff]
    %v715 = vld [vmem:[#allocation5 + $0xe40] sm:$0xff]
    %v716 = vld [vmem:[#allocation5 + $0xe48] sm:$0xff]
    %v717 = vld [vmem:[#allocation5 + $0xe50] sm:$0xff]
    %v718 = vld [vmem:[#allocation5 + $0xe58] sm:$0xff]
    %v719 = vld [vmem:[#allocation5 + $0xe60] sm:$0xff]
    %v720 = vld [vmem:[#allocation5 + $0xe68] sm:$0xff]
    %v721 = vld [vmem:[#allocation5 + $0xe70] sm:$0xff]
    %v722 = vld [vmem:[#allocation5 + $0xe78] sm:$0xff]
    %v723 = vld [vmem:[#allocation5 + $0xe80] sm:$0xff]
    %v724 = vld [vmem:[#allocation5 + $0xe88] sm:$0xff]
    %v725 = vld [vmem:[#allocation5 + $0xe90] sm:$0xff]
    %v726 = vld [vmem:[#allocation5 + $0xe98] sm:$0xff]
    %v727 = vld [vmem:[#allocation5 + $0xea0] sm:$0xff]
    %v728 = vld [vmem:[#allocation5 + $0xea8] sm:$0xff]
    %v729 = vld [vmem:[#allocation5 + $0xeb0] sm:$0xff]
    %v730 = vld [vmem:[#allocation5 + $0xeb8] sm:$0xff]
    %v731 = vld [vmem:[#allocation5 + $0xec0] sm:$0xff]
    %v732 = vld [vmem:[#allocation5 + $0xec8] sm:$0xff]
    %v733 = vld [vmem:[#allocation5 + $0xed0] sm:$0xff]
    %v734 = vld [vmem:[#allocation5 + $0xed8] sm:$0xff]
    %v735 = vld [vmem:[#allocation5 + $0xee0] sm:$0xff]
    %v736 = vld [vmem:[#allocation5 + $0xee8] sm:$0xff]
    %v737 = vld [vmem:[#allocation5 + $0xef0] sm:$0xff]
    %v738 = vld [vmem:[#allocation5 + $0xef8] sm:$0xff]
    %v739 = vld [vmem:[#allocation5 + $0xf00] sm:$0xff]
    %v740 = vld [vmem:[#allocation5 + $0xf08] sm:$0xff]
    %v741 = vld [vmem:[#allocation5 + $0xf10] sm:$0xff]
    %v742 = vld [vmem:[#allocation5 + $0xf18] sm:$0xff]
    %v743 = vld [vmem:[#allocation5 + $0xf20] sm:$0xff]
    %v744 = vld [vmem:[#allocation5 + $0xf28] sm:$0xff]
    %v745 = vld [vmem:[#allocation5 + $0xf30] sm:$0xff]
    %v746 = vld [vmem:[#allocation5 + $0xf38] sm:$0xff]
    %v747 = vld [vmem:[#allocation5 + $0xf40] sm:$0xff]
    %v748 = vld [vmem:[#allocation5 + $0xf48] sm:$0xff]
    %v749 = vld [vmem:[#allocation5 + $0xf50] sm:$0xff]
    %v750 = vld [vmem:[#allocation5 + $0xf58] sm:$0xff]
    %v751 = vld [vmem:[#allocation5 + $0xf60] sm:$0xff]
    %v752 = vld [vmem:[#allocation5 + $0xf68] sm:$0xff]
    %v753 = vld [vmem:[#allocation5 + $0xf70] sm:$0xff]
    %v754 = vld [vmem:[#allocation5 + $0xf78] sm:$0xff]
    %v755 = vld [vmem:[#allocation5 + $0xf80] sm:$0xff]
    %v756 = vld [vmem:[#allocation5 + $0xf88] sm:$0xff]
    %v757 = vld [vmem:[#allocation5 + $0xf90] sm:$0xff]
    %v758 = vld [vmem:[#allocation5 + $0xf98] sm:$0xff]
    %v759 = vld [vmem:[#allocation5 + $0xfa0] sm:$0xff]
    %v760 = vld [vmem:[#allocation5 + $0xfa8] sm:$0xff]
    %v761 = vld [vmem:[#allocation5 + $0xfb0] sm:$0xff]
    %v762 = vld [vmem:[#allocation5 + $0xfb8] sm:$0xff]
    %v763 = vld [vmem:[#allocation5 + $0xfc0] sm:$0xff]
    %v764 = vld [vmem:[#allocation5 + $0xfc8] sm:$0xff]
    %v765 = vld [vmem:[#allocation5 + $0xfd0] sm:$0xff]
    %v766 = vld [vmem:[#allocation5 + $0xfd8] sm:$0xff]
    %v767 = vld [vmem:[#allocation5 + $0xfe0] sm:$0xff]
    %v768 = vld [vmem:[#allocation5 + $0xfe8] sm:$0xff]
    %v769 = vld [vmem:[#allocation5 + $0xff0] sm:$0xff]
    %v770 = vld [vmem:[#allocation5 + $0xff8] sm:$0xff]
    %v771 = vld [vmem:[#allocation7] sm:$0xf]
    %v773 = vperm.slane %v771, 0
    %v774 = vperm.slane %v771, 1
    %v775 = vperm.slane %v771, 2
    %v776 = vperm.slane %v771, 3
    %783 = vst [vmem:[#allocation1] ss:$4 sm:$0xff] %v257
    %s784 = scalar_lea.vmem [#allocation1], 32
    %785 = vst [vmem:[%s784] ss:$4 sm:$0xff] %v258
    %v786 = vld.sshfl [vmem:[#allocation1] sm:$0xff pattern:$0x73625140]
    %v787 = vld.sshfl [vmem:[#allocation1 + $0x8] sm:$0xff pattern:$0x73625140]
    %v788 = vld.sshfl [vmem:[#allocation1 + $0x10] sm:$0xff pattern:$0x73625140]
    %v789 = vld.sshfl [vmem:[#allocation1 + $0x18] sm:$0xff pattern:$0x73625140]
    %v790 = vld.sshfl [vmem:[#allocation1 + $0x20] sm:$0xff pattern:$0x73625140]
    %v791 = vld.sshfl [vmem:[#allocation1 + $0x28] sm:$0xff pattern:$0x73625140]
    %v792 = vld.sshfl [vmem:[#allocation1 + $0x30] sm:$0xff pattern:$0x73625140]
    %v793 = vld.sshfl [vmem:[#allocation1 + $0x38] sm:$0xff pattern:$0x73625140]
    %802 = vmatpush.msra.mxu0 %v319
    %803 = vmatpush.msra.mxu0 %v315
    %804 = vmatpush.msra.mxu0 %v311
    %805 = vmatpush.msra.mxu0 %v307
    %806 = vmatpush.msra.mxu0 %v303
    %807 = vmatpush.msra.mxu0 %v299
    %808 = vmatpush.msra.mxu0 %v295
    %809 = vmatpush.msra.mxu0 %v291
    %810 = vmatpush.msra.mxu0 %v287
    %811 = vmatpush.msra.mxu0 %v283
    %812 = vmatpush.msra.mxu0 %v279
    %813 = vmatpush.msra.mxu0 %v275
    %814 = vmatpush.msra.mxu0 %v271
    %815 = vmatpush.msra.mxu0 %v267
    %816 = vmatpush.msra.mxu0 %v263
    %817 = vmatpush.msra.mxu0 %v259
    %818 = vmatmul.f32.gmra.mxu0 %v786
    %v819 = vpop.f32.mrf.mxu0
    %v820 = vadd.f32 %v773, %v819
    %821 = vdwg.mxu0
    %822 = vmatpush.msra.mxu0 %v383
    %823 = vmatpush.msra.mxu0 %v379
    %824 = vmatpush.msra.mxu0 %v375
    %825 = vmatpush.msra.mxu0 %v371
    %826 = vmatpush.msra.mxu0 %v367
    %827 = vmatpush.msra.mxu0 %v363
    %828 = vmatpush.msra.mxu0 %v359
    %829 = vmatpush.msra.mxu0 %v355
    %830 = vmatpush.msra.mxu0 %v351
    %831 = vmatpush.msra.mxu0 %v347
    %832 = vmatpush.msra.mxu0 %v343
    %833 = vmatpush.msra.mxu0 %v339
    %834 = vmatpush.msra.mxu0 %v335
    %835 = vmatpush.msra.mxu0 %v331
    %836 = vmatpush.msra.mxu0 %v327
    %837 = vmatpush.msra.mxu0 %v323
    %838 = vmatmul.f32.gmra.mxu0 %v787
    %v839 = vpop.f32.mrf.mxu0
    %v840 = vadd.f32 %v820, %v839
    %841 = vdwg.mxu0
    %842 = vmatpush.msra.mxu0 %v447
    %843 = vmatpush.msra.mxu0 %v443
    %844 = vmatpush.msra.mxu0 %v439
    %845 = vmatpush.msra.mxu0 %v435
    %846 = vmatpush.msra.mxu0 %v431
    %847 = vmatpush.msra.mxu0 %v427
    %848 = vmatpush.msra.mxu0 %v423
    %849 = vmatpush.msra.mxu0 %v419
    %850 = vmatpush.msra.mxu0 %v415
    %851 = vmatpush.msra.mxu0 %v411
    %852 = vmatpush.msra.mxu0 %v407
    %853 = vmatpush.msra.mxu0 %v403
    %854 = vmatpush.msra.mxu0 %v399
    %855 = vmatpush.msra.mxu0 %v395
    %856 = vmatpush.msra.mxu0 %v391
    %857 = vmatpush.msra.mxu0 %v387
    %858 = vmatmul.f32.gmra.mxu0 %v788
    %v859 = vpop.f32.mrf.mxu0
    %v860 = vadd.f32 %v840, %v859
    %861 = vdwg.mxu0
    %862 = vmatpush.msra.mxu0 %v511
    %863 = vmatpush.msra.mxu0 %v507
    %864 = vmatpush.msra.mxu0 %v503
    %865 = vmatpush.msra.mxu0 %v499
    %866 = vmatpush.msra.mxu0 %v495
    %867 = vmatpush.msra.mxu0 %v491
    %868 = vmatpush.msra.mxu0 %v487
    %869 = vmatpush.msra.mxu0 %v483
    %870 = vmatpush.msra.mxu0 %v479
    %871 = vmatpush.msra.mxu0 %v475
    %872 = vmatpush.msra.mxu0 %v471
    %873 = vmatpush.msra.mxu0 %v467
    %874 = vmatpush.msra.mxu0 %v463
    %875 = vmatpush.msra.mxu0 %v459
    %876 = vmatpush.msra.mxu0 %v455
    %877 = vmatpush.msra.mxu0 %v451
    %878 = vmatmul.f32.gmra.mxu0 %v789
    %v879 = vpop.f32.mrf.mxu0
    %v880 = vadd.f32 %v860, %v879
    %881 = vdwg.mxu0
    %882 = vmatpush.msra.mxu0 %v575
    %883 = vmatpush.msra.mxu0 %v571
    %884 = vmatpush.msra.mxu0 %v567
    %885 = vmatpush.msra.mxu0 %v563
    %886 = vmatpush.msra.mxu0 %v559
    %887 = vmatpush.msra.mxu0 %v555
    %888 = vmatpush.msra.mxu0 %v551
    %889 = vmatpush.msra.mxu0 %v547
    %890 = vmatpush.msra.mxu0 %v543
    %891 = vmatpush.msra.mxu0 %v539
    %892 = vmatpush.msra.mxu0 %v535
    %893 = vmatpush.msra.mxu0 %v531
    %894 = vmatpush.msra.mxu0 %v527
    %895 = vmatpush.msra.mxu0 %v523
    %896 = vmatpush.msra.mxu0 %v519
    %897 = vmatpush.msra.mxu0 %v515
    %898 = vmatmul.f32.gmra.mxu0 %v790
    %v899 = vpop.f32.mrf.mxu0
    %v900 = vadd.f32 %v880, %v899
    %901 = vdwg.mxu0
    %902 = vmatpush.msra.mxu0 %v639
    %903 = vmatpush.msra.mxu0 %v635
    %904 = vmatpush.msra.mxu0 %v631
    %905 = vmatpush.msra.mxu0 %v627
    %906 = vmatpush.msra.mxu0 %v623
    %907 = vmatpush.msra.mxu0 %v619
    %908 = vmatpush.msra.mxu0 %v615
    %909 = vmatpush.msra.mxu0 %v611
    %910 = vmatpush.msra.mxu0 %v607
    %911 = vmatpush.msra.mxu0 %v603
    %912 = vmatpush.msra.mxu0 %v599
    %913 = vmatpush.msra.mxu0 %v595
    %914 = vmatpush.msra.mxu0 %v591
    %915 = vmatpush.msra.mxu0 %v587
    %916 = vmatpush.msra.mxu0 %v583
    %917 = vmatpush.msra.mxu0 %v579
    %918 = vmatmul.f32.gmra.mxu0 %v791
    %v919 = vpop.f32.mrf.mxu0
    %v920 = vadd.f32 %v900, %v919
    %921 = vdwg.mxu0
    %922 = vmatpush.msra.mxu0 %v703
    %923 = vmatpush.msra.mxu0 %v699
    %924 = vmatpush.msra.mxu0 %v695
    %925 = vmatpush.msra.mxu0 %v691
    %926 = vmatpush.msra.mxu0 %v687
    %927 = vmatpush.msra.mxu0 %v683
    %928 = vmatpush.msra.mxu0 %v679
    %929 = vmatpush.msra.mxu0 %v675
    %930 = vmatpush.msra.mxu0 %v671
    %931 = vmatpush.msra.mxu0 %v667
    %932 = vmatpush.msra.mxu0 %v663
    %933 = vmatpush.msra.mxu0 %v659
    %934 = vmatpush.msra.mxu0 %v655
    %935 = vmatpush.msra.mxu0 %v651
    %936 = vmatpush.msra.mxu0 %v647
    %937 = vmatpush.msra.mxu0 %v643
    %938 = vmatmul.f32.gmra.mxu0 %v792
    %v939 = vpop.f32.mrf.mxu0
    %v940 = vadd.f32 %v920, %v939
    %941 = vdwg.mxu0
    %942 = vmatpush.msra.mxu0 %v767
    %943 = vmatpush.msra.mxu0 %v763
    %944 = vmatpush.msra.mxu0 %v759
    %945 = vmatpush.msra.mxu0 %v755
    %946 = vmatpush.msra.mxu0 %v751
    %947 = vmatpush.msra.mxu0 %v747
    %948 = vmatpush.msra.mxu0 %v743
    %949 = vmatpush.msra.mxu0 %v739
    %950 = vmatpush.msra.mxu0 %v735
    %951 = vmatpush.msra.mxu0 %v731
    %952 = vmatpush.msra.mxu0 %v727
    %953 = vmatpush.msra.mxu0 %v723
    %954 = vmatpush.msra.mxu0 %v719
    %955 = vmatpush.msra.mxu0 %v715
    %956 = vmatpush.msra.mxu0 %v711
    %957 = vmatpush.msra.mxu0 %v707
    %958 = vmatmul.f32.gmra.mxu0 %v793
    %v959 = vpop.f32.mrf.mxu0
    %v960 = vadd.f32 %v940, %v959
    %961 = vdwg.mxu0
    %962 = vmatpush.msra.mxu0 %v320
    %963 = vmatpush.msra.mxu0 %v316
    %964 = vmatpush.msra.mxu0 %v312
    %965 = vmatpush.msra.mxu0 %v308
    %966 = vmatpush.msra.mxu0 %v304
    %967 = vmatpush.msra.mxu0 %v300
    %968 = vmatpush.msra.mxu0 %v296
    %969 = vmatpush.msra.mxu0 %v292
    %970 = vmatpush.msra.mxu0 %v288
    %971 = vmatpush.msra.mxu0 %v284
    %972 = vmatpush.msra.mxu0 %v280
    %973 = vmatpush.msra.mxu0 %v276
    %974 = vmatpush.msra.mxu0 %v272
    %975 = vmatpush.msra.mxu0 %v268
    %976 = vmatpush.msra.mxu0 %v264
    %977 = vmatpush.msra.mxu0 %v260
    %978 = vmatmul.f32.gmra.mxu0 %v786
    %v979 = vpop.f32.mrf.mxu0
    %v980 = vadd.f32 %v774, %v979
    %981 = vdwg.mxu0
    %982 = vmatpush.msra.mxu0 %v384
    %983 = vmatpush.msra.mxu0 %v380
    %984 = vmatpush.msra.mxu0 %v376
    %985 = vmatpush.msra.mxu0 %v372
    %986 = vmatpush.msra.mxu0 %v368
    %987 = vmatpush.msra.mxu0 %v364
    %988 = vmatpush.msra.mxu0 %v360
    %989 = vmatpush.msra.mxu0 %v356
    %990 = vmatpush.msra.mxu0 %v352
    %991 = vmatpush.msra.mxu0 %v348
    %992 = vmatpush.msra.mxu0 %v344
    %993 = vmatpush.msra.mxu0 %v340
    %994 = vmatpush.msra.mxu0 %v336
    %995 = vmatpush.msra.mxu0 %v332
    %996 = vmatpush.msra.mxu0 %v328
    %997 = vmatpush.msra.mxu0 %v324
    %998 = vmatmul.f32.gmra.mxu0 %v787
    %v999 = vpop.f32.mrf.mxu0
    %v1000 = vadd.f32 %v980, %v999
    %1001 = vdwg.mxu0
    %1002 = vmatpush.msra.mxu0 %v448
    %1003 = vmatpush.msra.mxu0 %v444
    %1004 = vmatpush.msra.mxu0 %v440
    %1005 = vmatpush.msra.mxu0 %v436
    %1006 = vmatpush.msra.mxu0 %v432
    %1007 = vmatpush.msra.mxu0 %v428
    %1008 = vmatpush.msra.mxu0 %v424
    %1009 = vmatpush.msra.mxu0 %v420
    %1010 = vmatpush.msra.mxu0 %v416
    %1011 = vmatpush.msra.mxu0 %v412
    %1012 = vmatpush.msra.mxu0 %v408
    %1013 = vmatpush.msra.mxu0 %v404
    %1014 = vmatpush.msra.mxu0 %v400
    %1015 = vmatpush.msra.mxu0 %v396
    %1016 = vmatpush.msra.mxu0 %v392
    %1017 = vmatpush.msra.mxu0 %v388
    %1018 = vmatmul.f32.gmra.mxu0 %v788
    %v1019 = vpop.f32.mrf.mxu0
    %v1020 = vadd.f32 %v1000, %v1019
    %1021 = vdwg.mxu0
    %1022 = vmatpush.msra.mxu0 %v512
    %1023 = vmatpush.msra.mxu0 %v508
    %1024 = vmatpush.msra.mxu0 %v504
    %1025 = vmatpush.msra.mxu0 %v500
    %1026 = vmatpush.msra.mxu0 %v496
    %1027 = vmatpush.msra.mxu0 %v492
    %1028 = vmatpush.msra.mxu0 %v488
    %1029 = vmatpush.msra.mxu0 %v484
    %1030 = vmatpush.msra.mxu0 %v480
    %1031 = vmatpush.msra.mxu0 %v476
    %1032 = vmatpush.msra.mxu0 %v472
    %1033 = vmatpush.msra.mxu0 %v468
    %1034 = vmatpush.msra.mxu0 %v464
    %1035 = vmatpush.msra.mxu0 %v460
    %1036 = vmatpush.msra.mxu0 %v456
    %1037 = vmatpush.msra.mxu0 %v452
    %1038 = vmatmul.f32.gmra.mxu0 %v789
    %v1039 = vpop.f32.mrf.mxu0
    %v1040 = vadd.f32 %v1020, %v1039
    %1041 = vdwg.mxu0
    %1042 = vmatpush.msra.mxu0 %v576
    %1043 = vmatpush.msra.mxu0 %v572
    %1044 = vmatpush.msra.mxu0 %v568
    %1045 = vmatpush.msra.mxu0 %v564
    %1046 = vmatpush.msra.mxu0 %v560
    %1047 = vmatpush.msra.mxu0 %v556
    %1048 = vmatpush.msra.mxu0 %v552
    %1049 = vmatpush.msra.mxu0 %v548
    %1050 = vmatpush.msra.mxu0 %v544
    %1051 = vmatpush.msra.mxu0 %v540
    %1052 = vmatpush.msra.mxu0 %v536
    %1053 = vmatpush.msra.mxu0 %v532
    %1054 = vmatpush.msra.mxu0 %v528
    %1055 = vmatpush.msra.mxu0 %v524
    %1056 = vmatpush.msra.mxu0 %v520
    %1057 = vmatpush.msra.mxu0 %v516
    %1058 = vmatmul.f32.gmra.mxu0 %v790
    %v1059 = vpop.f32.mrf.mxu0
    %v1060 = vadd.f32 %v1040, %v1059
    %1061 = vdwg.mxu0
    %1062 = vmatpush.msra.mxu0 %v640
    %1063 = vmatpush.msra.mxu0 %v636
    %1064 = vmatpush.msra.mxu0 %v632
    %1065 = vmatpush.msra.mxu0 %v628
    %1066 = vmatpush.msra.mxu0 %v624
    %1067 = vmatpush.msra.mxu0 %v620
    %1068 = vmatpush.msra.mxu0 %v616
    %1069 = vmatpush.msra.mxu0 %v612
    %1070 = vmatpush.msra.mxu0 %v608
    %1071 = vmatpush.msra.mxu0 %v604
    %1072 = vmatpush.msra.mxu0 %v600
    %1073 = vmatpush.msra.mxu0 %v596
    %1074 = vmatpush.msra.mxu0 %v592
    %1075 = vmatpush.msra.mxu0 %v588
    %1076 = vmatpush.msra.mxu0 %v584
    %1077 = vmatpush.msra.mxu0 %v580
    %1078 = vmatmul.f32.gmra.mxu0 %v791
    %v1079 = vpop.f32.mrf.mxu0
    %v1080 = vadd.f32 %v1060, %v1079
    %1081 = vdwg.mxu0
    %1082 = vmatpush.msra.mxu0 %v704
    %1083 = vmatpush.msra.mxu0 %v700
    %1084 = vmatpush.msra.mxu0 %v696
    %1085 = vmatpush.msra.mxu0 %v692
    %1086 = vmatpush.msra.mxu0 %v688
    %1087 = vmatpush.msra.mxu0 %v684
    %1088 = vmatpush.msra.mxu0 %v680
    %1089 = vmatpush.msra.mxu0 %v676
    %1090 = vmatpush.msra.mxu0 %v672
    %1091 = vmatpush.msra.mxu0 %v668
    %1092 = vmatpush.msra.mxu0 %v664
    %1093 = vmatpush.msra.mxu0 %v660
    %1094 = vmatpush.msra.mxu0 %v656
    %1095 = vmatpush.msra.mxu0 %v652
    %1096 = vmatpush.msra.mxu0 %v648
    %1097 = vmatpush.msra.mxu0 %v644
    %1098 = vmatmul.f32.gmra.mxu0 %v792
    %v1099 = vpop.f32.mrf.mxu0
    %v1100 = vadd.f32 %v1080, %v1099
    %1101 = vdwg.mxu0
    %1102 = vmatpush.msra.mxu0 %v768
    %1103 = vmatpush.msra.mxu0 %v764
    %1104 = vmatpush.msra.mxu0 %v760
    %1105 = vmatpush.msra.mxu0 %v756
    %1106 = vmatpush.msra.mxu0 %v752
    %1107 = vmatpush.msra.mxu0 %v748
    %1108 = vmatpush.msra.mxu0 %v744
    %1109 = vmatpush.msra.mxu0 %v740
    %1110 = vmatpush.msra.mxu0 %v736
    %1111 = vmatpush.msra.mxu0 %v732
    %1112 = vmatpush.msra.mxu0 %v728
    %1113 = vmatpush.msra.mxu0 %v724
    %1114 = vmatpush.msra.mxu0 %v720
    %1115 = vmatpush.msra.mxu0 %v716
    %1116 = vmatpush.msra.mxu0 %v712
    %1117 = vmatpush.msra.mxu0 %v708
    %1118 = vmatmul.f32.gmra.mxu0 %v793
    %v1119 = vpop.f32.mrf.mxu0
    %v1120 = vadd.f32 %v1100, %v1119
    %1121 = vdwg.mxu0
    %1122 = vmatpush.msra.mxu0 %v321
    %1123 = vmatpush.msra.mxu0 %v317
    %1124 = vmatpush.msra.mxu0 %v313
    %1125 = vmatpush.msra.mxu0 %v309
    %1126 = vmatpush.msra.mxu0 %v305
    %1127 = vmatpush.msra.mxu0 %v301
    %1128 = vmatpush.msra.mxu0 %v297
    %1129 = vmatpush.msra.mxu0 %v293
    %1130 = vmatpush.msra.mxu0 %v289
    %1131 = vmatpush.msra.mxu0 %v285
    %1132 = vmatpush.msra.mxu0 %v281
    %1133 = vmatpush.msra.mxu0 %v277
    %1134 = vmatpush.msra.mxu0 %v273
    %1135 = vmatpush.msra.mxu0 %v269
    %1136 = vmatpush.msra.mxu0 %v265
    %1137 = vmatpush.msra.mxu0 %v261
    %1138 = vmatmul.f32.gmra.mxu0 %v786
    %v1139 = vpop.f32.mrf.mxu0
    %v1140 = vadd.f32 %v775, %v1139
    %1141 = vdwg.mxu0
    %1142 = vmatpush.msra.mxu0 %v385
    %1143 = vmatpush.msra.mxu0 %v381
    %1144 = vmatpush.msra.mxu0 %v377
    %1145 = vmatpush.msra.mxu0 %v373
    %1146 = vmatpush.msra.mxu0 %v369
    %1147 = vmatpush.msra.mxu0 %v365
    %1148 = vmatpush.msra.mxu0 %v361
    %1149 = vmatpush.msra.mxu0 %v357
    %1150 = vmatpush.msra.mxu0 %v353
    %1151 = vmatpush.msra.mxu0 %v349
    %1152 = vmatpush.msra.mxu0 %v345
    %1153 = vmatpush.msra.mxu0 %v341
    %1154 = vmatpush.msra.mxu0 %v337
    %1155 = vmatpush.msra.mxu0 %v333
    %1156 = vmatpush.msra.mxu0 %v329
    %1157 = vmatpush.msra.mxu0 %v325
    %1158 = vmatmul.f32.gmra.mxu0 %v787
    %v1159 = vpop.f32.mrf.mxu0
    %v1160 = vadd.f32 %v1140, %v1159
    %1161 = vdwg.mxu0
    %1162 = vmatpush.msra.mxu0 %v449
    %1163 = vmatpush.msra.mxu0 %v445
    %1164 = vmatpush.msra.mxu0 %v441
    %1165 = vmatpush.msra.mxu0 %v437
    %1166 = vmatpush.msra.mxu0 %v433
    %1167 = vmatpush.msra.mxu0 %v429
    %1168 = vmatpush.msra.mxu0 %v425
    %1169 = vmatpush.msra.mxu0 %v421
    %1170 = vmatpush.msra.mxu0 %v417
    %1171 = vmatpush.msra.mxu0 %v413
    %1172 = vmatpush.msra.mxu0 %v409
    %1173 = vmatpush.msra.mxu0 %v405
    %1174 = vmatpush.msra.mxu0 %v401
    %1175 = vmatpush.msra.mxu0 %v397
    %1176 = vmatpush.msra.mxu0 %v393
    %1177 = vmatpush.msra.mxu0 %v389
    %1178 = vmatmul.f32.gmra.mxu0 %v788
    %v1179 = vpop.f32.mrf.mxu0
    %v1180 = vadd.f32 %v1160, %v1179
    %1181 = vdwg.mxu0
    %1182 = vmatpush.msra.mxu0 %v513
    %1183 = vmatpush.msra.mxu0 %v509
    %1184 = vmatpush.msra.mxu0 %v505
    %1185 = vmatpush.msra.mxu0 %v501
    %1186 = vmatpush.msra.mxu0 %v497
    %1187 = vmatpush.msra.mxu0 %v493
    %1188 = vmatpush.msra.mxu0 %v489
    %1189 = vmatpush.msra.mxu0 %v485
    %1190 = vmatpush.msra.mxu0 %v481
    %1191 = vmatpush.msra.mxu0 %v477
    %1192 = vmatpush.msra.mxu0 %v473
    %1193 = vmatpush.msra.mxu0 %v469
    %1194 = vmatpush.msra.mxu0 %v465
    %1195 = vmatpush.msra.mxu0 %v461
    %1196 = vmatpush.msra.mxu0 %v457
    %1197 = vmatpush.msra.mxu0 %v453
    %1198 = vmatmul.f32.gmra.mxu0 %v789
    %v1199 = vpop.f32.mrf.mxu0
    %v1200 = vadd.f32 %v1180, %v1199
    %1201 = vdwg.mxu0
    %1202 = vmatpush.msra.mxu0 %v577
    %1203 = vmatpush.msra.mxu0 %v573
    %1204 = vmatpush.msra.mxu0 %v569
    %1205 = vmatpush.msra.mxu0 %v565
    %1206 = vmatpush.msra.mxu0 %v561
    %1207 = vmatpush.msra.mxu0 %v557
    %1208 = vmatpush.msra.mxu0 %v553
    %1209 = vmatpush.msra.mxu0 %v549
    %1210 = vmatpush.msra.mxu0 %v545
    %1211 = vmatpush.msra.mxu0 %v541
    %1212 = vmatpush.msra.mxu0 %v537
    %1213 = vmatpush.msra.mxu0 %v533
    %1214 = vmatpush.msra.mxu0 %v529
    %1215 = vmatpush.msra.mxu0 %v525
    %1216 = vmatpush.msra.mxu0 %v521
    %1217 = vmatpush.msra.mxu0 %v517
    %1218 = vmatmul.f32.gmra.mxu0 %v790
    %v1219 = vpop.f32.mrf.mxu0
    %v1220 = vadd.f32 %v1200, %v1219
    %1221 = vdwg.mxu0
    %1222 = vmatpush.msra.mxu0 %v641
    %1223 = vmatpush.msra.mxu0 %v637
    %1224 = vmatpush.msra.mxu0 %v633
    %1225 = vmatpush.msra.mxu0 %v629
    %1226 = vmatpush.msra.mxu0 %v625
    %1227 = vmatpush.msra.mxu0 %v621
    %1228 = vmatpush.msra.mxu0 %v617
    %1229 = vmatpush.msra.mxu0 %v613
    %1230 = vmatpush.msra.mxu0 %v609
    %1231 = vmatpush.msra.mxu0 %v605
    %1232 = vmatpush.msra.mxu0 %v601
    %1233 = vmatpush.msra.mxu0 %v597
    %1234 = vmatpush.msra.mxu0 %v593
    %1235 = vmatpush.msra.mxu0 %v589
    %1236 = vmatpush.msra.mxu0 %v585
    %1237 = vmatpush.msra.mxu0 %v581
    %1238 = vmatmul.f32.gmra.mxu0 %v791
    %v1239 = vpop.f32.mrf.mxu0
    %v1240 = vadd.f32 %v1220, %v1239
    %1241 = vdwg.mxu0
    %1242 = vmatpush.msra.mxu0 %v705
    %1243 = vmatpush.msra.mxu0 %v701
    %1244 = vmatpush.msra.mxu0 %v697
    %1245 = vmatpush.msra.mxu0 %v693
    %1246 = vmatpush.msra.mxu0 %v689
    %1247 = vmatpush.msra.mxu0 %v685
    %1248 = vmatpush.msra.mxu0 %v681
    %1249 = vmatpush.msra.mxu0 %v677
    %1250 = vmatpush.msra.mxu0 %v673
    %1251 = vmatpush.msra.mxu0 %v669
    %1252 = vmatpush.msra.mxu0 %v665
    %1253 = vmatpush.msra.mxu0 %v661
    %1254 = vmatpush.msra.mxu0 %v657
    %1255 = vmatpush.msra.mxu0 %v653
    %1256 = vmatpush.msra.mxu0 %v649
    %1257 = vmatpush.msra.mxu0 %v645
    %1258 = vmatmul.f32.gmra.mxu0 %v792
    %v1259 = vpop.f32.mrf.mxu0
    %v1260 = vadd.f32 %v1240, %v1259
    %1261 = vdwg.mxu0
    %1262 = vmatpush.msra.mxu0 %v769
    %1263 = vmatpush.msra.mxu0 %v765
    %1264 = vmatpush.msra.mxu0 %v761
    %1265 = vmatpush.msra.mxu0 %v757
    %1266 = vmatpush.msra.mxu0 %v753
    %1267 = vmatpush.msra.mxu0 %v749
    %1268 = vmatpush.msra.mxu0 %v745
    %1269 = vmatpush.msra.mxu0 %v741
    %1270 = vmatpush.msra.mxu0 %v737
    %1271 = vmatpush.msra.mxu0 %v733
    %1272 = vmatpush.msra.mxu0 %v729
    %1273 = vmatpush.msra.mxu0 %v725
    %1274 = vmatpush.msra.mxu0 %v721
    %1275 = vmatpush.msra.mxu0 %v717
    %1276 = vmatpush.msra.mxu0 %v713
    %1277 = vmatpush.msra.mxu0 %v709
    %1278 = vmatmul.f32.gmra.mxu0 %v793
    %v1279 = vpop.f32.mrf.mxu0
    %v1280 = vadd.f32 %v1260, %v1279
    %1281 = vdwg.mxu0
    %1282 = vmatpush.msra.mxu0 %v322
    %1283 = vmatpush.msra.mxu0 %v318
    %1284 = vmatpush.msra.mxu0 %v314
    %1285 = vmatpush.msra.mxu0 %v310
    %1286 = vmatpush.msra.mxu0 %v306
    %1287 = vmatpush.msra.mxu0 %v302
    %1288 = vmatpush.msra.mxu0 %v298
    %1289 = vmatpush.msra.mxu0 %v294
    %1290 = vmatpush.msra.mxu0 %v290
    %1291 = vmatpush.msra.mxu0 %v286
    %1292 = vmatpush.msra.mxu0 %v282
    %1293 = vmatpush.msra.mxu0 %v278
    %1294 = vmatpush.msra.mxu0 %v274
    %1295 = vmatpush.msra.mxu0 %v270
    %1296 = vmatpush.msra.mxu0 %v266
    %1297 = vmatpush.msra.mxu0 %v262
    %1298 = vmatmul.f32.gmra.mxu0 %v786
    %v1299 = vpop.f32.mrf.mxu0
    %v1300 = vadd.f32 %v776, %v1299
    %1301 = vdwg.mxu0
    %1302 = vmatpush.msra.mxu0 %v386
    %1303 = vmatpush.msra.mxu0 %v382
    %1304 = vmatpush.msra.mxu0 %v378
    %1305 = vmatpush.msra.mxu0 %v374
    %1306 = vmatpush.msra.mxu0 %v370
    %1307 = vmatpush.msra.mxu0 %v366
    %1308 = vmatpush.msra.mxu0 %v362
    %1309 = vmatpush.msra.mxu0 %v358
    %1310 = vmatpush.msra.mxu0 %v354
    %1311 = vmatpush.msra.mxu0 %v350
    %1312 = vmatpush.msra.mxu0 %v346
    %1313 = vmatpush.msra.mxu0 %v342
    %1314 = vmatpush.msra.mxu0 %v338
    %1315 = vmatpush.msra.mxu0 %v334
    %1316 = vmatpush.msra.mxu0 %v330
    %1317 = vmatpush.msra.mxu0 %v326
    %1318 = vmatmul.f32.gmra.mxu0 %v787
    %v1319 = vpop.f32.mrf.mxu0
    %v1320 = vadd.f32 %v1300, %v1319
    %1321 = vdwg.mxu0
    %1322 = vmatpush.msra.mxu0 %v450
    %1323 = vmatpush.msra.mxu0 %v446
    %1324 = vmatpush.msra.mxu0 %v442
    %1325 = vmatpush.msra.mxu0 %v438
    %1326 = vmatpush.msra.mxu0 %v434
    %1327 = vmatpush.msra.mxu0 %v430
    %1328 = vmatpush.msra.mxu0 %v426
    %1329 = vmatpush.msra.mxu0 %v422
    %1330 = vmatpush.msra.mxu0 %v418
    %1331 = vmatpush.msra.mxu0 %v414
    %1332 = vmatpush.msra.mxu0 %v410
    %1333 = vmatpush.msra.mxu0 %v406
    %1334 = vmatpush.msra.mxu0 %v402
    %1335 = vmatpush.msra.mxu0 %v398
    %1336 = vmatpush.msra.mxu0 %v394
    %1337 = vmatpush.msra.mxu0 %v390
    %1338 = vmatmul.f32.gmra.mxu0 %v788
    %v1339 = vpop.f32.mrf.mxu0
    %v1340 = vadd.f32 %v1320, %v1339
    %1341 = vdwg.mxu0
    %1342 = vmatpush.msra.mxu0 %v514
    %1343 = vmatpush.msra.mxu0 %v510
    %1344 = vmatpush.msra.mxu0 %v506
    %1345 = vmatpush.msra.mxu0 %v502
    %1346 = vmatpush.msra.mxu0 %v498
    %1347 = vmatpush.msra.mxu0 %v494
    %1348 = vmatpush.msra.mxu0 %v490
    %1349 = vmatpush.msra.mxu0 %v486
    %1350 = vmatpush.msra.mxu0 %v482
    %1351 = vmatpush.msra.mxu0 %v478
    %1352 = vmatpush.msra.mxu0 %v474
    %1353 = vmatpush.msra.mxu0 %v470
    %1354 = vmatpush.msra.mxu0 %v466
    %1355 = vmatpush.msra.mxu0 %v462
    %1356 = vmatpush.msra.mxu0 %v458
    %1357 = vmatpush.msra.mxu0 %v454
    %1358 = vmatmul.f32.gmra.mxu0 %v789
    %v1359 = vpop.f32.mrf.mxu0
    %v1360 = vadd.f32 %v1340, %v1359
    %1361 = vdwg.mxu0
    %1362 = vmatpush.msra.mxu0 %v578
    %1363 = vmatpush.msra.mxu0 %v574
    %1364 = vmatpush.msra.mxu0 %v570
    %1365 = vmatpush.msra.mxu0 %v566
    %1366 = vmatpush.msra.mxu0 %v562
    %1367 = vmatpush.msra.mxu0 %v558
    %1368 = vmatpush.msra.mxu0 %v554
    %1369 = vmatpush.msra.mxu0 %v550
    %1370 = vmatpush.msra.mxu0 %v546
    %1371 = vmatpush.msra.mxu0 %v542
    %1372 = vmatpush.msra.mxu0 %v538
    %1373 = vmatpush.msra.mxu0 %v534
    %1374 = vmatpush.msra.mxu0 %v530
    %1375 = vmatpush.msra.mxu0 %v526
    %1376 = vmatpush.msra.mxu0 %v522
    %1377 = vmatpush.msra.mxu0 %v518
    %1378 = vmatmul.f32.gmra.mxu0 %v790
    %v1379 = vpop.f32.mrf.mxu0
    %v1380 = vadd.f32 %v1360, %v1379
    %1381 = vdwg.mxu0
    %1382 = vmatpush.msra.mxu0 %v642
    %1383 = vmatpush.msra.mxu0 %v638
    %1384 = vmatpush.msra.mxu0 %v634
    %1385 = vmatpush.msra.mxu0 %v630
    %1386 = vmatpush.msra.mxu0 %v626
    %1387 = vmatpush.msra.mxu0 %v622
    %1388 = vmatpush.msra.mxu0 %v618
    %1389 = vmatpush.msra.mxu0 %v614
    %1390 = vmatpush.msra.mxu0 %v610
    %1391 = vmatpush.msra.mxu0 %v606
    %1392 = vmatpush.msra.mxu0 %v602
    %1393 = vmatpush.msra.mxu0 %v598
    %1394 = vmatpush.msra.mxu0 %v594
    %1395 = vmatpush.msra.mxu0 %v590
    %1396 = vmatpush.msra.mxu0 %v586
    %1397 = vmatpush.msra.mxu0 %v582
    %1398 = vmatmul.f32.gmra.mxu0 %v791
    %v1399 = vpop.f32.mrf.mxu0
    %v1400 = vadd.f32 %v1380, %v1399
    %1401 = vdwg.mxu0
    %1402 = vmatpush.msra.mxu0 %v706
    %1403 = vmatpush.msra.mxu0 %v702
    %1404 = vmatpush.msra.mxu0 %v698
    %1405 = vmatpush.msra.mxu0 %v694
    %1406 = vmatpush.msra.mxu0 %v690
    %1407 = vmatpush.msra.mxu0 %v686
    %1408 = vmatpush.msra.mxu0 %v682
    %1409 = vmatpush.msra.mxu0 %v678
    %1410 = vmatpush.msra.mxu0 %v674
    %1411 = vmatpush.msra.mxu0 %v670
    %1412 = vmatpush.msra.mxu0 %v666
    %1413 = vmatpush.msra.mxu0 %v662
    %1414 = vmatpush.msra.mxu0 %v658
    %1415 = vmatpush.msra.mxu0 %v654
    %1416 = vmatpush.msra.mxu0 %v650
    %1417 = vmatpush.msra.mxu0 %v646
    %1418 = vmatmul.f32.gmra.mxu0 %v792
    %v1419 = vpop.f32.mrf.mxu0
    %v1420 = vadd.f32 %v1400, %v1419
    %1421 = vdwg.mxu0
    %1422 = vmatpush.msra.mxu0 %v770
    %1423 = vmatpush.msra.mxu0 %v766
    %1424 = vmatpush.msra.mxu0 %v762
    %1425 = vmatpush.msra.mxu0 %v758
    %1426 = vmatpush.msra.mxu0 %v754
    %1427 = vmatpush.msra.mxu0 %v750
    %1428 = vmatpush.msra.mxu0 %v746
    %1429 = vmatpush.msra.mxu0 %v742
    %1430 = vmatpush.msra.mxu0 %v738
    %1431 = vmatpush.msra.mxu0 %v734
    %1432 = vmatpush.msra.mxu0 %v730
    %1433 = vmatpush.msra.mxu0 %v726
    %1434 = vmatpush.msra.mxu0 %v722
    %1435 = vmatpush.msra.mxu0 %v718
    %1436 = vmatpush.msra.mxu0 %v714
    %1437 = vmatpush.msra.mxu0 %v710
    %1438 = vmatmul.f32.gmra.mxu0 %v793
    %v1439 = vpop.f32.mrf.mxu0
    %v1440 = vadd.f32 %v1420, %v1439
    %1441 = vdwg.mxu0
    %v1442 = vmax.f32 %v960, 0.0
    %v1443 = vmax.f32 %v1120, 0.0
    %v1444 = vmax.f32 %v1280, 0.0
    %v1445 = vmax.f32 %v1440, 0.0
    %v1446 = vld [vmem:[#allocation8] sm:$0xff]
    %v1447 = vld [vmem:[#allocation8 + $0x8] sm:$0xff]
    %v1448 = vld [vmem:[#allocation8 + $0x10] sm:$0xff]
    %v1449 = vld [vmem:[#allocation8 + $0x18] sm:$0xff]
    %v1450 = vld [vmem:[#allocation8 + $0x20] sm:$0xff]
    %v1451 = vld [vmem:[#allocation8 + $0x28] sm:$0xff]
    %v1452 = vld [vmem:[#allocation8 + $0x30] sm:$0xff]
    %v1453 = vld [vmem:[#allocation8 + $0x38] sm:$0xff]
    %v1454 = vld [vmem:[#allocation8 + $0x40] sm:$0xff]
    %v1455 = vld [vmem:[#allocation8 + $0x48] sm:$0xff]
    %v1456 = vld [vmem:[#allocation8 + $0x50] sm:$0xff]
    %v1457 = vld [vmem:[#allocation8 + $0x58] sm:$0xff]
    %v1458 = vld [vmem:[#allocation8 + $0x60] sm:$0xff]
    %v1459 = vld [vmem:[#allocation8 + $0x68] sm:$0xff]
    %v1460 = vld [vmem:[#allocation8 + $0x70] sm:$0xff]
    %v1461 = vld [vmem:[#allocation8 + $0x78] sm:$0xff]
    %v1462 = vld [vmem:[#allocation8 + $0x80] sm:$0xff]
    %v1463 = vld [vmem:[#allocation8 + $0x88] sm:$0xff]
    %v1464 = vld [vmem:[#allocation8 + $0x90] sm:$0xff]
    %v1465 = vld [vmem:[#allocation8 + $0x98] sm:$0xff]
    %v1466 = vld [vmem:[#allocation8 + $0xa0] sm:$0xff]
    %v1467 = vld [vmem:[#allocation8 + $0xa8] sm:$0xff]
    %v1468 = vld [vmem:[#allocation8 + $0xb0] sm:$0xff]
    %v1469 = vld [vmem:[#allocation8 + $0xb8] sm:$0xff]
    %v1470 = vld [vmem:[#allocation8 + $0xc0] sm:$0xff]
    %v1471 = vld [vmem:[#allocation8 + $0xc8] sm:$0xff]
    %v1472 = vld [vmem:[#allocation8 + $0xd0] sm:$0xff]
    %v1473 = vld [vmem:[#allocation8 + $0xd8] sm:$0xff]
    %v1474 = vld [vmem:[#allocation8 + $0xe0] sm:$0xff]
    %v1475 = vld [vmem:[#allocation8 + $0xe8] sm:$0xff]
    %v1476 = vld [vmem:[#allocation8 + $0xf0] sm:$0xff]
    %v1477 = vld [vmem:[#allocation8 + $0xf8] sm:$0xff]
    %v1478 = vld [vmem:[#allocation8 + $0x100] sm:$0xff]
    %v1479 = vld [vmem:[#allocation8 + $0x108] sm:$0xff]
    %v1480 = vld [vmem:[#allocation8 + $0x110] sm:$0xff]
    %v1481 = vld [vmem:[#allocation8 + $0x118] sm:$0xff]
    %v1482 = vld [vmem:[#allocation8 + $0x120] sm:$0xff]
    %v1483 = vld [vmem:[#allocation8 + $0x128] sm:$0xff]
    %v1484 = vld [vmem:[#allocation8 + $0x130] sm:$0xff]
    %v1485 = vld [vmem:[#allocation8 + $0x138] sm:$0xff]
    %v1486 = vld [vmem:[#allocation8 + $0x140] sm:$0xff]
    %v1487 = vld [vmem:[#allocation8 + $0x148] sm:$0xff]
    %v1488 = vld [vmem:[#allocation8 + $0x150] sm:$0xff]
    %v1489 = vld [vmem:[#allocation8 + $0x158] sm:$0xff]
    %v1490 = vld [vmem:[#allocation8 + $0x160] sm:$0xff]
    %v1491 = vld [vmem:[#allocation8 + $0x168] sm:$0xff]
    %v1492 = vld [vmem:[#allocation8 + $0x170] sm:$0xff]
    %v1493 = vld [vmem:[#allocation8 + $0x178] sm:$0xff]
    %v1494 = vld [vmem:[#allocation8 + $0x180] sm:$0xff]
    %v1495 = vld [vmem:[#allocation8 + $0x188] sm:$0xff]
    %v1496 = vld [vmem:[#allocation8 + $0x190] sm:$0xff]
    %v1497 = vld [vmem:[#allocation8 + $0x198] sm:$0xff]
    %v1498 = vld [vmem:[#allocation8 + $0x1a0] sm:$0xff]
    %v1499 = vld [vmem:[#allocation8 + $0x1a8] sm:$0xff]
    %v1500 = vld [vmem:[#allocation8 + $0x1b0] sm:$0xff]
    %v1501 = vld [vmem:[#allocation8 + $0x1b8] sm:$0xff]
    %v1502 = vld [vmem:[#allocation8 + $0x1c0] sm:$0xff]
    %v1503 = vld [vmem:[#allocation8 + $0x1c8] sm:$0xff]
    %v1504 = vld [vmem:[#allocation8 + $0x1d0] sm:$0xff]
    %v1505 = vld [vmem:[#allocation8 + $0x1d8] sm:$0xff]
    %v1506 = vld [vmem:[#allocation8 + $0x1e0] sm:$0xff]
    %v1507 = vld [vmem:[#allocation8 + $0x1e8] sm:$0xff]
    %v1508 = vld [vmem:[#allocation8 + $0x1f0] sm:$0xff]
    %v1509 = vld [vmem:[#allocation8 + $0x1f8] sm:$0xff]
    %v1510 = vld [vmem:[#allocation8 + $0x200] sm:$0xff]
    %v1511 = vld [vmem:[#allocation8 + $0x208] sm:$0xff]
    %v1512 = vld [vmem:[#allocation8 + $0x210] sm:$0xff]
    %v1513 = vld [vmem:[#allocation8 + $0x218] sm:$0xff]
    %v1514 = vld [vmem:[#allocation8 + $0x220] sm:$0xff]
    %v1515 = vld [vmem:[#allocation8 + $0x228] sm:$0xff]
    %v1516 = vld [vmem:[#allocation8 + $0x230] sm:$0xff]
    %v1517 = vld [vmem:[#allocation8 + $0x238] sm:$0xff]
    %v1518 = vld [vmem:[#allocation8 + $0x240] sm:$0xff]
    %v1519 = vld [vmem:[#allocation8 + $0x248] sm:$0xff]
    %v1520 = vld [vmem:[#allocation8 + $0x250] sm:$0xff]
    %v1521 = vld [vmem:[#allocation8 + $0x258] sm:$0xff]
    %v1522 = vld [vmem:[#allocation8 + $0x260] sm:$0xff]
    %v1523 = vld [vmem:[#allocation8 + $0x268] sm:$0xff]
    %v1524 = vld [vmem:[#allocation8 + $0x270] sm:$0xff]
    %v1525 = vld [vmem:[#allocation8 + $0x278] sm:$0xff]
    %v1526 = vld [vmem:[#allocation8 + $0x280] sm:$0xff]
    %v1527 = vld [vmem:[#allocation8 + $0x288] sm:$0xff]
    %v1528 = vld [vmem:[#allocation8 + $0x290] sm:$0xff]
    %v1529 = vld [vmem:[#allocation8 + $0x298] sm:$0xff]
    %v1530 = vld [vmem:[#allocation8 + $0x2a0] sm:$0xff]
    %v1531 = vld [vmem:[#allocation8 + $0x2a8] sm:$0xff]
    %v1532 = vld [vmem:[#allocation8 + $0x2b0] sm:$0xff]
    %v1533 = vld [vmem:[#allocation8 + $0x2b8] sm:$0xff]
    %v1534 = vld [vmem:[#allocation8 + $0x2c0] sm:$0xff]
    %v1535 = vld [vmem:[#allocation8 + $0x2c8] sm:$0xff]
    %v1536 = vld [vmem:[#allocation8 + $0x2d0] sm:$0xff]
    %v1537 = vld [vmem:[#allocation8 + $0x2d8] sm:$0xff]
    %v1538 = vld [vmem:[#allocation8 + $0x2e0] sm:$0xff]
    %v1539 = vld [vmem:[#allocation8 + $0x2e8] sm:$0xff]
    %v1540 = vld [vmem:[#allocation8 + $0x2f0] sm:$0xff]
    %v1541 = vld [vmem:[#allocation8 + $0x2f8] sm:$0xff]
    %v1542 = vld [vmem:[#allocation8 + $0x300] sm:$0xff]
    %v1543 = vld [vmem:[#allocation8 + $0x308] sm:$0xff]
    %v1544 = vld [vmem:[#allocation8 + $0x310] sm:$0xff]
    %v1545 = vld [vmem:[#allocation8 + $0x318] sm:$0xff]
    %v1546 = vld [vmem:[#allocation8 + $0x320] sm:$0xff]
    %v1547 = vld [vmem:[#allocation8 + $0x328] sm:$0xff]
    %v1548 = vld [vmem:[#allocation8 + $0x330] sm:$0xff]
    %v1549 = vld [vmem:[#allocation8 + $0x338] sm:$0xff]
    %v1550 = vld [vmem:[#allocation8 + $0x340] sm:$0xff]
    %v1551 = vld [vmem:[#allocation8 + $0x348] sm:$0xff]
    %v1552 = vld [vmem:[#allocation8 + $0x350] sm:$0xff]
    %v1553 = vld [vmem:[#allocation8 + $0x358] sm:$0xff]
    %v1554 = vld [vmem:[#allocation8 + $0x360] sm:$0xff]
    %v1555 = vld [vmem:[#allocation8 + $0x368] sm:$0xff]
    %v1556 = vld [vmem:[#allocation8 + $0x370] sm:$0xff]
    %v1557 = vld [vmem:[#allocation8 + $0x378] sm:$0xff]
    %v1558 = vld [vmem:[#allocation8 + $0x380] sm:$0xff]
    %v1559 = vld [vmem:[#allocation8 + $0x388] sm:$0xff]
    %v1560 = vld [vmem:[#allocation8 + $0x390] sm:$0xff]
    %v1561 = vld [vmem:[#allocation8 + $0x398] sm:$0xff]
    %v1562 = vld [vmem:[#allocation8 + $0x3a0] sm:$0xff]
    %v1563 = vld [vmem:[#allocation8 + $0x3a8] sm:$0xff]
    %v1564 = vld [vmem:[#allocation8 + $0x3b0] sm:$0xff]
    %v1565 = vld [vmem:[#allocation8 + $0x3b8] sm:$0xff]
    %v1566 = vld [vmem:[#allocation8 + $0x3c0] sm:$0xff]
    %v1567 = vld [vmem:[#allocation8 + $0x3c8] sm:$0xff]
    %v1568 = vld [vmem:[#allocation8 + $0x3d0] sm:$0xff]
    %v1569 = vld [vmem:[#allocation8 + $0x3d8] sm:$0xff]
    %v1570 = vld [vmem:[#allocation8 + $0x3e0] sm:$0xff]
    %v1571 = vld [vmem:[#allocation8 + $0x3e8] sm:$0xff]
    %v1572 = vld [vmem:[#allocation8 + $0x3f0] sm:$0xff]
    %v1573 = vld [vmem:[#allocation8 + $0x3f8] sm:$0xff]
    %v1574 = vld [vmem:[#allocation10] sm:$0x3]
    %v1576 = vperm.slane %v1574, 0
    %v1577 = vperm.slane %v1574, 1
    %1580 = vmatpush.msra.mxu0 %v1476
    %1581 = vmatpush.msra.mxu0 %v1474
    %1582 = vmatpush.msra.mxu0 %v1472
    %1583 = vmatpush.msra.mxu0 %v1470
    %1584 = vmatpush.msra.mxu0 %v1468
    %1585 = vmatpush.msra.mxu0 %v1466
    %1586 = vmatpush.msra.mxu0 %v1464
    %1587 = vmatpush.msra.mxu0 %v1462
    %1588 = vmatpush.msra.mxu0 %v1460
    %1589 = vmatpush.msra.mxu0 %v1458
    %1590 = vmatpush.msra.mxu0 %v1456
    %1591 = vmatpush.msra.mxu0 %v1454
    %1592 = vmatpush.msra.mxu0 %v1452
    %1593 = vmatpush.msra.mxu0 %v1450
    %1594 = vmatpush.msra.mxu0 %v1448
    %1595 = vmatpush.msra.mxu0 %v1446
    %1596 = vmatmul.f32.gmra.mxu0 %v1442
    %v1597 = vpop.f32.mrf.mxu0
    %v1598 = vadd.f32 %v1576, %v1597
    %1599 = vdwg.mxu0
    %1600 = vmatpush.msra.mxu0 %v1508
    %1601 = vmatpush.msra.mxu0 %v1506
    %1602 = vmatpush.msra.mxu0 %v1504
    %1603 = vmatpush.msra.mxu0 %v1502
    %1604 = vmatpush.msra.mxu0 %v1500
    %1605 = vmatpush.msra.mxu0 %v1498
    %1606 = vmatpush.msra.mxu0 %v1496
    %1607 = vmatpush.msra.mxu0 %v1494
    %1608 = vmatpush.msra.mxu0 %v1492
    %1609 = vmatpush.msra.mxu0 %v1490
    %1610 = vmatpush.msra.mxu0 %v1488
    %1611 = vmatpush.msra.mxu0 %v1486
    %1612 = vmatpush.msra.mxu0 %v1484
    %1613 = vmatpush.msra.mxu0 %v1482
    %1614 = vmatpush.msra.mxu0 %v1480
    %1615 = vmatpush.msra.mxu0 %v1478
    %1616 = vmatmul.f32.gmra.mxu0 %v1443
    %v1617 = vpop.f32.mrf.mxu0
    %v1618 = vadd.f32 %v1598, %v1617
    %1619 = vdwg.mxu0
    %1620 = vmatpush.msra.mxu0 %v1540
    %1621 = vmatpush.msra.mxu0 %v1538
    %1622 = vmatpush.msra.mxu0 %v1536
    %1623 = vmatpush.msra.mxu0 %v1534
    %1624 = vmatpush.msra.mxu0 %v1532
    %1625 = vmatpush.msra.mxu0 %v1530
    %1626 = vmatpush.msra.mxu0 %v1528
    %1627 = vmatpush.msra.mxu0 %v1526
    %1628 = vmatpush.msra.mxu0 %v1524
    %1629 = vmatpush.msra.mxu0 %v1522
    %1630 = vmatpush.msra.mxu0 %v1520
    %1631 = vmatpush.msra.mxu0 %v1518
    %1632 = vmatpush.msra.mxu0 %v1516
    %1633 = vmatpush.msra.mxu0 %v1514
    %1634 = vmatpush.msra.mxu0 %v1512
    %1635 = vmatpush.msra.mxu0 %v1510
    %1636 = vmatmul.f32.gmra.mxu0 %v1444
    %v1637 = vpop.f32.mrf.mxu0
    %v1638 = vadd.f32 %v1618, %v1637
    %1639 = vdwg.mxu0
    %1640 = vmatpush.msra.mxu0 %v1572
    %1641 = vmatpush.msra.mxu0 %v1570
    %1642 = vmatpush.msra.mxu0 %v1568
    %1643 = vmatpush.msra.mxu0 %v1566
    %1644 = vmatpush.msra.mxu0 %v1564
    %1645 = vmatpush.msra.mxu0 %v1562
    %1646 = vmatpush.msra.mxu0 %v1560
    %1647 = vmatpush.msra.mxu0 %v1558
    %1648 = vmatpush.msra.mxu0 %v1556
    %1649 = vmatpush.msra.mxu0 %v1554
    %1650 = vmatpush.msra.mxu0 %v1552
    %1651 = vmatpush.msra.mxu0 %v1550
    %1652 = vmatpush.msra.mxu0 %v1548
    %1653 = vmatpush.msra.mxu0 %v1546
    %1654 = vmatpush.msra.mxu0 %v1544
    %1655 = vmatpush.msra.mxu0 %v1542
    %1656 = vmatmul.f32.gmra.mxu0 %v1445
    %v1657 = vpop.f32.mrf.mxu0
    %v1658 = vadd.f32 %v1638, %v1657
    %1659 = vdwg.mxu0
    %1660 = vmatpush.msra.mxu0 %v1477
    %1661 = vmatpush.msra.mxu0 %v1475
    %1662 = vmatpush.msra.mxu0 %v1473
    %1663 = vmatpush.msra.mxu0 %v1471
    %1664 = vmatpush.msra.mxu0 %v1469
    %1665 = vmatpush.msra.mxu0 %v1467
    %1666 = vmatpush.msra.mxu0 %v1465
    %1667 = vmatpush.msra.mxu0 %v1463
    %1668 = vmatpush.msra.mxu0 %v1461
    %1669 = vmatpush.msra.mxu0 %v1459
    %1670 = vmatpush.msra.mxu0 %v1457
    %1671 = vmatpush.msra.mxu0 %v1455
    %1672 = vmatpush.msra.mxu0 %v1453
    %1673 = vmatpush.msra.mxu0 %v1451
    %1674 = vmatpush.msra.mxu0 %v1449
    %1675 = vmatpush.msra.mxu0 %v1447
    %1676 = vmatmul.f32.gmra.mxu0 %v1442
    %v1677 = vpop.f32.mrf.mxu0
    %v1678 = vadd.f32 %v1577, %v1677
    %1679 = vdwg.mxu0
    %1680 = vmatpush.msra.mxu0 %v1509
    %1681 = vmatpush.msra.mxu0 %v1507
    %1682 = vmatpush.msra.mxu0 %v1505
    %1683 = vmatpush.msra.mxu0 %v1503
    %1684 = vmatpush.msra.mxu0 %v1501
    %1685 = vmatpush.msra.mxu0 %v1499
    %1686 = vmatpush.msra.mxu0 %v1497
    %1687 = vmatpush.msra.mxu0 %v1495
    %1688 = vmatpush.msra.mxu0 %v1493
    %1689 = vmatpush.msra.mxu0 %v1491
    %1690 = vmatpush.msra.mxu0 %v1489
    %1691 = vmatpush.msra.mxu0 %v1487
    %1692 = vmatpush.msra.mxu0 %v1485
    %1693 = vmatpush.msra.mxu0 %v1483
    %1694 = vmatpush.msra.mxu0 %v1481
    %1695 = vmatpush.msra.mxu0 %v1479
    %1696 = vmatmul.f32.gmra.mxu0 %v1443
    %v1697 = vpop.f32.mrf.mxu0
    %v1698 = vadd.f32 %v1678, %v1697
    %1699 = vdwg.mxu0
    %1700 = vmatpush.msra.mxu0 %v1541
    %1701 = vmatpush.msra.mxu0 %v1539
    %1702 = vmatpush.msra.mxu0 %v1537
    %1703 = vmatpush.msra.mxu0 %v1535
    %1704 = vmatpush.msra.mxu0 %v1533
    %1705 = vmatpush.msra.mxu0 %v1531
    %1706 = vmatpush.msra.mxu0 %v1529
    %1707 = vmatpush.msra.mxu0 %v1527
    %1708 = vmatpush.msra.mxu0 %v1525
    %1709 = vmatpush.msra.mxu0 %v1523
    %1710 = vmatpush.msra.mxu0 %v1521
    %1711 = vmatpush.msra.mxu0 %v1519
    %1712 = vmatpush.msra.mxu0 %v1517
    %1713 = vmatpush.msra.mxu0 %v1515
    %1714 = vmatpush.msra.mxu0 %v1513
    %1715 = vmatpush.msra.mxu0 %v1511
    %1716 = vmatmul.f32.gmra.mxu0 %v1444
    %v1717 = vpop.f32.mrf.mxu0
    %v1718 = vadd.f32 %v1698, %v1717
    %1719 = vdwg.mxu0
    %1720 = vmatpush.msra.mxu0 %v1573
    %1721 = vmatpush.msra.mxu0 %v1571
    %1722 = vmatpush.msra.mxu0 %v1569
    %1723 = vmatpush.msra.mxu0 %v1567
    %1724 = vmatpush.msra.mxu0 %v1565
    %1725 = vmatpush.msra.mxu0 %v1563
    %1726 = vmatpush.msra.mxu0 %v1561
    %1727 = vmatpush.msra.mxu0 %v1559
    %1728 = vmatpush.msra.mxu0 %v1557
    %1729 = vmatpush.msra.mxu0 %v1555
    %1730 = vmatpush.msra.mxu0 %v1553
    %1731 = vmatpush.msra.mxu0 %v1551
    %1732 = vmatpush.msra.mxu0 %v1549
    %1733 = vmatpush.msra.mxu0 %v1547
    %1734 = vmatpush.msra.mxu0 %v1545
    %1735 = vmatpush.msra.mxu0 %v1543
    %1736 = vmatmul.f32.gmra.mxu0 %v1445
    %v1737 = vpop.f32.mrf.mxu0
    %v1738 = vadd.f32 %v1718, %v1737
    %1739 = vdwg.mxu0
    %v1740 = vmax.f32 %v1658, 0.0
    %v1741 = vmax.f32 %v1738, 0.0
    %v1742 = vld [vmem:[#allocation11] sm:$0xff]
    %v1743 = vld [vmem:[#allocation11 + $0x8] sm:$0xff]
    %v1744 = vld [vmem:[#allocation11 + $0x10] sm:$0xff]
    %v1745 = vld [vmem:[#allocation11 + $0x18] sm:$0xff]
    %v1746 = vld [vmem:[#allocation11 + $0x20] sm:$0xff]
    %v1747 = vld [vmem:[#allocation11 + $0x28] sm:$0xff]
    %v1748 = vld [vmem:[#allocation11 + $0x30] sm:$0xff]
    %v1749 = vld [vmem:[#allocation11 + $0x38] sm:$0xff]
    %v1750 = vld [vmem:[#allocation11 + $0x40] sm:$0xff]
    %v1751 = vld [vmem:[#allocation11 + $0x48] sm:$0xff]
    %v1752 = vld [vmem:[#allocation11 + $0x50] sm:$0xff]
    %v1753 = vld [vmem:[#allocation11 + $0x58] sm:$0xff]
    %v1754 = vld [vmem:[#allocation11 + $0x60] sm:$0xff]
    %v1755 = vld [vmem:[#allocation11 + $0x68] sm:$0xff]
    %v1756 = vld [vmem:[#allocation11 + $0x70] sm:$0xff]
    %v1757 = vld [vmem:[#allocation11 + $0x78] sm:$0xff]
    %v1758 = vld [vmem:[#allocation11 + $0x80] sm:$0xff]
    %v1759 = vld [vmem:[#allocation11 + $0x88] sm:$0xff]
    %v1760 = vld [vmem:[#allocation11 + $0x90] sm:$0xff]
    %v1761 = vld [vmem:[#allocation11 + $0x98] sm:$0xff]
    %v1762 = vld [vmem:[#allocation11 + $0xa0] sm:$0xff]
    %v1763 = vld [vmem:[#allocation11 + $0xa8] sm:$0xff]
    %v1764 = vld [vmem:[#allocation11 + $0xb0] sm:$0xff]
    %v1765 = vld [vmem:[#allocation11 + $0xb8] sm:$0xff]
    %v1766 = vld [vmem:[#allocation11 + $0xc0] sm:$0xff]
    %v1767 = vld [vmem:[#allocation11 + $0xc8] sm:$0xff]
    %v1768 = vld [vmem:[#allocation11 + $0xd0] sm:$0xff]
    %v1769 = vld [vmem:[#allocation11 + $0xd8] sm:$0xff]
    %v1770 = vld [vmem:[#allocation11 + $0xe0] sm:$0xff]
    %v1771 = vld [vmem:[#allocation11 + $0xe8] sm:$0xff]
    %v1772 = vld [vmem:[#allocation11 + $0xf0] sm:$0xff]
    %v1773 = vld [vmem:[#allocation11 + $0xf8] sm:$0xff]
    %v1774 = vld [vmem:[#allocation13] sm:$0x1]
    %v1776 = vperm.slane %v1774, 0
    %1778 = vmatpush.msra.mxu0 %v1757
    %1779 = vmatpush.msra.mxu0 %v1756
    %1780 = vmatpush.msra.mxu0 %v1755
    %1781 = vmatpush.msra.mxu0 %v1754
    %1782 = vmatpush.msra.mxu0 %v1753
    %1783 = vmatpush.msra.mxu0 %v1752
    %1784 = vmatpush.msra.mxu0 %v1751
    %1785 = vmatpush.msra.mxu0 %v1750
    %1786 = vmatpush.msra.mxu0 %v1749
    %1787 = vmatpush.msra.mxu0 %v1748
    %1788 = vmatpush.msra.mxu0 %v1747
    %1789 = vmatpush.msra.mxu0 %v1746
    %1790 = vmatpush.msra.mxu0 %v1745
    %1791 = vmatpush.msra.mxu0 %v1744
    %1792 = vmatpush.msra.mxu0 %v1743
    %1793 = vmatpush.msra.mxu0 %v1742
    %1794 = vmatmul.f32.gmra.mxu0 %v1740
    %v1795 = vpop.f32.mrf.mxu0
    %v1796 = vadd.f32 %v1776, %v1795
    %1797 = vdwg.mxu0
    %1798 = vmatpush.msra.mxu0 %v1773
    %1799 = vmatpush.msra.mxu0 %v1772
    %1800 = vmatpush.msra.mxu0 %v1771
    %1801 = vmatpush.msra.mxu0 %v1770
    %1802 = vmatpush.msra.mxu0 %v1769
    %1803 = vmatpush.msra.mxu0 %v1768
    %1804 = vmatpush.msra.mxu0 %v1767
    %1805 = vmatpush.msra.mxu0 %v1766
    %1806 = vmatpush.msra.mxu0 %v1765
    %1807 = vmatpush.msra.mxu0 %v1764
    %1808 = vmatpush.msra.mxu0 %v1763
    %1809 = vmatpush.msra.mxu0 %v1762
    %1810 = vmatpush.msra.mxu0 %v1761
    %1811 = vmatpush.msra.mxu0 %v1760
    %1812 = vmatpush.msra.mxu0 %v1759
    %1813 = vmatpush.msra.mxu0 %v1758
    %1814 = vmatmul.f32.gmra.mxu0 %v1741
    %v1815 = vpop.f32.mrf.mxu0
    %v1816 = vadd.f32 %v1796, %v1815
    %1817 = vdwg.mxu0
    %v1818 = vmax.f32 %v1816, 0.0
    %v1819 = vld [vmem:[#allocation2] sm:$0x3]
    %v1820 = vld [vmem:[#allocation14] sm:$0xff]
    %v1821 = vld [vmem:[#allocation16] sm:$0x1]
    %v1823 = vperm.slane %v1821, 0
    %vm1825 = vcmask 64512
    %v1827 = vsel %vm1825, %v1819, 0
    %1829 = vmatpush.msra.mxu0 0.0
    %1830 = vmatpush.msra.mxu0 0.0
    %1831 = vmatpush.msra.mxu0 0.0
    %1832 = vmatpush.msra.mxu0 0.0
    %1833 = vmatpush.msra.mxu0 0.0
    %1834 = vmatpush.msra.mxu0 0.0
    %1835 = vmatpush.msra.mxu0 0.0
    %1836 = vmatpush.msra.mxu0 0.0
    %1837 = vmatpush.msra.mxu0 0.0
    %1838 = vmatpush.msra.mxu0 0.0
    %1839 = vmatpush.msra.mxu0 0.0
    %1840 = vmatpush.msra.mxu0 0.0
    %1841 = vmatpush.msra.mxu0 0.0
    %1842 = vmatpush.msra.mxu0 0.0
    %1843 = vmatpush.msra.mxu0 0.0
    %1844 = vmatpush.msra.mxu0 %v1820
    %1845 = vmatmul.f32.gmra.mxu0 %v1827
    %v1846 = vpop.f32.mrf.mxu0
    %v1847 = vadd.f32 %v1823, %v1846
    %1848 = vdwg.mxu0
    %v1849 = vmax.f32 %v1847, 0.0
    %v1850 = vld [vmem:[#allocation17] sm:$0xff]
    %v1851 = vld [vmem:[#allocation17 + $0x8] sm:$0xff]
    %v1852 = vld [vmem:[#allocation17 + $0x10] sm:$0xff]
    %v1853 = vld [vmem:[#allocation17 + $0x18] sm:$0xff]
    %v1854 = vld [vmem:[#allocation19] sm:$0x1]
    %v1856 = vperm.slane %v1854, 0
    %vm1858 = vcmask 261120
    %v1860 = vsel %vm1858, %v1849, 0
    %1862 = vmatpush.msra.mxu0 0.0
    %1863 = vmatpush.msra.mxu0 0.0
    %1864 = vmatpush.msra.mxu0 0.0
    %1865 = vmatpush.msra.mxu0 0.0
    %1866 = vmatpush.msra.mxu0 0.0
    %1867 = vmatpush.msra.mxu0 0.0
    %1868 = vmatpush.msra.mxu0 0.0
    %1869 = vmatpush.msra.mxu0 0.0
    %1870 = vmatpush.msra.mxu0 0.0
    %1871 = vmatpush.msra.mxu0 0.0
    %1872 = vmatpush.msra.mxu0 0.0
    %1873 = vmatpush.msra.mxu0 0.0
    %1874 = vmatpush.msra.mxu0 %v1853
    %1875 = vmatpush.msra.mxu0 %v1852
    %1876 = vmatpush.msra.mxu0 %v1851
    %1877 = vmatpush.msra.mxu0 %v1850
    %1878 = vmatmul.f32.gmra.mxu0 %v1860
    %v1879 = vpop.f32.mrf.mxu0
    %v1880 = vadd.f32 %v1856, %v1879
    %1881 = vdwg.mxu0
    %v1882 = vmax.f32 %v1880, 0.0
    %v1883 = vld [vmem:[#allocation20] sm:$0xff]
    %v1884 = vld [vmem:[#allocation20 + $0x8] sm:$0xff]
    %v1885 = vld [vmem:[#allocation20 + $0x10] sm:$0xff]
    %v1886 = vld [vmem:[#allocation20 + $0x18] sm:$0xff]
    %v1887 = vld [vmem:[#allocation20 + $0x20] sm:$0xff]
    %v1888 = vld [vmem:[#allocation20 + $0x28] sm:$0xff]
    %v1889 = vld [vmem:[#allocation20 + $0x30] sm:$0xff]
    %v1890 = vld [vmem:[#allocation20 + $0x38] sm:$0xff]
    %v1891 = vld [vmem:[#allocation20 + $0x40] sm:$0xff]
    %v1892 = vld [vmem:[#allocation20 + $0x48] sm:$0xff]
    %v1893 = vld [vmem:[#allocation20 + $0x50] sm:$0xff]
    %v1894 = vld [vmem:[#allocation20 + $0x58] sm:$0xff]
    %v1895 = vld [vmem:[#allocation20 + $0x60] sm:$0xff]
    %v1896 = vld [vmem:[#allocation20 + $0x68] sm:$0xff]
    %v1897 = vld [vmem:[#allocation20 + $0x70] sm:$0xff]
    %v1898 = vld [vmem:[#allocation20 + $0x78] sm:$0xff]
    %v1899 = vld [vmem:[#allocation20 + $0x80] sm:$0xff]
    %v1900 = vld [vmem:[#allocation20 + $0x88] sm:$0xff]
    %v1901 = vld [vmem:[#allocation20 + $0x90] sm:$0xff]
    %v1902 = vld [vmem:[#allocation20 + $0x98] sm:$0xff]
    %v1903 = vld [vmem:[#allocation20 + $0xa0] sm:$0xff]
    %v1904 = vld [vmem:[#allocation20 + $0xa8] sm:$0xff]
    %v1905 = vld [vmem:[#allocation20 + $0xb0] sm:$0xff]
    %v1906 = vld [vmem:[#allocation20 + $0xb8] sm:$0xff]
    %v1907 = vld [vmem:[#allocation20 + $0xc0] sm:$0xff]
    %v1908 = vld [vmem:[#allocation20 + $0xc8] sm:$0xff]
    %v1909 = vld [vmem:[#allocation20 + $0xd0] sm:$0xff]
    %v1910 = vld [vmem:[#allocation20 + $0xd8] sm:$0xff]
    %v1911 = vld [vmem:[#allocation20 + $0xe0] sm:$0xff]
    %v1912 = vld [vmem:[#allocation20 + $0xe8] sm:$0xff]
    %v1913 = vld [vmem:[#allocation20 + $0xf0] sm:$0xff]
    %v1914 = vld [vmem:[#allocation20 + $0xf8] sm:$0xff]
    %v1915 = vld [vmem:[#allocation20 + $0x100] sm:$0xff]
    %v1916 = vld [vmem:[#allocation20 + $0x108] sm:$0xff]
    %v1917 = vld [vmem:[#allocation20 + $0x110] sm:$0xff]
    %v1918 = vld [vmem:[#allocation20 + $0x118] sm:$0xff]
    %v1919 = vld [vmem:[#allocation20 + $0x120] sm:$0xff]
    %v1920 = vld [vmem:[#allocation20 + $0x128] sm:$0xff]
    %v1921 = vld [vmem:[#allocation20 + $0x130] sm:$0xff]
    %v1922 = vld [vmem:[#allocation20 + $0x138] sm:$0xff]
    %v1923 = vld [vmem:[#allocation20 + $0x140] sm:$0xff]
    %v1924 = vld [vmem:[#allocation20 + $0x148] sm:$0xff]
    %v1925 = vld [vmem:[#allocation20 + $0x150] sm:$0xff]
    %v1926 = vld [vmem:[#allocation20 + $0x158] sm:$0xff]
    %v1927 = vld [vmem:[#allocation20 + $0x160] sm:$0xff]
    %v1928 = vld [vmem:[#allocation20 + $0x168] sm:$0xff]
    %v1929 = vld [vmem:[#allocation20 + $0x170] sm:$0xff]
    %v1930 = vld [vmem:[#allocation20 + $0x178] sm:$0xff]
    %v1931 = vld [vmem:[#allocation20 + $0x180] sm:$0xff]
    %v1932 = vld [vmem:[#allocation20 + $0x188] sm:$0xff]
    %v1933 = vld [vmem:[#allocation20 + $0x190] sm:$0xff]
    %v1934 = vld [vmem:[#allocation20 + $0x198] sm:$0xff]
    %v1935 = vld [vmem:[#allocation20 + $0x1a0] sm:$0xff]
    %v1936 = vld [vmem:[#allocation20 + $0x1a8] sm:$0xff]
    %v1937 = vld [vmem:[#allocation20 + $0x1b0] sm:$0xff]
    %v1938 = vld [vmem:[#allocation20 + $0x1b8] sm:$0xff]
    %v1939 = vld [vmem:[#allocation20 + $0x1c0] sm:$0xff]
    %v1940 = vld [vmem:[#allocation20 + $0x1c8] sm:$0xff]
    %v1941 = vld [vmem:[#allocation20 + $0x1d0] sm:$0xff]
    %v1942 = vld [vmem:[#allocation20 + $0x1d8] sm:$0xff]
    %v1943 = vld [vmem:[#allocation20 + $0x1e0] sm:$0xff]
    %v1944 = vld [vmem:[#allocation20 + $0x1e8] sm:$0xff]
    %v1945 = vld [vmem:[#allocation20 + $0x1f0] sm:$0xff]
    %v1946 = vld [vmem:[#allocation20 + $0x1f8] sm:$0xff]
    %v1947 = vld [vmem:[#allocation20 + $0x200] sm:$0xff]
    %v1948 = vld [vmem:[#allocation20 + $0x208] sm:$0xff]
    %v1949 = vld [vmem:[#allocation20 + $0x210] sm:$0xff]
    %v1950 = vld [vmem:[#allocation20 + $0x218] sm:$0xff]
    %v1951 = vld [vmem:[#allocation20 + $0x220] sm:$0xff]
    %v1952 = vld [vmem:[#allocation20 + $0x228] sm:$0xff]
    %v1953 = vld [vmem:[#allocation20 + $0x230] sm:$0xff]
    %v1954 = vld [vmem:[#allocation20 + $0x238] sm:$0xff]
    %v1955 = vld [vmem:[#allocation20 + $0x240] sm:$0xff]
    %v1956 = vld [vmem:[#allocation20 + $0x248] sm:$0xff]
    %v1957 = vld [vmem:[#allocation20 + $0x250] sm:$0xff]
    %v1958 = vld [vmem:[#allocation20 + $0x258] sm:$0xff]
    %v1959 = vld [vmem:[#allocation20 + $0x260] sm:$0xff]
    %v1960 = vld [vmem:[#allocation20 + $0x268] sm:$0xff]
    %v1961 = vld [vmem:[#allocation20 + $0x270] sm:$0xff]
    %v1962 = vld [vmem:[#allocation20 + $0x278] sm:$0xff]
    %v1963 = vld [vmem:[#allocation22] sm:$0xff]
    %v1964 = vld [vmem:[#allocation22 + $0x8] sm:$0x3]
    %v1967 = vperm.slane %v1963, 0
    %v1968 = vperm.slane %v1963, 1
    %v1969 = vperm.slane %v1963, 2
    %v1970 = vperm.slane %v1963, 3
    %v1971 = vperm.slane %v1963, 4
    %v1972 = vperm.slane %v1963, 5
    %v1973 = vperm.slane %v1963, 6
    %v1974 = vperm.slane %v1963, 7
    %v1975 = vperm.slane %v1964, 0
    %v1976 = vperm.slane %v1964, 1
    %vm1987 = vcmask 523264
    %v1989 = vsel %vm1987, %v1882, 0
    %1991 = vmatpush.msra.mxu0 0.0
    %1992 = vmatpush.msra.mxu0 0.0
    %1993 = vmatpush.msra.mxu0 0.0
    %1994 = vmatpush.msra.mxu0 0.0
    %1995 = vmatpush.msra.mxu0 0.0
    %1996 = vmatpush.msra.mxu0 0.0
    %1997 = vmatpush.msra.mxu0 0.0
    %1998 = vmatpush.msra.mxu0 0.0
    %1999 = vmatpush.msra.mxu0 %v1953
    %2000 = vmatpush.msra.mxu0 %v1943
    %2001 = vmatpush.msra.mxu0 %v1933
    %2002 = vmatpush.msra.mxu0 %v1923
    %2003 = vmatpush.msra.mxu0 %v1913
    %2004 = vmatpush.msra.mxu0 %v1903
    %2005 = vmatpush.msra.mxu0 %v1893
    %2006 = vmatpush.msra.mxu0 %v1883
    %2007 = vmatmul.f32.gmra.mxu0 %v1989
    %v2008 = vpop.f32.mrf.mxu0
    %v2009 = vadd.f32 %v1967, %v2008
    %2010 = vdwg.mxu0
    %2011 = vmatpush.msra.mxu0 0.0
    %2012 = vmatpush.msra.mxu0 0.0
    %2013 = vmatpush.msra.mxu0 0.0
    %2014 = vmatpush.msra.mxu0 0.0
    %2015 = vmatpush.msra.mxu0 0.0
    %2016 = vmatpush.msra.mxu0 0.0
    %2017 = vmatpush.msra.mxu0 0.0
    %2018 = vmatpush.msra.mxu0 0.0
    %2019 = vmatpush.msra.mxu0 %v1954
    %2020 = vmatpush.msra.mxu0 %v1944
    %2021 = vmatpush.msra.mxu0 %v1934
    %2022 = vmatpush.msra.mxu0 %v1924
    %2023 = vmatpush.msra.mxu0 %v1914
    %2024 = vmatpush.msra.mxu0 %v1904
    %2025 = vmatpush.msra.mxu0 %v1894
    %2026 = vmatpush.msra.mxu0 %v1884
    %2027 = vmatmul.f32.gmra.mxu0 %v1989
    %v2028 = vpop.f32.mrf.mxu0
    %v2029 = vadd.f32 %v1968, %v2028
    %2030 = vdwg.mxu0
    %2031 = vmatpush.msra.mxu0 0.0
    %2032 = vmatpush.msra.mxu0 0.0
    %2033 = vmatpush.msra.mxu0 0.0
    %2034 = vmatpush.msra.mxu0 0.0
    %2035 = vmatpush.msra.mxu0 0.0
    %2036 = vmatpush.msra.mxu0 0.0
    %2037 = vmatpush.msra.mxu0 0.0
    %2038 = vmatpush.msra.mxu0 0.0
    %2039 = vmatpush.msra.mxu0 %v1955
    %2040 = vmatpush.msra.mxu0 %v1945
    %2041 = vmatpush.msra.mxu0 %v1935
    %2042 = vmatpush.msra.mxu0 %v1925
    %2043 = vmatpush.msra.mxu0 %v1915
    %2044 = vmatpush.msra.mxu0 %v1905
    %2045 = vmatpush.msra.mxu0 %v1895
    %2046 = vmatpush.msra.mxu0 %v1885
    %2047 = vmatmul.f32.gmra.mxu0 %v1989
    %v2048 = vpop.f32.mrf.mxu0
    %v2049 = vadd.f32 %v1969, %v2048
    %2050 = vdwg.mxu0
    %2051 = vmatpush.msra.mxu0 0.0
    %2052 = vmatpush.msra.mxu0 0.0
    %2053 = vmatpush.msra.mxu0 0.0
    %2054 = vmatpush.msra.mxu0 0.0
    %2055 = vmatpush.msra.mxu0 0.0
    %2056 = vmatpush.msra.mxu0 0.0
    %2057 = vmatpush.msra.mxu0 0.0
    %2058 = vmatpush.msra.mxu0 0.0
    %2059 = vmatpush.msra.mxu0 %v1956
    %2060 = vmatpush.msra.mxu0 %v1946
    %2061 = vmatpush.msra.mxu0 %v1936
    %2062 = vmatpush.msra.mxu0 %v1926
    %2063 = vmatpush.msra.mxu0 %v1916
    %2064 = vmatpush.msra.mxu0 %v1906
    %2065 = vmatpush.msra.mxu0 %v1896
    %2066 = vmatpush.msra.mxu0 %v1886
    %2067 = vmatmul.f32.gmra.mxu0 %v1989
    %v2068 = vpop.f32.mrf.mxu0
    %v2069 = vadd.f32 %v1970, %v2068
    %2070 = vdwg.mxu0
    %2071 = vmatpush.msra.mxu0 0.0
    %2072 = vmatpush.msra.mxu0 0.0
    %2073 = vmatpush.msra.mxu0 0.0
    %2074 = vmatpush.msra.mxu0 0.0
    %2075 = vmatpush.msra.mxu0 0.0
    %2076 = vmatpush.msra.mxu0 0.0
    %2077 = vmatpush.msra.mxu0 0.0
    %2078 = vmatpush.msra.mxu0 0.0
    %2079 = vmatpush.msra.mxu0 %v1957
    %2080 = vmatpush.msra.mxu0 %v1947
    %2081 = vmatpush.msra.mxu0 %v1937
    %2082 = vmatpush.msra.mxu0 %v1927
    %2083 = vmatpush.msra.mxu0 %v1917
    %2084 = vmatpush.msra.mxu0 %v1907
    %2085 = vmatpush.msra.mxu0 %v1897
    %2086 = vmatpush.msra.mxu0 %v1887
    %2087 = vmatmul.f32.gmra.mxu0 %v1989
    %v2088 = vpop.f32.mrf.mxu0
    %v2089 = vadd.f32 %v1971, %v2088
    %2090 = vdwg.mxu0
    %2091 = vmatpush.msra.mxu0 0.0
    %2092 = vmatpush.msra.mxu0 0.0
    %2093 = vmatpush.msra.mxu0 0.0
    %2094 = vmatpush.msra.mxu0 0.0
    %2095 = vmatpush.msra.mxu0 0.0
    %2096 = vmatpush.msra.mxu0 0.0
    %2097 = vmatpush.msra.mxu0 0.0
    %2098 = vmatpush.msra.mxu0 0.0
    %2099 = vmatpush.msra.mxu0 %v1958
    %2100 = vmatpush.msra.mxu0 %v1948
    %2101 = vmatpush.msra.mxu0 %v1938
    %2102 = vmatpush.msra.mxu0 %v1928
    %2103 = vmatpush.msra.mxu0 %v1918
    %2104 = vmatpush.msra.mxu0 %v1908
    %2105 = vmatpush.msra.mxu0 %v1898
    %2106 = vmatpush.msra.mxu0 %v1888
    %2107 = vmatmul.f32.gmra.mxu0 %v1989
    %v2108 = vpop.f32.mrf.mxu0
    %v2109 = vadd.f32 %v1972, %v2108
    %2110 = vdwg.mxu0
    %2111 = vmatpush.msra.mxu0 0.0
    %2112 = vmatpush.msra.mxu0 0.0
    %2113 = vmatpush.msra.mxu0 0.0
    %2114 = vmatpush.msra.mxu0 0.0
    %2115 = vmatpush.msra.mxu0 0.0
    %2116 = vmatpush.msra.mxu0 0.0
    %2117 = vmatpush.msra.mxu0 0.0
    %2118 = vmatpush.msra.mxu0 0.0
    %2119 = vmatpush.msra.mxu0 %v1959
    %2120 = vmatpush.msra.mxu0 %v1949
    %2121 = vmatpush.msra.mxu0 %v1939
    %2122 = vmatpush.msra.mxu0 %v1929
    %2123 = vmatpush.msra.mxu0 %v1919
    %2124 = vmatpush.msra.mxu0 %v1909
    %2125 = vmatpush.msra.mxu0 %v1899
    %2126 = vmatpush.msra.mxu0 %v1889
    %2127 = vmatmul.f32.gmra.mxu0 %v1989
    %v2128 = vpop.f32.mrf.mxu0
    %v2129 = vadd.f32 %v1973, %v2128
    %2130 = vdwg.mxu0
    %2131 = vmatpush.msra.mxu0 0.0
    %2132 = vmatpush.msra.mxu0 0.0
    %2133 = vmatpush.msra.mxu0 0.0
    %2134 = vmatpush.msra.mxu0 0.0
    %2135 = vmatpush.msra.mxu0 0.0
    %2136 = vmatpush.msra.mxu0 0.0
    %2137 = vmatpush.msra.mxu0 0.0
    %2138 = vmatpush.msra.mxu0 0.0
    %2139 = vmatpush.msra.mxu0 %v1960
    %2140 = vmatpush.msra.mxu0 %v1950
    %2141 = vmatpush.msra.mxu0 %v1940
    %2142 = vmatpush.msra.mxu0 %v1930
    %2143 = vmatpush.msra.mxu0 %v1920
    %2144 = vmatpush.msra.mxu0 %v1910
    %2145 = vmatpush.msra.mxu0 %v1900
    %2146 = vmatpush.msra.mxu0 %v1890
    %2147 = vmatmul.f32.gmra.mxu0 %v1989
    %v2148 = vpop.f32.mrf.mxu0
    %v2149 = vadd.f32 %v1974, %v2148
    %2150 = vdwg.mxu0
    %2151 = vmatpush.msra.mxu0 0.0
    %2152 = vmatpush.msra.mxu0 0.0
    %2153 = vmatpush.msra.mxu0 0.0
    %2154 = vmatpush.msra.mxu0 0.0
    %2155 = vmatpush.msra.mxu0 0.0
    %2156 = vmatpush.msra.mxu0 0.0
    %2157 = vmatpush.msra.mxu0 0.0
    %2158 = vmatpush.msra.mxu0 0.0
    %2159 = vmatpush.msra.mxu0 %v1961
    %2160 = vmatpush.msra.mxu0 %v1951
    %2161 = vmatpush.msra.mxu0 %v1941
    %2162 = vmatpush.msra.mxu0 %v1931
    %2163 = vmatpush.msra.mxu0 %v1921
    %2164 = vmatpush.msra.mxu0 %v1911
    %2165 = vmatpush.msra.mxu0 %v1901
    %2166 = vmatpush.msra.mxu0 %v1891
    %2167 = vmatmul.f32.gmra.mxu0 %v1989
    %v2168 = vpop.f32.mrf.mxu0
    %v2169 = vadd.f32 %v1975, %v2168
    %2170 = vdwg.mxu0
    %2171 = vmatpush.msra.mxu0 0.0
    %2172 = vmatpush.msra.mxu0 0.0
    %2173 = vmatpush.msra.mxu0 0.0
    %2174 = vmatpush.msra.mxu0 0.0
    %2175 = vmatpush.msra.mxu0 0.0
    %2176 = vmatpush.msra.mxu0 0.0
    %2177 = vmatpush.msra.mxu0 0.0
    %2178 = vmatpush.msra.mxu0 0.0
    %2179 = vmatpush.msra.mxu0 %v1962
    %2180 = vmatpush.msra.mxu0 %v1952
    %2181 = vmatpush.msra.mxu0 %v1942
    %2182 = vmatpush.msra.mxu0 %v1932
    %2183 = vmatpush.msra.mxu0 %v1922
    %2184 = vmatpush.msra.mxu0 %v1912
    %2185 = vmatpush.msra.mxu0 %v1902
    %2186 = vmatpush.msra.mxu0 %v1892
    %2187 = vmatmul.f32.gmra.mxu0 %v1989
    %v2188 = vpop.f32.mrf.mxu0
    %v2189 = vadd.f32 %v1976, %v2188
    %2190 = vdwg.mxu0
    %v2191 = vmax.f32 %v2009, 0.0
    %v2192 = vmax.f32 %v2029, 0.0
    %v2193 = vmax.f32 %v2049, 0.0
    %v2194 = vmax.f32 %v2069, 0.0
    %v2195 = vmax.f32 %v2089, 0.0
    %v2196 = vmax.f32 %v2109, 0.0
    %v2197 = vmax.f32 %v2129, 0.0
    %v2198 = vmax.f32 %v2149, 0.0
    %v2199 = vmax.f32 %v2169, 0.0
    %v2200 = vmax.f32 %v2189, 0.0
    %v2201 = vld [vmem:[%s14] sm:$0xff]
    %v2202 = vld [vmem:[%s14 + $0x8] sm:$0xff]
    %v2203 = vld [vmem:[%s14 + $0x10] sm:$0xff]
    %v2204 = vld [vmem:[%s14 + $0x18] sm:$0xff]
    %v2205 = vld [vmem:[%s14 + $0x20] sm:$0xff]
    %v2206 = vld [vmem:[%s14 + $0x28] sm:$0xff]
    %v2207 = vld [vmem:[%s14 + $0x30] sm:$0xff]
    %v2208 = vld [vmem:[%s14 + $0x38] sm:$0xff]
    %v2209 = vld [vmem:[%s14 + $0x40] sm:$0xff]
    %v2210 = vld [vmem:[%s14 + $0x48] sm:$0xff]
    %v2211 = vld [vmem:[%s14 + $0x50] sm:$0xff]
    %v2212 = vld [vmem:[%s14 + $0x58] sm:$0xff]
    %v2213 = vld [vmem:[%s14 + $0x60] sm:$0xff]
    %v2214 = vld [vmem:[%s14 + $0x68] sm:$0xff]
    %v2215 = vld [vmem:[%s14 + $0x70] sm:$0xff]
    %v2216 = vld [vmem:[%s14 + $0x78] sm:$0xff]
    %v2217 = vld [vmem:[%s15] sm:$0xff]
    %v2218 = vld [vmem:[%s15 + $0x8] sm:$0xff]
    %v2219 = vld [vmem:[%s15 + $0x10] sm:$0xff]
    %v2220 = vld [vmem:[%s15 + $0x18] sm:$0xff]
    %v2221 = vld [vmem:[%s15 + $0x20] sm:$0xff]
    %v2222 = vld [vmem:[%s15 + $0x28] sm:$0xff]
    %v2223 = vld [vmem:[%s15 + $0x30] sm:$0xff]
    %v2224 = vld [vmem:[%s15 + $0x38] sm:$0xff]
    %v2225 = vld [vmem:[%s15 + $0x40] sm:$0xff]
    %v2226 = vld [vmem:[%s15 + $0x48] sm:$0xff]
    %v2227 = vld [vmem:[%s15 + $0x50] sm:$0xff]
    %v2228 = vld [vmem:[%s15 + $0x58] sm:$0xff]
    %v2229 = vld [vmem:[%s15 + $0x60] sm:$0xff]
    %v2230 = vld [vmem:[%s15 + $0x68] sm:$0xff]
    %v2231 = vld [vmem:[%s15 + $0x70] sm:$0xff]
    %v2232 = vld [vmem:[%s15 + $0x78] sm:$0xff]
    %v2233 = vld [vmem:[%s15 + $0x80] sm:$0xff]
    %v2234 = vld [vmem:[%s15 + $0x88] sm:$0xff]
    %v2235 = vld [vmem:[%s15 + $0x90] sm:$0xff]
    %v2236 = vld [vmem:[%s15 + $0x98] sm:$0xff]
    %v2237 = vld [vmem:[%s15 + $0xa0] sm:$0xff]
    %v2238 = vld [vmem:[%s15 + $0xa8] sm:$0xff]
    %v2239 = vld [vmem:[%s15 + $0xb0] sm:$0xff]
    %v2240 = vld [vmem:[%s15 + $0xb8] sm:$0xff]
    %v2241 = vld [vmem:[%s15 + $0xc0] sm:$0xff]
    %v2242 = vld [vmem:[%s15 + $0xc8] sm:$0xff]
    %v2243 = vld [vmem:[%s15 + $0xd0] sm:$0xff]
    %v2244 = vld [vmem:[%s15 + $0xd8] sm:$0xff]
    %v2245 = vld [vmem:[%s15 + $0xe0] sm:$0xff]
    %v2246 = vld [vmem:[%s15 + $0xe8] sm:$0xff]
    %v2247 = vld [vmem:[%s15 + $0xf0] sm:$0xff]
    %v2248 = vld [vmem:[%s15 + $0xf8] sm:$0xff]
    %v2249 = vld [vmem:[%s15 + $0x100] sm:$0xff]
    %v2250 = vld [vmem:[%s15 + $0x108] sm:$0xff]
    %v2251 = vld [vmem:[%s15 + $0x110] sm:$0xff]
    %v2252 = vld [vmem:[%s15 + $0x118] sm:$0xff]
    %v2253 = vld [vmem:[%s15 + $0x120] sm:$0xff]
    %v2254 = vld [vmem:[%s15 + $0x128] sm:$0xff]
    %v2255 = vld [vmem:[%s15 + $0x130] sm:$0xff]
    %v2256 = vld [vmem:[%s15 + $0x138] sm:$0xff]
    %v2257 = vld [vmem:[%s15 + $0x140] sm:$0xff]
    %v2258 = vld [vmem:[%s15 + $0x148] sm:$0xff]
    %v2259 = vld [vmem:[%s15 + $0x150] sm:$0xff]
    %v2260 = vld [vmem:[%s15 + $0x158] sm:$0xff]
    %v2261 = vld [vmem:[%s15 + $0x160] sm:$0xff]
    %v2262 = vld [vmem:[%s15 + $0x168] sm:$0xff]
    %v2263 = vld [vmem:[%s15 + $0x170] sm:$0xff]
    %v2264 = vld [vmem:[%s15 + $0x178] sm:$0xff]
    %v2265 = vld [vmem:[%s15 + $0x180] sm:$0xff]
    %v2266 = vld [vmem:[%s15 + $0x188] sm:$0xff]
    %v2267 = vld [vmem:[%s15 + $0x190] sm:$0xff]
    %v2268 = vld [vmem:[%s15 + $0x198] sm:$0xff]
    %v2269 = vld [vmem:[%s15 + $0x1a0] sm:$0xff]
    %v2270 = vld [vmem:[%s15 + $0x1a8] sm:$0xff]
    %v2271 = vld [vmem:[%s15 + $0x1b0] sm:$0xff]
    %v2272 = vld [vmem:[%s15 + $0x1b8] sm:$0xff]
    %v2273 = vld [vmem:[%s15 + $0x1c0] sm:$0xff]
    %v2274 = vld [vmem:[%s15 + $0x1c8] sm:$0xff]
    %v2275 = vld [vmem:[%s15 + $0x1d0] sm:$0xff]
    %v2276 = vld [vmem:[%s15 + $0x1d8] sm:$0xff]
    %v2277 = vld [vmem:[%s15 + $0x1e0] sm:$0xff]
    %v2278 = vld [vmem:[%s15 + $0x1e8] sm:$0xff]
    %v2279 = vld [vmem:[%s15 + $0x1f0] sm:$0xff]
    %v2280 = vld [vmem:[%s15 + $0x1f8] sm:$0xff]
    %v2281 = vld [vmem:[%s15 + $0x200] sm:$0xff]
    %v2282 = vld [vmem:[%s15 + $0x208] sm:$0xff]
    %v2283 = vld [vmem:[%s15 + $0x210] sm:$0xff]
    %v2284 = vld [vmem:[%s15 + $0x218] sm:$0xff]
    %v2285 = vld [vmem:[%s15 + $0x220] sm:$0xff]
    %v2286 = vld [vmem:[%s15 + $0x228] sm:$0xff]
    %v2287 = vld [vmem:[%s15 + $0x230] sm:$0xff]
    %v2288 = vld [vmem:[%s15 + $0x238] sm:$0xff]
    %v2289 = vld [vmem:[%s15 + $0x240] sm:$0xff]
    %v2290 = vld [vmem:[%s15 + $0x248] sm:$0xff]
    %v2291 = vld [vmem:[%s15 + $0x250] sm:$0xff]
    %v2292 = vld [vmem:[%s15 + $0x258] sm:$0xff]
    %v2293 = vld [vmem:[%s15 + $0x260] sm:$0xff]
    %v2294 = vld [vmem:[%s15 + $0x268] sm:$0xff]
    %v2295 = vld [vmem:[%s15 + $0x270] sm:$0xff]
    %v2296 = vld [vmem:[%s15 + $0x278] sm:$0xff]
    %v2297 = vld [vmem:[%s15 + $0x280] sm:$0xff]
    %v2298 = vld [vmem:[%s15 + $0x288] sm:$0xff]
    %v2299 = vld [vmem:[%s15 + $0x290] sm:$0xff]
    %v2300 = vld [vmem:[%s15 + $0x298] sm:$0xff]
    %v2301 = vld [vmem:[%s15 + $0x2a0] sm:$0xff]
    %v2302 = vld [vmem:[%s15 + $0x2a8] sm:$0xff]
    %v2303 = vld [vmem:[%s15 + $0x2b0] sm:$0xff]
    %v2304 = vld [vmem:[%s15 + $0x2b8] sm:$0xff]
    %v2305 = vld [vmem:[%s15 + $0x2c0] sm:$0xff]
    %v2306 = vld [vmem:[%s15 + $0x2c8] sm:$0xff]
    %v2307 = vld [vmem:[%s15 + $0x2d0] sm:$0xff]
    %v2308 = vld [vmem:[%s15 + $0x2d8] sm:$0xff]
    %v2309 = vld [vmem:[%s15 + $0x2e0] sm:$0xff]
    %v2310 = vld [vmem:[%s15 + $0x2e8] sm:$0xff]
    %v2311 = vld [vmem:[%s15 + $0x2f0] sm:$0xff]
    %v2312 = vld [vmem:[%s15 + $0x2f8] sm:$0xff]
    %v2313 = vld [vmem:[%s15 + $0x300] sm:$0xff]
    %v2314 = vld [vmem:[%s15 + $0x308] sm:$0xff]
    %v2315 = vld [vmem:[%s15 + $0x310] sm:$0xff]
    %v2316 = vld [vmem:[%s15 + $0x318] sm:$0xff]
    %v2317 = vld [vmem:[%s15 + $0x320] sm:$0xff]
    %v2318 = vld [vmem:[%s15 + $0x328] sm:$0xff]
    %v2319 = vld [vmem:[%s15 + $0x330] sm:$0xff]
    %v2320 = vld [vmem:[%s15 + $0x338] sm:$0xff]
    %v2321 = vld [vmem:[%s15 + $0x340] sm:$0xff]
    %v2322 = vld [vmem:[%s15 + $0x348] sm:$0xff]
    %v2323 = vld [vmem:[%s15 + $0x350] sm:$0xff]
    %v2324 = vld [vmem:[%s15 + $0x358] sm:$0xff]
    %v2325 = vld [vmem:[%s15 + $0x360] sm:$0xff]
    %v2326 = vld [vmem:[%s15 + $0x368] sm:$0xff]
    %v2327 = vld [vmem:[%s15 + $0x370] sm:$0xff]
    %v2328 = vld [vmem:[%s15 + $0x378] sm:$0xff]
    %v2329 = vld [vmem:[%s15 + $0x380] sm:$0xff]
    %v2330 = vld [vmem:[%s15 + $0x388] sm:$0xff]
    %v2331 = vld [vmem:[%s15 + $0x390] sm:$0xff]
    %v2332 = vld [vmem:[%s15 + $0x398] sm:$0xff]
    %v2333 = vld [vmem:[%s15 + $0x3a0] sm:$0xff]
    %v2334 = vld [vmem:[%s15 + $0x3a8] sm:$0xff]
    %v2335 = vld [vmem:[%s15 + $0x3b0] sm:$0xff]
    %v2336 = vld [vmem:[%s15 + $0x3b8] sm:$0xff]
    %v2337 = vld [vmem:[%s15 + $0x3c0] sm:$0xff]
    %v2338 = vld [vmem:[%s15 + $0x3c8] sm:$0xff]
    %v2339 = vld [vmem:[%s15 + $0x3d0] sm:$0xff]
    %v2340 = vld [vmem:[%s15 + $0x3d8] sm:$0xff]
    %v2341 = vld [vmem:[%s15 + $0x3e0] sm:$0xff]
    %v2342 = vld [vmem:[%s15 + $0x3e8] sm:$0xff]
    %v2343 = vld [vmem:[%s15 + $0x3f0] sm:$0xff]
    %v2344 = vld [vmem:[%s15 + $0x3f8] sm:$0xff]
    %v2345 = vld [vmem:[%s15 + $0x400] sm:$0xff]
    %v2346 = vld [vmem:[%s15 + $0x408] sm:$0xff]
    %v2347 = vld [vmem:[%s15 + $0x410] sm:$0xff]
    %v2348 = vld [vmem:[%s15 + $0x418] sm:$0xff]
    %v2349 = vld [vmem:[%s15 + $0x420] sm:$0xff]
    %v2350 = vld [vmem:[%s15 + $0x428] sm:$0xff]
    %v2351 = vld [vmem:[%s15 + $0x430] sm:$0xff]
    %v2352 = vld [vmem:[%s15 + $0x438] sm:$0xff]
    %v2353 = vld [vmem:[%s15 + $0x440] sm:$0xff]
    %v2354 = vld [vmem:[%s15 + $0x448] sm:$0xff]
    %v2355 = vld [vmem:[%s15 + $0x450] sm:$0xff]
    %v2356 = vld [vmem:[%s15 + $0x458] sm:$0xff]
    %v2357 = vld [vmem:[%s15 + $0x460] sm:$0xff]
    %v2358 = vld [vmem:[%s15 + $0x468] sm:$0xff]
    %v2359 = vld [vmem:[%s15 + $0x470] sm:$0xff]
    %v2360 = vld [vmem:[%s15 + $0x478] sm:$0xff]
    %v2361 = vld [vmem:[%s15 + $0x480] sm:$0xff]
    %v2362 = vld [vmem:[%s15 + $0x488] sm:$0xff]
    %v2363 = vld [vmem:[%s15 + $0x490] sm:$0xff]
    %v2364 = vld [vmem:[%s15 + $0x498] sm:$0xff]
    %v2365 = vld [vmem:[%s15 + $0x4a0] sm:$0xff]
    %vm2366 = vcmask 326656
    %v2368 = vsel %vm2366, %v2200, 0
    %2370 = vmatpush.msra.mxu0 %v2232
    %2371 = vmatpush.msra.mxu0 %v2231
    %2372 = vmatpush.msra.mxu0 %v2230
    %2373 = vmatpush.msra.mxu0 %v2229
    %2374 = vmatpush.msra.mxu0 %v2228
    %2375 = vmatpush.msra.mxu0 %v2227
    %2376 = vmatpush.msra.mxu0 %v2226
    %2377 = vmatpush.msra.mxu0 %v2225
    %2378 = vmatpush.msra.mxu0 %v2224
    %2379 = vmatpush.msra.mxu0 %v2223
    %2380 = vmatpush.msra.mxu0 %v2222
    %2381 = vmatpush.msra.mxu0 %v2221
    %2382 = vmatpush.msra.mxu0 %v2220
    %2383 = vmatpush.msra.mxu0 %v2219
    %2384 = vmatpush.msra.mxu0 %v2218
    %2385 = vmatpush.msra.mxu0 %v2217
    %2386 = vmatmul.f32.gmra.mxu0 %v2191
    %v2387 = vpop.f32.mrf.mxu0
    %v2388 = vadd.f32 0.0, %v2387
    %2389 = vdwg.mxu0
    %2390 = vmatpush.msra.mxu0 %v2248
    %2391 = vmatpush.msra.mxu0 %v2247
    %2392 = vmatpush.msra.mxu0 %v2246
    %2393 = vmatpush.msra.mxu0 %v2245
    %2394 = vmatpush.msra.mxu0 %v2244
    %2395 = vmatpush.msra.mxu0 %v2243
    %2396 = vmatpush.msra.mxu0 %v2242
    %2397 = vmatpush.msra.mxu0 %v2241
    %2398 = vmatpush.msra.mxu0 %v2240
    %2399 = vmatpush.msra.mxu0 %v2239
    %2400 = vmatpush.msra.mxu0 %v2238
    %2401 = vmatpush.msra.mxu0 %v2237
    %2402 = vmatpush.msra.mxu0 %v2236
    %2403 = vmatpush.msra.mxu0 %v2235
    %2404 = vmatpush.msra.mxu0 %v2234
    %2405 = vmatpush.msra.mxu0 %v2233
    %2406 = vmatmul.f32.gmra.mxu0 %v2192
    %v2407 = vpop.f32.mrf.mxu0
    %v2408 = vadd.f32 %v2388, %v2407
    %2409 = vdwg.mxu0
    %2410 = vmatpush.msra.mxu0 %v2264
    %2411 = vmatpush.msra.mxu0 %v2263
    %2412 = vmatpush.msra.mxu0 %v2262
    %2413 = vmatpush.msra.mxu0 %v2261
    %2414 = vmatpush.msra.mxu0 %v2260
    %2415 = vmatpush.msra.mxu0 %v2259
    %2416 = vmatpush.msra.mxu0 %v2258
    %2417 = vmatpush.msra.mxu0 %v2257
    %2418 = vmatpush.msra.mxu0 %v2256
    %2419 = vmatpush.msra.mxu0 %v2255
    %2420 = vmatpush.msra.mxu0 %v2254
    %2421 = vmatpush.msra.mxu0 %v2253
    %2422 = vmatpush.msra.mxu0 %v2252
    %2423 = vmatpush.msra.mxu0 %v2251
    %2424 = vmatpush.msra.mxu0 %v2250
    %2425 = vmatpush.msra.mxu0 %v2249
    %2426 = vmatmul.f32.gmra.mxu0 %v2193
    %v2427 = vpop.f32.mrf.mxu0
    %v2428 = vadd.f32 %v2408, %v2427
    %2429 = vdwg.mxu0
    %2430 = vmatpush.msra.mxu0 %v2280
    %2431 = vmatpush.msra.mxu0 %v2279
    %2432 = vmatpush.msra.mxu0 %v2278
    %2433 = vmatpush.msra.mxu0 %v2277
    %2434 = vmatpush.msra.mxu0 %v2276
    %2435 = vmatpush.msra.mxu0 %v2275
    %2436 = vmatpush.msra.mxu0 %v2274
    %2437 = vmatpush.msra.mxu0 %v2273
    %2438 = vmatpush.msra.mxu0 %v2272
    %2439 = vmatpush.msra.mxu0 %v2271
    %2440 = vmatpush.msra.mxu0 %v2270
    %2441 = vmatpush.msra.mxu0 %v2269
    %2442 = vmatpush.msra.mxu0 %v2268
    %2443 = vmatpush.msra.mxu0 %v2267
    %2444 = vmatpush.msra.mxu0 %v2266
    %2445 = vmatpush.msra.mxu0 %v2265
    %2446 = vmatmul.f32.gmra.mxu0 %v2194
    %v2447 = vpop.f32.mrf.mxu0
    %v2448 = vadd.f32 %v2428, %v2447
    %2449 = vdwg.mxu0
    %2450 = vmatpush.msra.mxu0 %v2296
    %2451 = vmatpush.msra.mxu0 %v2295
    %2452 = vmatpush.msra.mxu0 %v2294
    %2453 = vmatpush.msra.mxu0 %v2293
    %2454 = vmatpush.msra.mxu0 %v2292
    %2455 = vmatpush.msra.mxu0 %v2291
    %2456 = vmatpush.msra.mxu0 %v2290
    %2457 = vmatpush.msra.mxu0 %v2289
    %2458 = vmatpush.msra.mxu0 %v2288
    %2459 = vmatpush.msra.mxu0 %v2287
    %2460 = vmatpush.msra.mxu0 %v2286
    %2461 = vmatpush.msra.mxu0 %v2285
    %2462 = vmatpush.msra.mxu0 %v2284
    %2463 = vmatpush.msra.mxu0 %v2283
    %2464 = vmatpush.msra.mxu0 %v2282
    %2465 = vmatpush.msra.mxu0 %v2281
    %2466 = vmatmul.f32.gmra.mxu0 %v2195
    %v2467 = vpop.f32.mrf.mxu0
    %v2468 = vadd.f32 %v2448, %v2467
    %2469 = vdwg.mxu0
    %2470 = vmatpush.msra.mxu0 %v2312
    %2471 = vmatpush.msra.mxu0 %v2311
    %2472 = vmatpush.msra.mxu0 %v2310
    %2473 = vmatpush.msra.mxu0 %v2309
    %2474 = vmatpush.msra.mxu0 %v2308
    %2475 = vmatpush.msra.mxu0 %v2307
    %2476 = vmatpush.msra.mxu0 %v2306
    %2477 = vmatpush.msra.mxu0 %v2305
    %2478 = vmatpush.msra.mxu0 %v2304
    %2479 = vmatpush.msra.mxu0 %v2303
    %2480 = vmatpush.msra.mxu0 %v2302
    %2481 = vmatpush.msra.mxu0 %v2301
    %2482 = vmatpush.msra.mxu0 %v2300
    %2483 = vmatpush.msra.mxu0 %v2299
    %2484 = vmatpush.msra.mxu0 %v2298
    %2485 = vmatpush.msra.mxu0 %v2297
    %2486 = vmatmul.f32.gmra.mxu0 %v2196
    %v2487 = vpop.f32.mrf.mxu0
    %v2488 = vadd.f32 %v2468, %v2487
    %2489 = vdwg.mxu0
    %2490 = vmatpush.msra.mxu0 %v2328
    %2491 = vmatpush.msra.mxu0 %v2327
    %2492 = vmatpush.msra.mxu0 %v2326
    %2493 = vmatpush.msra.mxu0 %v2325
    %2494 = vmatpush.msra.mxu0 %v2324
    %2495 = vmatpush.msra.mxu0 %v2323
    %2496 = vmatpush.msra.mxu0 %v2322
    %2497 = vmatpush.msra.mxu0 %v2321
    %2498 = vmatpush.msra.mxu0 %v2320
    %2499 = vmatpush.msra.mxu0 %v2319
    %2500 = vmatpush.msra.mxu0 %v2318
    %2501 = vmatpush.msra.mxu0 %v2317
    %2502 = vmatpush.msra.mxu0 %v2316
    %2503 = vmatpush.msra.mxu0 %v2315
    %2504 = vmatpush.msra.mxu0 %v2314
    %2505 = vmatpush.msra.mxu0 %v2313
    %2506 = vmatmul.f32.gmra.mxu0 %v2197
    %v2507 = vpop.f32.mrf.mxu0
    %v2508 = vadd.f32 %v2488, %v2507
    %2509 = vdwg.mxu0
    %2510 = vmatpush.msra.mxu0 %v2344
    %2511 = vmatpush.msra.mxu0 %v2343
    %2512 = vmatpush.msra.mxu0 %v2342
    %2513 = vmatpush.msra.mxu0 %v2341
    %2514 = vmatpush.msra.mxu0 %v2340
    %2515 = vmatpush.msra.mxu0 %v2339
    %2516 = vmatpush.msra.mxu0 %v2338
    %2517 = vmatpush.msra.mxu0 %v2337
    %2518 = vmatpush.msra.mxu0 %v2336
    %2519 = vmatpush.msra.mxu0 %v2335
    %2520 = vmatpush.msra.mxu0 %v2334
    %2521 = vmatpush.msra.mxu0 %v2333
    %2522 = vmatpush.msra.mxu0 %v2332
    %2523 = vmatpush.msra.mxu0 %v2331
    %2524 = vmatpush.msra.mxu0 %v2330
    %2525 = vmatpush.msra.mxu0 %v2329
    %2526 = vmatmul.f32.gmra.mxu0 %v2198
    %v2527 = vpop.f32.mrf.mxu0
    %v2528 = vadd.f32 %v2508, %v2527
    %2529 = vdwg.mxu0
    %2530 = vmatpush.msra.mxu0 %v2360
    %2531 = vmatpush.msra.mxu0 %v2359
    %2532 = vmatpush.msra.mxu0 %v2358
    %2533 = vmatpush.msra.mxu0 %v2357
    %2534 = vmatpush.msra.mxu0 %v2356
    %2535 = vmatpush.msra.mxu0 %v2355
    %2536 = vmatpush.msra.mxu0 %v2354
    %2537 = vmatpush.msra.mxu0 %v2353
    %2538 = vmatpush.msra.mxu0 %v2352
    %2539 = vmatpush.msra.mxu0 %v2351
    %2540 = vmatpush.msra.mxu0 %v2350
    %2541 = vmatpush.msra.mxu0 %v2349
    %2542 = vmatpush.msra.mxu0 %v2348
    %2543 = vmatpush.msra.mxu0 %v2347
    %2544 = vmatpush.msra.mxu0 %v2346
    %2545 = vmatpush.msra.mxu0 %v2345
    %2546 = vmatmul.f32.gmra.mxu0 %v2199
    %v2547 = vpop.f32.mrf.mxu0
    %v2548 = vadd.f32 %v2528, %v2547
    %2549 = vdwg.mxu0
    %2550 = vmatpush.msra.mxu0 0.0
    %2551 = vmatpush.msra.mxu0 0.0
    %2552 = vmatpush.msra.mxu0 0.0
    %2553 = vmatpush.msra.mxu0 0.0
    %2554 = vmatpush.msra.mxu0 0.0
    %2555 = vmatpush.msra.mxu0 0.0
    %2556 = vmatpush.msra.mxu0 0.0
    %2557 = vmatpush.msra.mxu0 0.0
    %2558 = vmatpush.msra.mxu0 0.0
    %2559 = vmatpush.msra.mxu0 0.0
    %2560 = vmatpush.msra.mxu0 0.0
    %2561 = vmatpush.msra.mxu0 %v2365
    %2562 = vmatpush.msra.mxu0 %v2364
    %2563 = vmatpush.msra.mxu0 %v2363
    %2564 = vmatpush.msra.mxu0 %v2362
    %2565 = vmatpush.msra.mxu0 %v2361
    %2566 = vmatmul.f32.gmra.mxu0 %v2368
    %v2567 = vpop.f32.mrf.mxu0
    %v2568 = vadd.f32 %v2548, %v2567
    %2569 = vdwg.mxu0
    %2570 = vmatpush.msra.mxu0 %v2216
    %2571 = vmatpush.msra.mxu0 %v2215
    %2572 = vmatpush.msra.mxu0 %v2214
    %2573 = vmatpush.msra.mxu0 %v2213
    %2574 = vmatpush.msra.mxu0 %v2212
    %2575 = vmatpush.msra.mxu0 %v2211
    %2576 = vmatpush.msra.mxu0 %v2210
    %2577 = vmatpush.msra.mxu0 %v2209
    %2578 = vmatpush.msra.mxu0 %v2208
    %2579 = vmatpush.msra.mxu0 %v2207
    %2580 = vmatpush.msra.mxu0 %v2206
    %2581 = vmatpush.msra.mxu0 %v2205
    %2582 = vmatpush.msra.mxu0 %v2204
    %2583 = vmatpush.msra.mxu0 %v2203
    %2584 = vmatpush.msra.mxu0 %v2202
    %2585 = vmatpush.msra.mxu0 %v2201
    %2586 = vmatmul.f32.gmra.mxu0 %v1818
    %v2587 = vpop.f32.mrf.mxu0
    %v2588 = vadd.f32 %v2568, %v2587
    %2589 = vdwg.mxu0
    %v2590 = vld [vmem:[#allocation23] sm:$0x1]
    %v2592 = vperm.slane %v2590, 0
    %v2594 = vadd.f32 %v2588, %v2592
    %vm2595 = vcmask 41984
    %v2596 = vsel %vm2595, %v2594, -inf
    %2597 = vmax.xlane.f32.xlu0 %v2596
    %v2598 = vpop.xlane.xlu0 %2597
    %v2599 = vsub.f32 %v2594, %v2598
    %v2600 = vmul.f32 %v2599, 1.442695
    %v2601 = vpow.pop %v2600
    %v2602 = vsel %vm2595, %v2601, 0.0
    %2603 = vadd.xlane.f32.xlu0 %v2602
    %v2604 = vpop.xlane.xlu0 %2603
    %v2605 = vrcp.pop %v2604
    %v2606 = vmul.f32 %v2604, %v2605
    %v2607 = vsub.f32 1.0, %v2606
    %v2608 = vmul.f32 %v2605, %v2607
    %v2609 = vadd.f32 %v2605, %v2608
    %vm2610 = vweird.f32 %v2604
    %vm2611 = vweird.f32 %v2605
    %vm2612 = vmor %vm2610, %vm2611
    %v2613 = vsel %vm2612, %v2605, %v2609
    %v2614 = vand.u32 2147483647, %v2604
    %vm2615 = vcmp.eq.f32.partialorder %v2614, 8.507059e+37
    %v2616 = vand.u32 %v2604, 2147483648
    %v2617 = vor.u32 1.1754944e-38, %v2616
    %v2618 = vsel %vm2615, %v2617, %v2613
    %v2619 = vmul.f32 %v2601, %v2618
    %2620 = vst.msk [vmem:[#allocation25] sm:$0x3] %vm2595, %v2619
    // Predicated region
    $region126: #{conv_policy_forward.1} parent=1 // pred_check
      _
    $region127: #{conv_policy_forward.1} parent=1 // pred_check_branch
      %2622 = sbr.rel (0) target = $region129
    $region128: #{conv_policy_forward.1} parent=1 // pred_region
      %2624 = vsyncadd [#allocation4], 0
      %s2626 = sshll.u32 [#allocation25], 4
      %s2627 = int_to_ptr.vmem [resolvable:$true] %s2626
      %s2628 = sshll.u32 %s17, 4
      %s2629 = int_to_ptr.hbm [resolvable:$true] %s2628
      %2631 = dma.vmem_to_hbm [thread:$0]  %s2627, 32, %s2629, [#allocation4]
    $region129: #{conv_policy_forward.1} parent=1 // pred_fallthru
      _
    // Predicated region
    $region130: #{conv_policy_forward.1} parent=1 // pred_check
      _
    $region131: #{conv_policy_forward.1} parent=1 // pred_check_branch
      %2633 = sbr.rel (0) target = $region133
    $region132: #{conv_policy_forward.1} parent=1 // pred_region
      %2635 = dma.done [#allocation4], 32
    $region133: #{conv_policy_forward.1} parent=1 // pred_fallthru
      _
    %2636 = vsyncpa [#allocation3], 1
    %2637 = vsyncpa [#allocation6], 1
    %2638 = vsyncpa [#allocation9], 1
    %2639 = vsyncpa [#allocation12], 1
    %2640 = vsyncpa [#allocation15], 1
    %2641 = vsyncpa [#allocation18], 1
    %2642 = vsyncpa [#allocation21], 1
    %2643 = vsyncpa [#allocation24], 1
    %2644 = vsyncpa [#allocation4], 1

</llo_original>
